<compile_context>
chip_gen: v7x
topology: tpu7x:2x2x1
jax: 0.10.0
libtpu: 0.0.40
codegen_flags: <defaults>
</compile_context>

<pallas_src>
import math
import jax
import jax.numpy as jnp
import numpy as np
from jax.experimental import pallas as pl
from jax.experimental.pallas import tpu as pltpu

# ----- small, lane-friendly config (multiples of 128 on feature axes) -----
B, N = 2, 8            # batch, sequence length
DIM = 128              # model dim
HEADS = 2
DIM_HEAD = 128
HID = HEADS * DIM_HEAD # 256
MLP = 256              # mlp_dim
DEPTH = 2
RATE = 0.1             # dropout rate (identity in eval mode)
ROT_DIM = 32           # RotaryEmbedding(dim=32)
SCALE = DIM_HEAD ** (-0.5)
LN_EPS = 1e-5
MASK_FILL = 1e-9       # torch masked_fill_ value for float32 dots
NEG_FILL = -1e30       # off-block fill for the fused block-diagonal attention
BN = B * N
BHN = B * HEADS * N


def _layernorm(x, g, b):
    mu = jnp.mean(x, axis=-1, keepdims=True)
    xc = x - mu
    var = jnp.mean(xc * xc, axis=-1, keepdims=True)
    return xc * jax.lax.rsqrt(var + LN_EPS) * g + b


def transformer_kernel(
    x_ref, keep_ref, fill_ref, cos_ref, sine_ref, sino_ref,
    n1g_ref, n1b_ref, n2g_ref, n2b_ref,
    wqkv_ref, wout_ref, ffg_ref, ffb_ref,
    w1_ref, b1_ref, w2_ref, b2_ref,
    o_ref,
):
    # ---- hoisted once; the layer loop below is a static unrolled Python loop ----
    x = x_ref[...]                         # (B*N, DIM) f32, batch folded into rows
    keep = keep_ref[...] > 0.5             # (BHN, BHN) bool, computed once
    fill = fill_ref[...]                   # (BHN, BHN) f32: 1e-9 in-block / -1e30 off-block
    cos = cos_ref[...]
    sin_e = sine_ref[...]                  # -sin on even lanes, 0 elsewhere / beyond ROT_DIM
    sin_o = sino_ref[...]                  # +sin on odd  lanes, 0 elsewhere / beyond ROT_DIM
    n1g, n1b = n1g_ref[...], n1b_ref[...]
    n2g, n2b = n2g_ref[...], n2b_ref[...]

    for l in range(DEPTH):
        wqkv = wqkv_ref[l]
        wout = wout_ref[l]
        w1, b1 = w1_ref[l], b1_ref[l]
        w2, b2 = w2_ref[l], b2_ref[l]
        ffg, ffb = ffg_ref[l], ffb_ref[l]

        # ------------------ Attention ------------------
        qkv = jnp.dot(x.astype(jnp.bfloat16), wqkv,
                      preferred_element_type=jnp.float32)       # (B*N, 3*HID) f32

        # Interleaved RoPE on the whole q|k slab via two XLU rolls against
        # pre-signed / zero-masked sin tables:
        #   out[2i]   = x[2i]  *cos - x[2i+1]*sin
        #   out[2i+1] = x[2i+1]*cos + x[2i]  *sin
        # NOTE: the circular wraps of the rolls land only on lanes where the
        # matching presigned sin table is exactly zero (lane parity + head-block
        # boundaries + >ROT_DIM), so wrapped lanes never contribute.  Only valid
        # for even DIM_HEAD / this interleaved head-major lane layout.
        qk = qkv[:, :2 * HID]                                   # (B*N, 2*HID)
        qk = (qk * cos
              + pltpu.roll(qk, 2 * HID - 1, axis=1) * sin_e     # x[j+1] on even lanes
              + pltpu.roll(qk, 1, axis=1) * sin_o)              # x[j-1] on odd lanes
        v_all = qkv[:, 2 * HID:]                                # (B*N, HID)

        # Stack (batch, head) tiles row-wise -> (B*H*N, DIM_HEAD).  Every slice is
        # an (8,128)-aligned vreg tile, so this is plain copies (no cross-lane).
        q_parts, k_parts, v_parts = [], [], []
        for b in range(B):
            rows = slice(b * N, (b + 1) * N)
            for h in range(HEADS):
                c = h * DIM_HEAD
                q_parts.append(qk[rows, c:c + DIM_HEAD])
                k_parts.append(qk[rows, HID + c:HID + c + DIM_HEAD])
                v_parts.append(v_all[rows, c:c + DIM_HEAD])
        q_s = jnp.concatenate(q_parts, axis=0).astype(jnp.bfloat16)   # (BHN, DH)
        k_s = jnp.concatenate(k_parts, axis=0).astype(jnp.bfloat16)
        v_s = jnp.concatenate(v_parts, axis=0).astype(jnp.bfloat16)

        # One fused score matmul over all (batch, head) blocks + one softmax.
        dots = jax.lax.dot_general(q_s, k_s, (((1,), (1,)), ((), ())),
                                   preferred_element_type=jnp.float32) * SCALE
        # Block-diagonal masking: off-block -> -1e30 (exp -> 0); in-block masked
        # -> 1e-9 (torch masked_fill_ float32 quirk, preserved verbatim).
        dots = jnp.where(keep, dots, fill)
        dots = dots - jnp.max(dots, axis=-1, keepdims=True)
        e = jnp.exp(dots)
        attn = e * pl.reciprocal(jnp.sum(e, axis=-1, keepdims=True), approx=True)
        hv = jnp.dot(attn.astype(jnp.bfloat16), v_s,
                     preferred_element_type=jnp.float32)              # (BHN, DH)

        # (b, h, n) rows -> (b*N + n) rows x (h*DIM_HEAD + d) lanes, then ONE
        # K=256 out-projection matmul (replaces per-head W_out accumulation).
        hv_bn = jnp.concatenate(
            [jnp.concatenate(
                [hv[(b * HEADS + h) * N:(b * HEADS + h + 1) * N, :]
                 for h in range(HEADS)], axis=1)
             for b in range(B)], axis=0).astype(jnp.bfloat16)          # (B*N, HID)
        attn_out = jnp.dot(hv_bn, wout, preferred_element_type=jnp.float32)

        # TODO(synk): nn.Dropout(rate) is identity in eval mode; training-mode dropout not modeled.
        x1 = _layernorm(attn_out + x, n1g, n1b)

        # ------------------ FeedForward ------------------
        h0 = _layernorm(x1, ffg, ffb)
        h1 = jnp.dot(h0.astype(jnp.bfloat16), w1,
                     preferred_element_type=jnp.float32) + b1
        h1 = 0.5 * h1 * (1.0 + jax.lax.erf(h1 * (1.0 / math.sqrt(2.0))))   # exact GELU
        h2 = jnp.dot(h1.astype(jnp.bfloat16), w2,
                     preferred_element_type=jnp.float32) + b2
        x = _layernorm(h2 + x1, n2g, n2b)

    o_ref[...] = x                                               # single HBM writeback


def _make_transformer_call(n_inputs):
    # No grid: single invocation, every array whole-block resident in VMEM
    # (~1 MiB total at this config).
    # TODO(synk): at scaled DIM/MLP, reintroduce a (layer / K-tile) grid with
    # streamed per-layer BlockSpecs sized for v7x's 64 MiB VMEM (32 MiB scoped
    # default), and on v7x add a leading 'parallel' batch grid axis to use both
    # TensorCores.
    return pl.pallas_call(
        transformer_kernel,
        out_shape=jax.ShapeDtypeStruct((BN, DIM), jnp.float32),
        in_specs=[pl.BlockSpec(memory_space=pltpu.MemorySpace.VMEM)
                  for _ in range(n_inputs)],
        out_specs=pl.BlockSpec(memory_space=pltpu.MemorySpace.VMEM),
    )


_N_INPUTS = 18
_TRANSFORMER_CALL = _make_transformer_call(_N_INPUTS)


@jax.jit
def transformer_forward(x, mask_bool, cos_full, sin_e_full, sin_o_full, params):
    # Build the fused (B*H*N, B*H*N) block-diagonal mask tables (tiny, outside
    # the kernel): rows/cols ordered (batch, head, position).
    idx = jnp.arange(BHN)
    b_i = idx // (HEADS * N)
    n_i = idx % N
    grp = idx // N
    same = grp[:, None] == grp[None, :]                           # same (batch, head)
    pair_masked = mask_bool[b_i[:, None], n_i[:, None], n_i[None, :]]
    keep = (same & jnp.logical_not(pair_masked)).astype(jnp.float32)
    fill = jnp.where(same, jnp.float32(MASK_FILL), jnp.float32(NEG_FILL))

    out = _TRANSFORMER_CALL(
        x.reshape(BN, DIM), keep, fill, cos_full, sin_e_full, sin_o_full,
        params["n1g"], params["n1b"], params["n2g"], params["n2b"],
        params["wqkv"], params["wout"], params["ffg"], params["ffb"],
        params["w1"], params["b1"], params["w2"], params["b2"],
    )
    return out.reshape(B, N, DIM)


def make_rotary_tables():
    inv_freq = 1.0 / (10000.0 ** (np.arange(0, ROT_DIM, 2, dtype=np.float32) / ROT_DIM))
    t = np.arange(N, dtype=np.float32)
    freqs = np.einsum("i,j->ij", t, inv_freq)         # (N, ROT_DIM//2)
    freqs = np.repeat(freqs, 2, axis=-1)              # (N, ROT_DIM), interleaved repeat
    cos_h = np.ones((N, DIM_HEAD), np.float32)
    sin_h = np.zeros((N, DIM_HEAD), np.float32)
    cos_h[:, :ROT_DIM] = np.cos(freqs)
    sin_h[:, :ROT_DIM] = np.sin(freqs)
    lane = np.arange(DIM_HEAD)
    sin_even_h = np.where(lane % 2 == 0, -sin_h, 0.0).astype(np.float32)   # even lanes: -sin
    sin_odd_h = np.where(lane % 2 == 1, sin_h, 0.0).astype(np.float32)     # odd  lanes: +sin
    tile = lambda a: np.tile(a, (B, 2 * HEADS))       # rows over batch, lanes over (q|k) x heads
    return (jnp.asarray(tile(cos_h)), jnp.asarray(tile(sin_even_h)),
            jnp.asarray(tile(sin_odd_h)), jnp.asarray(cos_h), jnp.asarray(sin_h))


def init_params(key):
    ks = jax.random.split(key, 6)

    def w(k, shape):  # weights stored in bf16 (MXU-native on v6e/v7x, halves DMA bytes)
        return (0.02 * jax.random.normal(k, shape, jnp.float32)).astype(jnp.bfloat16)

    return {
        "n1g": jnp.ones((1, DIM), jnp.float32), "n1b": jnp.zeros((1, DIM), jnp.float32),
        "n2g": jnp.ones((1, DIM), jnp.float32), "n2b": jnp.zeros((1, DIM), jnp.float32),
        "ffg": jnp.ones((DEPTH, 1, DIM), jnp.float32),
        "ffb": jnp.zeros((DEPTH, 1, DIM), jnp.float32),
        "wqkv": w(ks[0], (DEPTH, DIM, 3 * HID)),
        "wout": w(ks[1], (DEPTH, HID, DIM)),
        "w1": w(ks[2], (DEPTH, DIM, MLP)),
        "b1": 0.01 * jax.random.normal(ks[3], (DEPTH, 1, MLP), jnp.float32),
        "w2": w(ks[4], (DEPTH, MLP, DIM)),
        "b2": 0.01 * jax.random.normal(ks[5], (DEPTH, 1, DIM), jnp.float32),
    }


def reference_forward(x, mask_bool, params, cos_h, sin_h):
    hp = jax.lax.Precision.HIGHEST
    f32 = lambda a: a.astype(jnp.float32)

    def ln(t, g, b):
        mu = t.mean(-1, keepdims=True)
        tc = t - mu
        var = (tc * tc).mean(-1, keepdims=True)
        return tc / jnp.sqrt(var + LN_EPS) * g + b

    def rope(t):  # (B, H, N, DH)
        te, to = t[..., 0::2], t[..., 1::2]
        rot = jnp.stack([-to, te], axis=-1).reshape(t.shape)
        return t * cos_h[None, None] + rot * sin_h[None, None]

    for l in range(DEPTH):
        wqkv, wout = f32(params["wqkv"][l]), f32(params["wout"][l])
        w1, w2 = f32(params["w1"][l]), f32(params["w2"][l])
        b1, b2 = params["b1"][l], params["b2"][l]
        ffg, ffb = params["ffg"][l], params["ffb"][l]

        qkv = jnp.einsum("bnd,de->bne", x, wqkv, precision=hp)
        q, k, v = jnp.split(qkv, 3, axis=-1)
        heads = lambda t: t.reshape(B, N, HEADS, DIM_HEAD).transpose(0, 2, 1, 3)
        q, k, v = heads(q), heads(k), heads(v)
        q, k = rope(q), rope(k)
        dots = jnp.einsum("bhnd,bhmd->bhnm", q, k, precision=hp) * SCALE
        dots = jnp.where(mask_bool[:, None], MASK_FILL, dots)
        attn = jax.nn.softmax(dots, axis=-1)
        o = jnp.einsum("bhnm,bhmd->bhnd", attn, v, precision=hp)
        o = o.transpose(0, 2, 1, 3).reshape(B, N, HID)
        ao = jnp.einsum("bnh,hd->bnd", o, wout, precision=hp)
        x = ln(ao + x, params["n1g"], params["n1b"])
        h = ln(x, ffg, ffb)
        h = jnp.einsum("bnd,dm->bnm", h, w1, precision=hp) + b1
        h = 0.5 * h * (1.0 + jax.lax.erf(h / math.sqrt(2.0)))
        h = jnp.einsum("bnm,md->bnd", h, w2, precision=hp) + b2
        x = ln(h + x, params["n2g"], params["n2b"])
    return x


if __name__ == "__main__":
    key = jax.random.PRNGKey(0)
    k_x, k_m, k_p = jax.random.split(key, 3)

    x = jax.random.normal(k_x, (B, N, DIM), jnp.float32)
    mask_bool = jax.random.bernoulli(k_m, 0.25, (B, N, N))
    params = init_params(k_p)
    cos_full, sin_e_full, sin_o_full, cos_h, sin_h = make_rotary_tables()

    out = transformer_forward(x, mask_bool, cos_full, sin_e_full, sin_o_full, params)
    out = jax.block_until_ready(out)

    ref = reference_forward(x, mask_bool, params, cos_h, sin_h)
    assert out.shape == (B, N, DIM)
    assert bool(jnp.all(jnp.isfinite(out)))
    # bf16 MXU operands (f32 accumulate) + approx reciprocal vs f32 HIGHEST XLA reference
    err = float(jnp.max(jnp.abs(out - ref)))
    assert err < 5e-2, err

    print("KERNEL_OK")
</pallas_src>

<mosaic_0001>
module attributes {stable_mosaic.version = 11 : i64} {
  func.func @transformer_kernel(%arg0: memref<16x128xf32, #tpu.memory_space<vmem>>, %arg1: memref<32x32xf32, #tpu.memory_space<vmem>>, %arg2: memref<32x32xf32, #tpu.memory_space<vmem>>, %arg3: memref<16x512xf32, #tpu.memory_space<vmem>>, %arg4: memref<16x512xf32, #tpu.memory_space<vmem>>, %arg5: memref<16x512xf32, #tpu.memory_space<vmem>>, %arg6: memref<1x128xf32, #tpu.memory_space<vmem>>, %arg7: memref<1x128xf32, #tpu.memory_space<vmem>>, %arg8: memref<1x128xf32, #tpu.memory_space<vmem>>, %arg9: memref<1x128xf32, #tpu.memory_space<vmem>>, %arg10: memref<2x128x768xbf16, #tpu.memory_space<vmem>>, %arg11: memref<2x256x128xbf16, #tpu.memory_space<vmem>>, %arg12: memref<2x1x128xf32, #tpu.memory_space<vmem>>, %arg13: memref<2x1x128xf32, #tpu.memory_space<vmem>>, %arg14: memref<2x128x256xbf16, #tpu.memory_space<vmem>>, %arg15: memref<2x1x256xf32, #tpu.memory_space<vmem>>, %arg16: memref<2x256x128xbf16, #tpu.memory_space<vmem>>, %arg17: memref<2x1x128xf32, #tpu.memory_space<vmem>>, %arg18: memref<16x128xf32, #tpu.memory_space<vmem>>) attributes {dimension_semantics = [], scalar_prefetch = 0 : i64, scratch_operands = 0 : i64, tpu.core_type = #tpu.core_type<tc>} {
    %c0 = arith.constant 0 : index
    %c0_0 = arith.constant 0 : index
    %0 = vector.load %arg0[%c0, %c0_0] : memref<16x128xf32, #tpu.memory_space<vmem>>, vector<16x128xf32>
    %c0_1 = arith.constant 0 : index
    %c0_2 = arith.constant 0 : index
    %1 = vector.load %arg1[%c0_1, %c0_2] : memref<32x32xf32, #tpu.memory_space<vmem>>, vector<32x32xf32>
    %cst = arith.constant 5.000000e-01 : f32
    %2 = vector.broadcast %cst : f32 to vector<32x32xf32>
    %3 = arith.cmpf ogt, %1, %2 : vector<32x32xf32>
    %c0_3 = arith.constant 0 : index
    %c0_4 = arith.constant 0 : index
    %4 = vector.load %arg2[%c0_3, %c0_4] : memref<32x32xf32, #tpu.memory_space<vmem>>, vector<32x32xf32>
    %c0_5 = arith.constant 0 : index
    %c0_6 = arith.constant 0 : index
    %5 = vector.load %arg3[%c0_5, %c0_6] : memref<16x512xf32, #tpu.memory_space<vmem>>, vector<16x512xf32>
    %c0_7 = arith.constant 0 : index
    %c0_8 = arith.constant 0 : index
    %6 = vector.load %arg4[%c0_7, %c0_8] : memref<16x512xf32, #tpu.memory_space<vmem>>, vector<16x512xf32>
    %c0_9 = arith.constant 0 : index
    %c0_10 = arith.constant 0 : index
    %7 = vector.load %arg5[%c0_9, %c0_10] : memref<16x512xf32, #tpu.memory_space<vmem>>, vector<16x512xf32>
    %c0_11 = arith.constant 0 : index
    %c0_12 = arith.constant 0 : index
    %8 = vector.load %arg6[%c0_11, %c0_12] : memref<1x128xf32, #tpu.memory_space<vmem>>, vector<1x128xf32>
    %c0_13 = arith.constant 0 : index
    %c0_14 = arith.constant 0 : index
    %9 = vector.load %arg7[%c0_13, %c0_14] : memref<1x128xf32, #tpu.memory_space<vmem>>, vector<1x128xf32>
    %c0_15 = arith.constant 0 : index
    %c0_16 = arith.constant 0 : index
    %10 = vector.load %arg8[%c0_15, %c0_16] : memref<1x128xf32, #tpu.memory_space<vmem>>, vector<1x128xf32>
    %c0_17 = arith.constant 0 : index
    %c0_18 = arith.constant 0 : index
    %11 = vector.load %arg9[%c0_17, %c0_18] : memref<1x128xf32, #tpu.memory_space<vmem>>, vector<1x128xf32>
    %c0_19 = arith.constant 0 : index
    %c0_20 = arith.constant 0 : index
    %c0_21 = arith.constant 0 : index
    %12 = vector.load %arg10[%c0_19, %c0_20, %c0_21] : memref<2x128x768xbf16, #tpu.memory_space<vmem>>, vector<1x128x768xbf16>
    %13 = vector.shape_cast %12 : vector<1x128x768xbf16> to vector<128x768xbf16>
    %c0_22 = arith.constant 0 : index
    %c0_23 = arith.constant 0 : index
    %c0_24 = arith.constant 0 : index
    %14 = vector.load %arg11[%c0_22, %c0_23, %c0_24] : memref<2x256x128xbf16, #tpu.memory_space<vmem>>, vector<1x256x128xbf16>
    %15 = vector.shape_cast %14 : vector<1x256x128xbf16> to vector<256x128xbf16>
    %c0_25 = arith.constant 0 : index
    %c0_26 = arith.constant 0 : index
    %c0_27 = arith.constant 0 : index
    %16 = vector.load %arg14[%c0_25, %c0_26, %c0_27] : memref<2x128x256xbf16, #tpu.memory_space<vmem>>, vector<1x128x256xbf16>
    %17 = vector.shape_cast %16 : vector<1x128x256xbf16> to vector<128x256xbf16>
    %c0_28 = arith.constant 0 : index
    %c0_29 = arith.constant 0 : index
    %c0_30 = arith.constant 0 : index
    %18 = vector.load %arg15[%c0_28, %c0_29, %c0_30] : memref<2x1x256xf32, #tpu.memory_space<vmem>>, vector<1x1x256xf32>
    %19 = vector.shape_cast %18 : vector<1x1x256xf32> to vector<1x256xf32>
    %c0_31 = arith.constant 0 : index
    %c0_32 = arith.constant 0 : index
    %c0_33 = arith.constant 0 : index
    %20 = vector.load %arg16[%c0_31, %c0_32, %c0_33] : memref<2x256x128xbf16, #tpu.memory_space<vmem>>, vector<1x256x128xbf16>
    %21 = vector.shape_cast %20 : vector<1x256x128xbf16> to vector<256x128xbf16>
    %c0_34 = arith.constant 0 : index
    %c0_35 = arith.constant 0 : index
    %c0_36 = arith.constant 0 : index
    %22 = vector.load %arg17[%c0_34, %c0_35, %c0_36] : memref<2x1x128xf32, #tpu.memory_space<vmem>>, vector<1x1x128xf32>
    %23 = vector.shape_cast %22 : vector<1x1x128xf32> to vector<1x128xf32>
    %c0_37 = arith.constant 0 : index
    %c0_38 = arith.constant 0 : index
    %c0_39 = arith.constant 0 : index
    %24 = vector.load %arg12[%c0_37, %c0_38, %c0_39] : memref<2x1x128xf32, #tpu.memory_space<vmem>>, vector<1x1x128xf32>
    %25 = vector.shape_cast %24 : vector<1x1x128xf32> to vector<1x128xf32>
    %c0_40 = arith.constant 0 : index
    %c0_41 = arith.constant 0 : index
    %c0_42 = arith.constant 0 : index
    %26 = vector.load %arg13[%c0_40, %c0_41, %c0_42] : memref<2x1x128xf32, #tpu.memory_space<vmem>>, vector<1x1x128xf32>
    %27 = vector.shape_cast %26 : vector<1x1x128xf32> to vector<1x128xf32>
    %28 = arith.truncf %0 : vector<16x128xf32> to vector<16x128xbf16>
    %cst_43 = arith.constant dense<0.000000e+00> : vector<16x768xf32>
    %29 = tpu.matmul %28, %13, %cst_43 {dimension_numbers = #tpu.dot_dimension_numbers<[1], [0], [0], [1], [0, 0, 1, 1], [], []>} : vector<16x128xbf16>, vector<128x768xbf16>, vector<16x768xf32> -> vector<16x768xf32>
    %30 = vector.extract_strided_slice %29 {offsets = [0, 0], sizes = [16, 512], strides = [1, 1]} : vector<16x768xf32> to vector<16x512xf32>
    %31 = arith.mulf %30, %5 : vector<16x512xf32>
    %c511_i32 = arith.constant 511 : i32
    %32 = tpu.dynamic_rotate %30 by %c511_i32 dim 1 : vector<16x512xf32>, i32 -> vector<16x512xf32>
    %33 = arith.mulf %32, %6 : vector<16x512xf32>
    %34 = arith.addf %31, %33 : vector<16x512xf32>
    %c1_i32 = arith.constant 1 : i32
    %35 = tpu.dynamic_rotate %30 by %c1_i32 dim 1 : vector<16x512xf32>, i32 -> vector<16x512xf32>
    %36 = arith.mulf %35, %7 : vector<16x512xf32>
    %37 = arith.addf %34, %36 : vector<16x512xf32>
    %38 = vector.extract_strided_slice %29 {offsets = [0, 512], sizes = [16, 256], strides = [1, 1]} : vector<16x768xf32> to vector<16x256xf32>
    %39 = vector.extract_strided_slice %37 {offsets = [0, 0], sizes = [8, 128], strides = [1, 1]} : vector<16x512xf32> to vector<8x128xf32>
    %40 = vector.extract_strided_slice %37 {offsets = [0, 256], sizes = [8, 128], strides = [1, 1]} : vector<16x512xf32> to vector<8x128xf32>
    %41 = vector.extract_strided_slice %38 {offsets = [0, 0], sizes = [8, 128], strides = [1, 1]} : vector<16x256xf32> to vector<8x128xf32>
    %42 = vector.extract_strided_slice %37 {offsets = [0, 128], sizes = [8, 128], strides = [1, 1]} : vector<16x512xf32> to vector<8x128xf32>
    %43 = vector.extract_strided_slice %37 {offsets = [0, 384], sizes = [8, 128], strides = [1, 1]} : vector<16x512xf32> to vector<8x128xf32>
    %44 = vector.extract_strided_slice %38 {offsets = [0, 128], sizes = [8, 128], strides = [1, 1]} : vector<16x256xf32> to vector<8x128xf32>
    %45 = vector.extract_strided_slice %37 {offsets = [8, 0], sizes = [8, 128], strides = [1, 1]} : vector<16x512xf32> to vector<8x128xf32>
    %46 = vector.extract_strided_slice %37 {offsets = [8, 256], sizes = [8, 128], strides = [1, 1]} : vector<16x512xf32> to vector<8x128xf32>
    %47 = vector.extract_strided_slice %38 {offsets = [8, 0], sizes = [8, 128], strides = [1, 1]} : vector<16x256xf32> to vector<8x128xf32>
    %48 = vector.extract_strided_slice %37 {offsets = [8, 128], sizes = [8, 128], strides = [1, 1]} : vector<16x512xf32> to vector<8x128xf32>
    %49 = vector.extract_strided_slice %37 {offsets = [8, 384], sizes = [8, 128], strides = [1, 1]} : vector<16x512xf32> to vector<8x128xf32>
    %50 = vector.extract_strided_slice %38 {offsets = [8, 128], sizes = [8, 128], strides = [1, 1]} : vector<16x256xf32> to vector<8x128xf32>
    %51 = tpu.concatenate %39, %42, %45, %48 in 0 : vector<8x128xf32>, vector<8x128xf32>, vector<8x128xf32>, vector<8x128xf32> -> vector<32x128xf32>
    %52 = arith.truncf %51 : vector<32x128xf32> to vector<32x128xbf16>
    %53 = tpu.concatenate %40, %43, %46, %49 in 0 : vector<8x128xf32>, vector<8x128xf32>, vector<8x128xf32>, vector<8x128xf32> -> vector<32x128xf32>
    %54 = arith.truncf %53 : vector<32x128xf32> to vector<32x128xbf16>
    %55 = tpu.concatenate %41, %44, %47, %50 in 0 : vector<8x128xf32>, vector<8x128xf32>, vector<8x128xf32>, vector<8x128xf32> -> vector<32x128xf32>
    %56 = arith.truncf %55 : vector<32x128xf32> to vector<32x128xbf16>
    %cst_44 = arith.constant dense<0.000000e+00> : vector<32x32xf32>
    %57 = tpu.matmul %52, %54, %cst_44 {dimension_numbers = #tpu.dot_dimension_numbers<[1], [1], [0], [0], [0, 0, 1, 0], [], []>} : vector<32x128xbf16>, vector<32x128xbf16>, vector<32x32xf32> -> vector<32x32xf32>
    %cst_45 = arith.constant 0.0883883461 : f32
    %58 = vector.broadcast %cst_45 : f32 to vector<32x32xf32>
    %59 = arith.mulf %57, %58 : vector<32x32xf32>
    %60 = arith.select %3, %59, %4 : vector<32x32xi1>, vector<32x32xf32>
    %cst_46 = arith.constant dense<0xFF800000> : vector<32xf32>
    %61 = vector.multi_reduction <maximumf>, %60, %cst_46 [1] : vector<32x32xf32> to vector<32xf32>
    %62 = vector.shape_cast %61 : vector<32xf32> to vector<32x1xf32>
    %63 = vector.broadcast %62 : vector<32x1xf32> to vector<32x32xf32>
    %64 = arith.subf %60, %63 : vector<32x32xf32>
    %65 = math.exp %64 : vector<32x32xf32>
    %cst_47 = arith.constant dense<0.000000e+00> : vector<32xf32>
    %66 = vector.multi_reduction <add>, %65, %cst_47 [1] : vector<32x32xf32> to vector<32xf32>
    %67 = vector.shape_cast %66 : vector<32xf32> to vector<32x1xf32>
    %68 = tpu.reciprocal %67 {approx = true} : vector<32x1xf32> -> vector<32x1xf32>
    %69 = vector.broadcast %68 : vector<32x1xf32> to vector<32x32xf32>
    %70 = arith.mulf %65, %69 : vector<32x32xf32>
    %71 = arith.truncf %70 : vector<32x32xf32> to vector<32x32xbf16>
    %cst_48 = arith.constant dense<0.000000e+00> : vector<32x128xf32>
    %72 = tpu.matmul %71, %56, %cst_48 {dimension_numbers = #tpu.dot_dimension_numbers<[1], [0], [0], [1], [0, 0, 1, 1], [], []>} : vector<32x32xbf16>, vector<32x128xbf16>, vector<32x128xf32> -> vector<32x128xf32>
    %73 = vector.extract_strided_slice %72 {offsets = [0, 0], sizes = [8, 128], strides = [1, 1]} : vector<32x128xf32> to vector<8x128xf32>
    %74 = vector.extract_strided_slice %72 {offsets = [8, 0], sizes = [8, 128], strides = [1, 1]} : vector<32x128xf32> to vector<8x128xf32>
    %75 = tpu.concatenate %73, %74 in 1 : vector<8x128xf32>, vector<8x128xf32> -> vector<8x256xf32>
    %76 = vector.extract_strided_slice %72 {offsets = [16, 0], sizes = [8, 128], strides = [1, 1]} : vector<32x128xf32> to vector<8x128xf32>
    %77 = vector.extract_strided_slice %72 {offsets = [24, 0], sizes = [8, 128], strides = [1, 1]} : vector<32x128xf32> to vector<8x128xf32>
    %78 = tpu.concatenate %76, %77 in 1 : vector<8x128xf32>, vector<8x128xf32> -> vector<8x256xf32>
    %79 = tpu.concatenate %75, %78 in 0 : vector<8x256xf32>, vector<8x256xf32> -> vector<16x256xf32>
    %80 = arith.truncf %79 : vector<16x256xf32> to vector<16x256xbf16>
    %cst_49 = arith.constant dense<0.000000e+00> : vector<16x128xf32>
    %81 = tpu.matmul %80, %15, %cst_49 {dimension_numbers = #tpu.dot_dimension_numbers<[1], [0], [0], [1], [0, 0, 1, 1], [], []>} : vector<16x256xbf16>, vector<256x128xbf16>, vector<16x128xf32> -> vector<16x128xf32>
    %82 = arith.addf %81, %0 : vector<16x128xf32>
    %cst_50 = arith.constant dense<0.000000e+00> : vector<16xf32>
    %83 = vector.multi_reduction <add>, %82, %cst_50 [1] : vector<16x128xf32> to vector<16xf32>
    %84 = vector.shape_cast %83 : vector<16xf32> to vector<16x1xf32>
    %cst_51 = arith.constant 1.280000e+02 : f32
    %85 = vector.broadcast %cst_51 : f32 to vector<16x1xf32>
    %86 = arith.divf %84, %85 : vector<16x1xf32>
    %87 = vector.broadcast %86 : vector<16x1xf32> to vector<16x128xf32>
    %88 = arith.subf %82, %87 : vector<16x128xf32>
    %89 = arith.mulf %88, %88 : vector<16x128xf32>
    %cst_52 = arith.constant dense<0.000000e+00> : vector<16xf32>
    %90 = vector.multi_reduction <add>, %89, %cst_52 [1] : vector<16x128xf32> to vector<16xf32>
    %91 = vector.shape_cast %90 : vector<16xf32> to vector<16x1xf32>
    %cst_53 = arith.constant 1.280000e+02 : f32
    %92 = vector.broadcast %cst_53 : f32 to vector<16x1xf32>
    %93 = arith.divf %91, %92 : vector<16x1xf32>
    %cst_54 = arith.constant 9.99999974E-6 : f32
    %94 = vector.broadcast %cst_54 : f32 to vector<16x1xf32>
    %95 = arith.addf %93, %94 : vector<16x1xf32>
    %96 = math.rsqrt %95 : vector<16x1xf32>
    %97 = vector.broadcast %96 : vector<16x1xf32> to vector<16x128xf32>
    %98 = arith.mulf %88, %97 : vector<16x128xf32>
    %99 = vector.broadcast %8 : vector<1x128xf32> to vector<16x128xf32>
    %100 = arith.mulf %98, %99 : vector<16x128xf32>
    %101 = vector.broadcast %9 : vector<1x128xf32> to vector<16x128xf32>
    %102 = arith.addf %100, %101 : vector<16x128xf32>
    %cst_55 = arith.constant dense<0.000000e+00> : vector<16xf32>
    %103 = vector.multi_reduction <add>, %102, %cst_55 [1] : vector<16x128xf32> to vector<16xf32>
    %104 = vector.shape_cast %103 : vector<16xf32> to vector<16x1xf32>
    %cst_56 = arith.constant 1.280000e+02 : f32
    %105 = vector.broadcast %cst_56 : f32 to vector<16x1xf32>
    %106 = arith.divf %104, %105 : vector<16x1xf32>
    %107 = vector.broadcast %106 : vector<16x1xf32> to vector<16x128xf32>
    %108 = arith.subf %102, %107 : vector<16x128xf32>
    %109 = arith.mulf %108, %108 : vector<16x128xf32>
    %cst_57 = arith.constant dense<0.000000e+00> : vector<16xf32>
    %110 = vector.multi_reduction <add>, %109, %cst_57 [1] : vector<16x128xf32> to vector<16xf32>
    %111 = vector.shape_cast %110 : vector<16xf32> to vector<16x1xf32>
    %cst_58 = arith.constant 1.280000e+02 : f32
    %112 = vector.broadcast %cst_58 : f32 to vector<16x1xf32>
    %113 = arith.divf %111, %112 : vector<16x1xf32>
    %cst_59 = arith.constant 9.99999974E-6 : f32
    %114 = vector.broadcast %cst_59 : f32 to vector<16x1xf32>
    %115 = arith.addf %113, %114 : vector<16x1xf32>
    %116 = math.rsqrt %115 : vector<16x1xf32>
    %117 = vector.broadcast %116 : vector<16x1xf32> to vector<16x128xf32>
    %118 = arith.mulf %108, %117 : vector<16x128xf32>
    %119 = vector.broadcast %25 : vector<1x128xf32> to vector<16x128xf32>
    %120 = arith.mulf %118, %119 : vector<16x128xf32>
    %121 = vector.broadcast %27 : vector<1x128xf32> to vector<16x128xf32>
    %122 = arith.addf %120, %121 : vector<16x128xf32>
    %123 = arith.truncf %122 : vector<16x128xf32> to vector<16x128xbf16>
    %cst_60 = arith.constant dense<0.000000e+00> : vector<16x256xf32>
    %124 = tpu.matmul %123, %17, %cst_60 {dimension_numbers = #tpu.dot_dimension_numbers<[1], [0], [0], [1], [0, 0, 1, 1], [], []>} : vector<16x128xbf16>, vector<128x256xbf16>, vector<16x256xf32> -> vector<16x256xf32>
    %125 = vector.broadcast %19 : vector<1x256xf32> to vector<16x256xf32>
    %126 = arith.addf %124, %125 : vector<16x256xf32>
    %cst_61 = arith.constant 5.000000e-01 : f32
    %127 = vector.broadcast %cst_61 : f32 to vector<16x256xf32>
    %128 = arith.mulf %127, %126 : vector<16x256xf32>
    %cst_62 = arith.constant 0.707106769 : f32
    %129 = vector.broadcast %cst_62 : f32 to vector<16x256xf32>
    %130 = arith.mulf %126, %129 : vector<16x256xf32>
    %131 = math.erf %130 : vector<16x256xf32>
    %cst_63 = arith.constant 1.000000e+00 : f32
    %132 = vector.broadcast %cst_63 : f32 to vector<16x256xf32>
    %133 = arith.addf %132, %131 : vector<16x256xf32>
    %134 = arith.mulf %128, %133 : vector<16x256xf32>
    %135 = arith.truncf %134 : vector<16x256xf32> to vector<16x256xbf16>
    %cst_64 = arith.constant dense<0.000000e+00> : vector<16x128xf32>
    %136 = tpu.matmul %135, %21, %cst_64 {dimension_numbers = #tpu.dot_dimension_numbers<[1], [0], [0], [1], [0, 0, 1, 1], [], []>} : vector<16x256xbf16>, vector<256x128xbf16>, vector<16x128xf32> -> vector<16x128xf32>
    %137 = vector.broadcast %23 : vector<1x128xf32> to vector<16x128xf32>
    %138 = arith.addf %136, %137 : vector<16x128xf32>
    %139 = arith.addf %138, %102 : vector<16x128xf32>
    %cst_65 = arith.constant dense<0.000000e+00> : vector<16xf32>
    %140 = vector.multi_reduction <add>, %139, %cst_65 [1] : vector<16x128xf32> to vector<16xf32>
    %141 = vector.shape_cast %140 : vector<16xf32> to vector<16x1xf32>
    %cst_66 = arith.constant 1.280000e+02 : f32
    %142 = vector.broadcast %cst_66 : f32 to vector<16x1xf32>
    %143 = arith.divf %141, %142 : vector<16x1xf32>
    %144 = vector.broadcast %143 : vector<16x1xf32> to vector<16x128xf32>
    %145 = arith.subf %139, %144 : vector<16x128xf32>
    %146 = arith.mulf %145, %145 : vector<16x128xf32>
    %cst_67 = arith.constant dense<0.000000e+00> : vector<16xf32>
    %147 = vector.multi_reduction <add>, %146, %cst_67 [1] : vector<16x128xf32> to vector<16xf32>
    %148 = vector.shape_cast %147 : vector<16xf32> to vector<16x1xf32>
    %cst_68 = arith.constant 1.280000e+02 : f32
    %149 = vector.broadcast %cst_68 : f32 to vector<16x1xf32>
    %150 = arith.divf %148, %149 : vector<16x1xf32>
    %cst_69 = arith.constant 9.99999974E-6 : f32
    %151 = vector.broadcast %cst_69 : f32 to vector<16x1xf32>
    %152 = arith.addf %150, %151 : vector<16x1xf32>
    %153 = math.rsqrt %152 : vector<16x1xf32>
    %154 = vector.broadcast %153 : vector<16x1xf32> to vector<16x128xf32>
    %155 = arith.mulf %145, %154 : vector<16x128xf32>
    %156 = vector.broadcast %10 : vector<1x128xf32> to vector<16x128xf32>
    %157 = arith.mulf %155, %156 : vector<16x128xf32>
    %158 = vector.broadcast %11 : vector<1x128xf32> to vector<16x128xf32>
    %159 = arith.addf %157, %158 : vector<16x128xf32>
    %c1 = arith.constant 1 : index
    %c0_70 = arith.constant 0 : index
    %c0_71 = arith.constant 0 : index
    %160 = vector.load %arg10[%c1, %c0_70, %c0_71] : memref<2x128x768xbf16, #tpu.memory_space<vmem>>, vector<1x128x768xbf16>
    %161 = vector.shape_cast %160 : vector<1x128x768xbf16> to vector<128x768xbf16>
    %c1_72 = arith.constant 1 : index
    %c0_73 = arith.constant 0 : index
    %c0_74 = arith.constant 0 : index
    %162 = vector.load %arg11[%c1_72, %c0_73, %c0_74] : memref<2x256x128xbf16, #tpu.memory_space<vmem>>, vector<1x256x128xbf16>
    %163 = vector.shape_cast %162 : vector<1x256x128xbf16> to vector<256x128xbf16>
    %c1_75 = arith.constant 1 : index
    %c0_76 = arith.constant 0 : index
    %c0_77 = arith.constant 0 : index
    %164 = vector.load %arg14[%c1_75, %c0_76, %c0_77] : memref<2x128x256xbf16, #tpu.memory_space<vmem>>, vector<1x128x256xbf16>
    %165 = vector.shape_cast %164 : vector<1x128x256xbf16> to vector<128x256xbf16>
    %c1_78 = arith.constant 1 : index
    %c0_79 = arith.constant 0 : index
    %c0_80 = arith.constant 0 : index
    %166 = vector.load %arg15[%c1_78, %c0_79, %c0_80] : memref<2x1x256xf32, #tpu.memory_space<vmem>>, vector<1x1x256xf32>
    %167 = vector.shape_cast %166 : vector<1x1x256xf32> to vector<1x256xf32>
    %c1_81 = arith.constant 1 : index
    %c0_82 = arith.constant 0 : index
    %c0_83 = arith.constant 0 : index
    %168 = vector.load %arg16[%c1_81, %c0_82, %c0_83] : memref<2x256x128xbf16, #tpu.memory_space<vmem>>, vector<1x256x128xbf16>
    %169 = vector.shape_cast %168 : vector<1x256x128xbf16> to vector<256x128xbf16>
    %c1_84 = arith.constant 1 : index
    %c0_85 = arith.constant 0 : index
    %c0_86 = arith.constant 0 : index
    %170 = vector.load %arg17[%c1_84, %c0_85, %c0_86] : memref<2x1x128xf32, #tpu.memory_space<vmem>>, vector<1x1x128xf32>
    %171 = vector.shape_cast %170 : vector<1x1x128xf32> to vector<1x128xf32>
    %c1_87 = arith.constant 1 : index
    %c0_88 = arith.constant 0 : index
    %c0_89 = arith.constant 0 : index
    %172 = vector.load %arg12[%c1_87, %c0_88, %c0_89] : memref<2x1x128xf32, #tpu.memory_space<vmem>>, vector<1x1x128xf32>
    %173 = vector.shape_cast %172 : vector<1x1x128xf32> to vector<1x128xf32>
    %c1_90 = arith.constant 1 : index
    %c0_91 = arith.constant 0 : index
    %c0_92 = arith.constant 0 : index
    %174 = vector.load %arg13[%c1_90, %c0_91, %c0_92] : memref<2x1x128xf32, #tpu.memory_space<vmem>>, vector<1x1x128xf32>
    %175 = vector.shape_cast %174 : vector<1x1x128xf32> to vector<1x128xf32>
    %176 = arith.truncf %159 : vector<16x128xf32> to vector<16x128xbf16>
    %cst_93 = arith.constant dense<0.000000e+00> : vector<16x768xf32>
    %177 = tpu.matmul %176, %161, %cst_93 {dimension_numbers = #tpu.dot_dimension_numbers<[1], [0], [0], [1], [0, 0, 1, 1], [], []>} : vector<16x128xbf16>, vector<128x768xbf16>, vector<16x768xf32> -> vector<16x768xf32>
    %178 = vector.extract_strided_slice %177 {offsets = [0, 0], sizes = [16, 512], strides = [1, 1]} : vector<16x768xf32> to vector<16x512xf32>
    %179 = arith.mulf %178, %5 : vector<16x512xf32>
    %c511_i32_94 = arith.constant 511 : i32
    %180 = tpu.dynamic_rotate %178 by %c511_i32_94 dim 1 : vector<16x512xf32>, i32 -> vector<16x512xf32>
    %181 = arith.mulf %180, %6 : vector<16x512xf32>
    %182 = arith.addf %179, %181 : vector<16x512xf32>
    %c1_i32_95 = arith.constant 1 : i32
    %183 = tpu.dynamic_rotate %178 by %c1_i32_95 dim 1 : vector<16x512xf32>, i32 -> vector<16x512xf32>
    %184 = arith.mulf %183, %7 : vector<16x512xf32>
    %185 = arith.addf %182, %184 : vector<16x512xf32>
    %186 = vector.extract_strided_slice %177 {offsets = [0, 512], sizes = [16, 256], strides = [1, 1]} : vector<16x768xf32> to vector<16x256xf32>
    %187 = vector.extract_strided_slice %185 {offsets = [0, 0], sizes = [8, 128], strides = [1, 1]} : vector<16x512xf32> to vector<8x128xf32>
    %188 = vector.extract_strided_slice %185 {offsets = [0, 256], sizes = [8, 128], strides = [1, 1]} : vector<16x512xf32> to vector<8x128xf32>
    %189 = vector.extract_strided_slice %186 {offsets = [0, 0], sizes = [8, 128], strides = [1, 1]} : vector<16x256xf32> to vector<8x128xf32>
    %190 = vector.extract_strided_slice %185 {offsets = [0, 128], sizes = [8, 128], strides = [1, 1]} : vector<16x512xf32> to vector<8x128xf32>
    %191 = vector.extract_strided_slice %185 {offsets = [0, 384], sizes = [8, 128], strides = [1, 1]} : vector<16x512xf32> to vector<8x128xf32>
    %192 = vector.extract_strided_slice %186 {offsets = [0, 128], sizes = [8, 128], strides = [1, 1]} : vector<16x256xf32> to vector<8x128xf32>
    %193 = vector.extract_strided_slice %185 {offsets = [8, 0], sizes = [8, 128], strides = [1, 1]} : vector<16x512xf32> to vector<8x128xf32>
    %194 = vector.extract_strided_slice %185 {offsets = [8, 256], sizes = [8, 128], strides = [1, 1]} : vector<16x512xf32> to vector<8x128xf32>
    %195 = vector.extract_strided_slice %186 {offsets = [8, 0], sizes = [8, 128], strides = [1, 1]} : vector<16x256xf32> to vector<8x128xf32>
    %196 = vector.extract_strided_slice %185 {offsets = [8, 128], sizes = [8, 128], strides = [1, 1]} : vector<16x512xf32> to vector<8x128xf32>
    %197 = vector.extract_strided_slice %185 {offsets = [8, 384], sizes = [8, 128], strides = [1, 1]} : vector<16x512xf32> to vector<8x128xf32>
    %198 = vector.extract_strided_slice %186 {offsets = [8, 128], sizes = [8, 128], strides = [1, 1]} : vector<16x256xf32> to vector<8x128xf32>
    %199 = tpu.concatenate %187, %190, %193, %196 in 0 : vector<8x128xf32>, vector<8x128xf32>, vector<8x128xf32>, vector<8x128xf32> -> vector<32x128xf32>
    %200 = arith.truncf %199 : vector<32x128xf32> to vector<32x128xbf16>
    %201 = tpu.concatenate %188, %191, %194, %197 in 0 : vector<8x128xf32>, vector<8x128xf32>, vector<8x128xf32>, vector<8x128xf32> -> vector<32x128xf32>
    %202 = arith.truncf %201 : vector<32x128xf32> to vector<32x128xbf16>
    %203 = tpu.concatenate %189, %192, %195, %198 in 0 : vector<8x128xf32>, vector<8x128xf32>, vector<8x128xf32>, vector<8x128xf32> -> vector<32x128xf32>
    %204 = arith.truncf %203 : vector<32x128xf32> to vector<32x128xbf16>
    %cst_96 = arith.constant dense<0.000000e+00> : vector<32x32xf32>
    %205 = tpu.matmul %200, %202, %cst_96 {dimension_numbers = #tpu.dot_dimension_numbers<[1], [1], [0], [0], [0, 0, 1, 0], [], []>} : vector<32x128xbf16>, vector<32x128xbf16>, vector<32x32xf32> -> vector<32x32xf32>
    %cst_97 = arith.constant 0.0883883461 : f32
    %206 = vector.broadcast %cst_97 : f32 to vector<32x32xf32>
    %207 = arith.mulf %205, %206 : vector<32x32xf32>
    %208 = arith.select %3, %207, %4 : vector<32x32xi1>, vector<32x32xf32>
    %cst_98 = arith.constant dense<0xFF800000> : vector<32xf32>
    %209 = vector.multi_reduction <maximumf>, %208, %cst_98 [1] : vector<32x32xf32> to vector<32xf32>
    %210 = vector.shape_cast %209 : vector<32xf32> to vector<32x1xf32>
    %211 = vector.broadcast %210 : vector<32x1xf32> to vector<32x32xf32>
    %212 = arith.subf %208, %211 : vector<32x32xf32>
    %213 = math.exp %212 : vector<32x32xf32>
    %cst_99 = arith.constant dense<0.000000e+00> : vector<32xf32>
    %214 = vector.multi_reduction <add>, %213, %cst_99 [1] : vector<32x32xf32> to vector<32xf32>
    %215 = vector.shape_cast %214 : vector<32xf32> to vector<32x1xf32>
    %216 = tpu.reciprocal %215 {approx = true} : vector<32x1xf32> -> vector<32x1xf32>
    %217 = vector.broadcast %216 : vector<32x1xf32> to vector<32x32xf32>
    %218 = arith.mulf %213, %217 : vector<32x32xf32>
    %219 = arith.truncf %218 : vector<32x32xf32> to vector<32x32xbf16>
    %cst_100 = arith.constant dense<0.000000e+00> : vector<32x128xf32>
    %220 = tpu.matmul %219, %204, %cst_100 {dimension_numbers = #tpu.dot_dimension_numbers<[1], [0], [0], [1], [0, 0, 1, 1], [], []>} : vector<32x32xbf16>, vector<32x128xbf16>, vector<32x128xf32> -> vector<32x128xf32>
    %221 = vector.extract_strided_slice %220 {offsets = [0, 0], sizes = [8, 128], strides = [1, 1]} : vector<32x128xf32> to vector<8x128xf32>
    %222 = vector.extract_strided_slice %220 {offsets = [8, 0], sizes = [8, 128], strides = [1, 1]} : vector<32x128xf32> to vector<8x128xf32>
    %223 = tpu.concatenate %221, %222 in 1 : vector<8x128xf32>, vector<8x128xf32> -> vector<8x256xf32>
    %224 = vector.extract_strided_slice %220 {offsets = [16, 0], sizes = [8, 128], strides = [1, 1]} : vector<32x128xf32> to vector<8x128xf32>
    %225 = vector.extract_strided_slice %220 {offsets = [24, 0], sizes = [8, 128], strides = [1, 1]} : vector<32x128xf32> to vector<8x128xf32>
    %226 = tpu.concatenate %224, %225 in 1 : vector<8x128xf32>, vector<8x128xf32> -> vector<8x256xf32>
    %227 = tpu.concatenate %223, %226 in 0 : vector<8x256xf32>, vector<8x256xf32> -> vector<16x256xf32>
    %228 = arith.truncf %227 : vector<16x256xf32> to vector<16x256xbf16>
    %cst_101 = arith.constant dense<0.000000e+00> : vector<16x128xf32>
    %229 = tpu.matmul %228, %163, %cst_101 {dimension_numbers = #tpu.dot_dimension_numbers<[1], [0], [0], [1], [0, 0, 1, 1], [], []>} : vector<16x256xbf16>, vector<256x128xbf16>, vector<16x128xf32> -> vector<16x128xf32>
    %230 = arith.addf %229, %159 : vector<16x128xf32>
    %cst_102 = arith.constant dense<0.000000e+00> : vector<16xf32>
    %231 = vector.multi_reduction <add>, %230, %cst_102 [1] : vector<16x128xf32> to vector<16xf32>
    %232 = vector.shape_cast %231 : vector<16xf32> to vector<16x1xf32>
    %cst_103 = arith.constant 1.280000e+02 : f32
    %233 = vector.broadcast %cst_103 : f32 to vector<16x1xf32>
    %234 = arith.divf %232, %233 : vector<16x1xf32>
    %235 = vector.broadcast %234 : vector<16x1xf32> to vector<16x128xf32>
    %236 = arith.subf %230, %235 : vector<16x128xf32>
    %237 = arith.mulf %236, %236 : vector<16x128xf32>
    %cst_104 = arith.constant dense<0.000000e+00> : vector<16xf32>
    %238 = vector.multi_reduction <add>, %237, %cst_104 [1] : vector<16x128xf32> to vector<16xf32>
    %239 = vector.shape_cast %238 : vector<16xf32> to vector<16x1xf32>
    %cst_105 = arith.constant 1.280000e+02 : f32
    %240 = vector.broadcast %cst_105 : f32 to vector<16x1xf32>
    %241 = arith.divf %239, %240 : vector<16x1xf32>
    %cst_106 = arith.constant 9.99999974E-6 : f32
    %242 = vector.broadcast %cst_106 : f32 to vector<16x1xf32>
    %243 = arith.addf %241, %242 : vector<16x1xf32>
    %244 = math.rsqrt %243 : vector<16x1xf32>
    %245 = vector.broadcast %244 : vector<16x1xf32> to vector<16x128xf32>
    %246 = arith.mulf %236, %245 : vector<16x128xf32>
    %247 = vector.broadcast %8 : vector<1x128xf32> to vector<16x128xf32>
    %248 = arith.mulf %246, %247 : vector<16x128xf32>
    %249 = vector.broadcast %9 : vector<1x128xf32> to vector<16x128xf32>
    %250 = arith.addf %248, %249 : vector<16x128xf32>
    %cst_107 = arith.constant dense<0.000000e+00> : vector<16xf32>
    %251 = vector.multi_reduction <add>, %250, %cst_107 [1] : vector<16x128xf32> to vector<16xf32>
    %252 = vector.shape_cast %251 : vector<16xf32> to vector<16x1xf32>
    %cst_108 = arith.constant 1.280000e+02 : f32
    %253 = vector.broadcast %cst_108 : f32 to vector<16x1xf32>
    %254 = arith.divf %252, %253 : vector<16x1xf32>
    %255 = vector.broadcast %254 : vector<16x1xf32> to vector<16x128xf32>
    %256 = arith.subf %250, %255 : vector<16x128xf32>
    %257 = arith.mulf %256, %256 : vector<16x128xf32>
    %cst_109 = arith.constant dense<0.000000e+00> : vector<16xf32>
    %258 = vector.multi_reduction <add>, %257, %cst_109 [1] : vector<16x128xf32> to vector<16xf32>
    %259 = vector.shape_cast %258 : vector<16xf32> to vector<16x1xf32>
    %cst_110 = arith.constant 1.280000e+02 : f32
    %260 = vector.broadcast %cst_110 : f32 to vector<16x1xf32>
    %261 = arith.divf %259, %260 : vector<16x1xf32>
    %cst_111 = arith.constant 9.99999974E-6 : f32
    %262 = vector.broadcast %cst_111 : f32 to vector<16x1xf32>
    %263 = arith.addf %261, %262 : vector<16x1xf32>
    %264 = math.rsqrt %263 : vector<16x1xf32>
    %265 = vector.broadcast %264 : vector<16x1xf32> to vector<16x128xf32>
    %266 = arith.mulf %256, %265 : vector<16x128xf32>
    %267 = vector.broadcast %173 : vector<1x128xf32> to vector<16x128xf32>
    %268 = arith.mulf %266, %267 : vector<16x128xf32>
    %269 = vector.broadcast %175 : vector<1x128xf32> to vector<16x128xf32>
    %270 = arith.addf %268, %269 : vector<16x128xf32>
    %271 = arith.truncf %270 : vector<16x128xf32> to vector<16x128xbf16>
    %cst_112 = arith.constant dense<0.000000e+00> : vector<16x256xf32>
    %272 = tpu.matmul %271, %165, %cst_112 {dimension_numbers = #tpu.dot_dimension_numbers<[1], [0], [0], [1], [0, 0, 1, 1], [], []>} : vector<16x128xbf16>, vector<128x256xbf16>, vector<16x256xf32> -> vector<16x256xf32>
    %273 = vector.broadcast %167 : vector<1x256xf32> to vector<16x256xf32>
    %274 = arith.addf %272, %273 : vector<16x256xf32>
    %cst_113 = arith.constant 5.000000e-01 : f32
    %275 = vector.broadcast %cst_113 : f32 to vector<16x256xf32>
    %276 = arith.mulf %275, %274 : vector<16x256xf32>
    %cst_114 = arith.constant 0.707106769 : f32
    %277 = vector.broadcast %cst_114 : f32 to vector<16x256xf32>
    %278 = arith.mulf %274, %277 : vector<16x256xf32>
    %279 = math.erf %278 : vector<16x256xf32>
    %cst_115 = arith.constant 1.000000e+00 : f32
    %280 = vector.broadcast %cst_115 : f32 to vector<16x256xf32>
    %281 = arith.addf %280, %279 : vector<16x256xf32>
    %282 = arith.mulf %276, %281 : vector<16x256xf32>
    %283 = arith.truncf %282 : vector<16x256xf32> to vector<16x256xbf16>
    %cst_116 = arith.constant dense<0.000000e+00> : vector<16x128xf32>
    %284 = tpu.matmul %283, %169, %cst_116 {dimension_numbers = #tpu.dot_dimension_numbers<[1], [0], [0], [1], [0, 0, 1, 1], [], []>} : vector<16x256xbf16>, vector<256x128xbf16>, vector<16x128xf32> -> vector<16x128xf32>
    %285 = vector.broadcast %171 : vector<1x128xf32> to vector<16x128xf32>
    %286 = arith.addf %284, %285 : vector<16x128xf32>
    %287 = arith.addf %286, %250 : vector<16x128xf32>
    %cst_117 = arith.constant dense<0.000000e+00> : vector<16xf32>
    %288 = vector.multi_reduction <add>, %287, %cst_117 [1] : vector<16x128xf32> to vector<16xf32>
    %289 = vector.shape_cast %288 : vector<16xf32> to vector<16x1xf32>
    %cst_118 = arith.constant 1.280000e+02 : f32
    %290 = vector.broadcast %cst_118 : f32 to vector<16x1xf32>
    %291 = arith.divf %289, %290 : vector<16x1xf32>
    %292 = vector.broadcast %291 : vector<16x1xf32> to vector<16x128xf32>
    %293 = arith.subf %287, %292 : vector<16x128xf32>
    %294 = arith.mulf %293, %293 : vector<16x128xf32>
    %cst_119 = arith.constant dense<0.000000e+00> : vector<16xf32>
    %295 = vector.multi_reduction <add>, %294, %cst_119 [1] : vector<16x128xf32> to vector<16xf32>
    %296 = vector.shape_cast %295 : vector<16xf32> to vector<16x1xf32>
    %cst_120 = arith.constant 1.280000e+02 : f32
    %297 = vector.broadcast %cst_120 : f32 to vector<16x1xf32>
    %298 = arith.divf %296, %297 : vector<16x1xf32>
    %cst_121 = arith.constant 9.99999974E-6 : f32
    %299 = vector.broadcast %cst_121 : f32 to vector<16x1xf32>
    %300 = arith.addf %298, %299 : vector<16x1xf32>
    %301 = math.rsqrt %300 : vector<16x1xf32>
    %302 = vector.broadcast %301 : vector<16x1xf32> to vector<16x128xf32>
    %303 = arith.mulf %293, %302 : vector<16x128xf32>
    %304 = vector.broadcast %10 : vector<1x128xf32> to vector<16x128xf32>
    %305 = arith.mulf %303, %304 : vector<16x128xf32>
    %306 = vector.broadcast %11 : vector<1x128xf32> to vector<16x128xf32>
    %307 = arith.addf %305, %306 : vector<16x128xf32>
    %c0_122 = arith.constant 0 : index
    %c0_123 = arith.constant 0 : index
    %308 = vector.load %arg18[%c0_122, %c0_123] : memref<16x128xf32, #tpu.memory_space<vmem>>, vector<16x128xf32>
    tpu.vector_store %arg18[%c0_122, %c0_123], %307 {strides = array<i32>} : memref<16x128xf32, #tpu.memory_space<vmem>>, vector<16x128xf32>,
    return
  }
}

</mosaic_0001>

<llo_original>
// kernel: transformer_forward.1
$region0: #{transformer_forward.1}
  #allocation0 [shape = 'u32[]', space=smem, size = 0x4, offset = 0x4, fixed_abs, tag = 'smem constant byte address 0x4 - core index']
  #allocation1 [shape = 'u32[144,128]{1,0:T(1,128)}', space=vmem, size = 0x12000, scoped, tag = 'internal scratch']
  %s0 = inlined_call_operand.vmem [shape: f32[16,128], index: 0, kind: input, shape index: {}]
  %s1 = inlined_call_operand.vmem [shape: f32[32,32], index: 1, kind: input, shape index: {}]
  %s2 = inlined_call_operand.vmem [shape: f32[32,32], index: 2, kind: input, shape index: {}]
  %s3 = inlined_call_operand.vmem [shape: f32[16,512], index: 3, kind: input, shape index: {}]
  %s4 = inlined_call_operand.vmem [shape: f32[16,512], index: 4, kind: input, shape index: {}]
  %s5 = inlined_call_operand.vmem [shape: f32[16,512], index: 5, kind: input, shape index: {}]
  %s6 = inlined_call_operand.vmem [shape: f32[1,128], index: 6, kind: input, shape index: {}]
  %s7 = inlined_call_operand.vmem [shape: f32[1,128], index: 7, kind: input, shape index: {}]
  %s8 = inlined_call_operand.vmem [shape: f32[1,128], index: 8, kind: input, shape index: {}]
  %s9 = inlined_call_operand.vmem [shape: f32[1,128], index: 9, kind: input, shape index: {}]
  %s10 = inlined_call_operand.vmem [shape: bf16[2,128,768], index: 10, kind: input, shape index: {}]
  %s11 = inlined_call_operand.vmem [shape: bf16[2,256,128], index: 11, kind: input, shape index: {}]
  %s12 = inlined_call_operand.vmem [shape: f32[2,1,128], index: 12, kind: input, shape index: {}]
  %s13 = inlined_call_operand.vmem [shape: f32[2,1,128], index: 13, kind: input, shape index: {}]
  %s14 = inlined_call_operand.vmem [shape: bf16[2,128,256], index: 14, kind: input, shape index: {}]
  %s15 = inlined_call_operand.vmem [shape: f32[2,1,256], index: 15, kind: input, shape index: {}]
  %s16 = inlined_call_operand.vmem [shape: bf16[2,256,128], index: 16, kind: input, shape index: {}]
  %s17 = inlined_call_operand.vmem [shape: f32[2,1,128], index: 17, kind: input, shape index: {}]
  %s18 = inlined_call_operand.hbm [shape: f32[16,128], index: 18, kind: output, shape index: {}]
  %s19 = sld [smem:[#allocation0]]
  $region82: #{transformer_forward.1} parent=0
    _
  %s21 = ssub.s32 1, %s19
  %s22 = scalar_select 0, %s21, %s19
  $region1: #{transformer_forward.1} parent=0
    #allocation2 [shape = 'u8[8192]{0}', space=vmem, size = 0x2000, scoped, tag = 'output window, operand 0, single buffered']
    #allocation3 [shape = 's32[1]{0}', space=sflag, size = 0x4, scoped, tag = 'scoped memory for transformer_forward.1']
    %23 = vsyncpa [#allocation3], 0
    // Predicated region
    $region2: #{transformer_forward.1} parent=1 // pred_check
      _
    $region3: #{transformer_forward.1} parent=1 // pred_check_branch
      %25 = sbr.rel (0) target = $region5
    $region4: #{transformer_forward.1} parent=1 // pred_region
      _
    $region5: #{transformer_forward.1} parent=1 // pred_fallthru
      _
    // Predicated region
    $region6: #{transformer_forward.1} parent=1 // pred_check
      _
    $region7: #{transformer_forward.1} parent=1 // pred_check_branch
      %27 = sbr.rel (0) target = $region9
    $region8: #{transformer_forward.1} parent=1 // pred_region
      _
    $region9: #{transformer_forward.1} parent=1 // pred_fallthru
      _
    // Predicated region
    $region10: #{transformer_forward.1} parent=1 // pred_check
      _
    $region11: #{transformer_forward.1} parent=1 // pred_check_branch
      %29 = sbr.rel (0) target = $region13
    $region12: #{transformer_forward.1} parent=1 // pred_region
      _
    $region13: #{transformer_forward.1} parent=1 // pred_fallthru
      _
    // Predicated region
    $region14: #{transformer_forward.1} parent=1 // pred_check
      _
    $region15: #{transformer_forward.1} parent=1 // pred_check_branch
      %31 = sbr.rel (0) target = $region17
    $region16: #{transformer_forward.1} parent=1 // pred_region
      _
    $region17: #{transformer_forward.1} parent=1 // pred_fallthru
      _
    // Predicated region
    $region18: #{transformer_forward.1} parent=1 // pred_check
      _
    $region19: #{transformer_forward.1} parent=1 // pred_check_branch
      %33 = sbr.rel (0) target = $region21
    $region20: #{transformer_forward.1} parent=1 // pred_region
      _
    $region21: #{transformer_forward.1} parent=1 // pred_fallthru
      _
    // Predicated region
    $region22: #{transformer_forward.1} parent=1 // pred_check
      _
    $region23: #{transformer_forward.1} parent=1 // pred_check_branch
      %35 = sbr.rel (0) target = $region25
    $region24: #{transformer_forward.1} parent=1 // pred_region
      _
    $region25: #{transformer_forward.1} parent=1 // pred_fallthru
      _
    // Predicated region
    $region26: #{transformer_forward.1} parent=1 // pred_check
      _
    $region27: #{transformer_forward.1} parent=1 // pred_check_branch
      %37 = sbr.rel (0) target = $region29
    $region28: #{transformer_forward.1} parent=1 // pred_region
      _
    $region29: #{transformer_forward.1} parent=1 // pred_fallthru
      _
    // Predicated region
    $region30: #{transformer_forward.1} parent=1 // pred_check
      _
    $region31: #{transformer_forward.1} parent=1 // pred_check_branch
      %39 = sbr.rel (0) target = $region33
    $region32: #{transformer_forward.1} parent=1 // pred_region
      _
    $region33: #{transformer_forward.1} parent=1 // pred_fallthru
      _
    // Predicated region
    $region34: #{transformer_forward.1} parent=1 // pred_check
      _
    $region35: #{transformer_forward.1} parent=1 // pred_check_branch
      %41 = sbr.rel (0) target = $region37
    $region36: #{transformer_forward.1} parent=1 // pred_region
      _
    $region37: #{transformer_forward.1} parent=1 // pred_fallthru
      _
    // Predicated region
    $region38: #{transformer_forward.1} parent=1 // pred_check
      _
    $region39: #{transformer_forward.1} parent=1 // pred_check_branch
      %43 = sbr.rel (0) target = $region41
    $region40: #{transformer_forward.1} parent=1 // pred_region
      _
    $region41: #{transformer_forward.1} parent=1 // pred_fallthru
      _
    // Predicated region
    $region42: #{transformer_forward.1} parent=1 // pred_check
      _
    $region43: #{transformer_forward.1} parent=1 // pred_check_branch
      %45 = sbr.rel (0) target = $region45
    $region44: #{transformer_forward.1} parent=1 // pred_region
      _
    $region45: #{transformer_forward.1} parent=1 // pred_fallthru
      _
    // Predicated region
    $region46: #{transformer_forward.1} parent=1 // pred_check
      _
    $region47: #{transformer_forward.1} parent=1 // pred_check_branch
      %47 = sbr.rel (0) target = $region49
    $region48: #{transformer_forward.1} parent=1 // pred_region
      _
    $region49: #{transformer_forward.1} parent=1 // pred_fallthru
      _
    // Predicated region
    $region50: #{transformer_forward.1} parent=1 // pred_check
      _
    $region51: #{transformer_forward.1} parent=1 // pred_check_branch
      %49 = sbr.rel (0) target = $region53
    $region52: #{transformer_forward.1} parent=1 // pred_region
      _
    $region53: #{transformer_forward.1} parent=1 // pred_fallthru
      _
    // Predicated region
    $region54: #{transformer_forward.1} parent=1 // pred_check
      _
    $region55: #{transformer_forward.1} parent=1 // pred_check_branch
      %51 = sbr.rel (0) target = $region57
    $region56: #{transformer_forward.1} parent=1 // pred_region
      _
    $region57: #{transformer_forward.1} parent=1 // pred_fallthru
      _
    // Predicated region
    $region58: #{transformer_forward.1} parent=1 // pred_check
      _
    $region59: #{transformer_forward.1} parent=1 // pred_check_branch
      %53 = sbr.rel (0) target = $region61
    $region60: #{transformer_forward.1} parent=1 // pred_region
      _
    $region61: #{transformer_forward.1} parent=1 // pred_fallthru
      _
    // Predicated region
    $region62: #{transformer_forward.1} parent=1 // pred_check
      _
    $region63: #{transformer_forward.1} parent=1 // pred_check_branch
      %55 = sbr.rel (0) target = $region65
    $region64: #{transformer_forward.1} parent=1 // pred_region
      _
    $region65: #{transformer_forward.1} parent=1 // pred_fallthru
      _
    // Predicated region
    $region66: #{transformer_forward.1} parent=1 // pred_check
      _
    $region67: #{transformer_forward.1} parent=1 // pred_check_branch
      %57 = sbr.rel (0) target = $region69
    $region68: #{transformer_forward.1} parent=1 // pred_region
      _
    $region69: #{transformer_forward.1} parent=1 // pred_fallthru
      _
    // Predicated region
    $region70: #{transformer_forward.1} parent=1 // pred_check
      _
    $region71: #{transformer_forward.1} parent=1 // pred_check_branch
      %59 = sbr.rel (0) target = $region73
    $region72: #{transformer_forward.1} parent=1 // pred_region
      _
    $region73: #{transformer_forward.1} parent=1 // pred_fallthru
      _
    %v61 = vld [vmem:[%s0] sm:$0xff]
    %v62 = vld [vmem:[%s0 + $0x8] sm:$0xff]
    %v63 = vld [vmem:[%s1] sm:$0xff]
    %v64 = vld [vmem:[%s1 + $0x8] sm:$0xff]
    %v65 = vld [vmem:[%s1 + $0x10] sm:$0xff]
    %v66 = vld [vmem:[%s1 + $0x18] sm:$0xff]
    %vm67 = vcmp.gt.f32.partialorder %v63, 0.5
    %vm68 = vcmp.gt.f32.partialorder %v64, 0.5
    %vm69 = vcmp.gt.f32.partialorder %v65, 0.5
    %vm70 = vcmp.gt.f32.partialorder %v66, 0.5
    %v71 = vld [vmem:[%s2] sm:$0xff]
    %v72 = vld [vmem:[%s2 + $0x8] sm:$0xff]
    %v73 = vld [vmem:[%s2 + $0x10] sm:$0xff]
    %v74 = vld [vmem:[%s2 + $0x18] sm:$0xff]
    %v75 = vld [vmem:[%s3] sm:$0xff]
    %v76 = vld [vmem:[%s3 + $0x8] sm:$0xff]
    %v77 = vld [vmem:[%s3 + $0x10] sm:$0xff]
    %v78 = vld [vmem:[%s3 + $0x18] sm:$0xff]
    %v79 = vld [vmem:[%s3 + $0x20] sm:$0xff]
    %v80 = vld [vmem:[%s3 + $0x28] sm:$0xff]
    %v81 = vld [vmem:[%s3 + $0x30] sm:$0xff]
    %v82 = vld [vmem:[%s3 + $0x38] sm:$0xff]
    %v83 = vld [vmem:[%s4] sm:$0xff]
    %v84 = vld [vmem:[%s4 + $0x8] sm:$0xff]
    %v85 = vld [vmem:[%s4 + $0x10] sm:$0xff]
    %v86 = vld [vmem:[%s4 + $0x18] sm:$0xff]
    %v87 = vld [vmem:[%s4 + $0x20] sm:$0xff]
    %v88 = vld [vmem:[%s4 + $0x28] sm:$0xff]
    %v89 = vld [vmem:[%s4 + $0x30] sm:$0xff]
    %v90 = vld [vmem:[%s4 + $0x38] sm:$0xff]
    %v91 = vld [vmem:[%s5] sm:$0xff]
    %v92 = vld [vmem:[%s5 + $0x8] sm:$0xff]
    %v93 = vld [vmem:[%s5 + $0x10] sm:$0xff]
    %v94 = vld [vmem:[%s5 + $0x18] sm:$0xff]
    %v95 = vld [vmem:[%s5 + $0x20] sm:$0xff]
    %v96 = vld [vmem:[%s5 + $0x28] sm:$0xff]
    %v97 = vld [vmem:[%s5 + $0x30] sm:$0xff]
    %v98 = vld [vmem:[%s5 + $0x38] sm:$0xff]
    %v99 = vld [vmem:[%s6] sm:$0x1]
    %v100 = vld [vmem:[%s7] sm:$0x1]
    %v101 = vld [vmem:[%s8] sm:$0x1]
    %v102 = vld [vmem:[%s9] sm:$0x1]
    %v103 = vld [vmem:[%s10] sm:$0xff]
    %v104 = vld [vmem:[%s10 + $0x8] sm:$0xff]
    %v105 = vld [vmem:[%s10 + $0x10] sm:$0xff]
    %v106 = vld [vmem:[%s10 + $0x18] sm:$0xff]
    %v107 = vld [vmem:[%s10 + $0x20] sm:$0xff]
    %v108 = vld [vmem:[%s10 + $0x28] sm:$0xff]
    %v109 = vld [vmem:[%s10 + $0x30] sm:$0xff]
    %v110 = vld [vmem:[%s10 + $0x38] sm:$0xff]
    %v111 = vld [vmem:[%s10 + $0x40] sm:$0xff]
    %v112 = vld [vmem:[%s10 + $0x48] sm:$0xff]
    %v113 = vld [vmem:[%s10 + $0x50] sm:$0xff]
    %v114 = vld [vmem:[%s10 + $0x58] sm:$0xff]
    %v115 = vld [vmem:[%s10 + $0x60] sm:$0xff]
    %v116 = vld [vmem:[%s10 + $0x68] sm:$0xff]
    %v117 = vld [vmem:[%s10 + $0x70] sm:$0xff]
    %v118 = vld [vmem:[%s10 + $0x78] sm:$0xff]
    %v119 = vld [vmem:[%s10 + $0x80] sm:$0xff]
    %v120 = vld [vmem:[%s10 + $0x88] sm:$0xff]
    %v121 = vld [vmem:[%s10 + $0x90] sm:$0xff]
    %v122 = vld [vmem:[%s10 + $0x98] sm:$0xff]
    %v123 = vld [vmem:[%s10 + $0xa0] sm:$0xff]
    %v124 = vld [vmem:[%s10 + $0xa8] sm:$0xff]
    %v125 = vld [vmem:[%s10 + $0xb0] sm:$0xff]
    %v126 = vld [vmem:[%s10 + $0xb8] sm:$0xff]
    %v127 = vld [vmem:[%s10 + $0xc0] sm:$0xff]
    %v128 = vld [vmem:[%s10 + $0xc8] sm:$0xff]
    %v129 = vld [vmem:[%s10 + $0xd0] sm:$0xff]
    %v130 = vld [vmem:[%s10 + $0xd8] sm:$0xff]
    %v131 = vld [vmem:[%s10 + $0xe0] sm:$0xff]
    %v132 = vld [vmem:[%s10 + $0xe8] sm:$0xff]
    %v133 = vld [vmem:[%s10 + $0xf0] sm:$0xff]
    %v134 = vld [vmem:[%s10 + $0xf8] sm:$0xff]
    %v135 = vld [vmem:[%s10 + $0x100] sm:$0xff]
    %v136 = vld [vmem:[%s10 + $0x108] sm:$0xff]
    %v137 = vld [vmem:[%s10 + $0x110] sm:$0xff]
    %v138 = vld [vmem:[%s10 + $0x118] sm:$0xff]
    %v139 = vld [vmem:[%s10 + $0x120] sm:$0xff]
    %v140 = vld [vmem:[%s10 + $0x128] sm:$0xff]
    %v141 = vld [vmem:[%s10 + $0x130] sm:$0xff]
    %v142 = vld [vmem:[%s10 + $0x138] sm:$0xff]
    %v143 = vld [vmem:[%s10 + $0x140] sm:$0xff]
    %v144 = vld [vmem:[%s10 + $0x148] sm:$0xff]
    %v145 = vld [vmem:[%s10 + $0x150] sm:$0xff]
    %v146 = vld [vmem:[%s10 + $0x158] sm:$0xff]
    %v147 = vld [vmem:[%s10 + $0x160] sm:$0xff]
    %v148 = vld [vmem:[%s10 + $0x168] sm:$0xff]
    %v149 = vld [vmem:[%s10 + $0x170] sm:$0xff]
    %v150 = vld [vmem:[%s10 + $0x178] sm:$0xff]
    %v151 = vld [vmem:[%s11] sm:$0xf]
    %v152 = vld [vmem:[%s11 + $0x4] sm:$0xf]
    %v153 = vld [vmem:[%s11 + $0x8] sm:$0xf]
    %v154 = vld [vmem:[%s11 + $0xc] sm:$0xf]
    %v155 = vld [vmem:[%s11 + $0x10] sm:$0xf]
    %v156 = vld [vmem:[%s11 + $0x14] sm:$0xf]
    %v157 = vld [vmem:[%s11 + $0x18] sm:$0xf]
    %v158 = vld [vmem:[%s11 + $0x1c] sm:$0xf]
    %v159 = vld [vmem:[%s11 + $0x20] sm:$0xf]
    %v160 = vld [vmem:[%s11 + $0x24] sm:$0xf]
    %v161 = vld [vmem:[%s11 + $0x28] sm:$0xf]
    %v162 = vld [vmem:[%s11 + $0x2c] sm:$0xf]
    %v163 = vld [vmem:[%s11 + $0x30] sm:$0xf]
    %v164 = vld [vmem:[%s11 + $0x34] sm:$0xf]
    %v165 = vld [vmem:[%s11 + $0x38] sm:$0xf]
    %v166 = vld [vmem:[%s11 + $0x3c] sm:$0xf]
    %v167 = vld [vmem:[%s11 + $0x40] sm:$0xf]
    %v168 = vld [vmem:[%s11 + $0x44] sm:$0xf]
    %v169 = vld [vmem:[%s11 + $0x48] sm:$0xf]
    %v170 = vld [vmem:[%s11 + $0x4c] sm:$0xf]
    %v171 = vld [vmem:[%s11 + $0x50] sm:$0xf]
    %v172 = vld [vmem:[%s11 + $0x54] sm:$0xf]
    %v173 = vld [vmem:[%s11 + $0x58] sm:$0xf]
    %v174 = vld [vmem:[%s11 + $0x5c] sm:$0xf]
    %v175 = vld [vmem:[%s11 + $0x60] sm:$0xf]
    %v176 = vld [vmem:[%s11 + $0x64] sm:$0xf]
    %v177 = vld [vmem:[%s11 + $0x68] sm:$0xf]
    %v178 = vld [vmem:[%s11 + $0x6c] sm:$0xf]
    %v179 = vld [vmem:[%s11 + $0x70] sm:$0xf]
    %v180 = vld [vmem:[%s11 + $0x74] sm:$0xf]
    %v181 = vld [vmem:[%s11 + $0x78] sm:$0xf]
    %v182 = vld [vmem:[%s11 + $0x7c] sm:$0xf]
    %v183 = vld [vmem:[%s14] sm:$0xff]
    %v184 = vld [vmem:[%s14 + $0x8] sm:$0xff]
    %v185 = vld [vmem:[%s14 + $0x10] sm:$0xff]
    %v186 = vld [vmem:[%s14 + $0x18] sm:$0xff]
    %v187 = vld [vmem:[%s14 + $0x20] sm:$0xff]
    %v188 = vld [vmem:[%s14 + $0x28] sm:$0xff]
    %v189 = vld [vmem:[%s14 + $0x30] sm:$0xff]
    %v190 = vld [vmem:[%s14 + $0x38] sm:$0xff]
    %v191 = vld [vmem:[%s14 + $0x40] sm:$0xff]
    %v192 = vld [vmem:[%s14 + $0x48] sm:$0xff]
    %v193 = vld [vmem:[%s14 + $0x50] sm:$0xff]
    %v194 = vld [vmem:[%s14 + $0x58] sm:$0xff]
    %v195 = vld [vmem:[%s14 + $0x60] sm:$0xff]
    %v196 = vld [vmem:[%s14 + $0x68] sm:$0xff]
    %v197 = vld [vmem:[%s14 + $0x70] sm:$0xff]
    %v198 = vld [vmem:[%s14 + $0x78] sm:$0xff]
    %v199 = vld [vmem:[%s15] sm:$0x3]
    %v200 = vld [vmem:[%s16] sm:$0xf]
    %v201 = vld [vmem:[%s16 + $0x4] sm:$0xf]
    %v202 = vld [vmem:[%s16 + $0x8] sm:$0xf]
    %v203 = vld [vmem:[%s16 + $0xc] sm:$0xf]
    %v204 = vld [vmem:[%s16 + $0x10] sm:$0xf]
    %v205 = vld [vmem:[%s16 + $0x14] sm:$0xf]
    %v206 = vld [vmem:[%s16 + $0x18] sm:$0xf]
    %v207 = vld [vmem:[%s16 + $0x1c] sm:$0xf]
    %v208 = vld [vmem:[%s16 + $0x20] sm:$0xf]
    %v209 = vld [vmem:[%s16 + $0x24] sm:$0xf]
    %v210 = vld [vmem:[%s16 + $0x28] sm:$0xf]
    %v211 = vld [vmem:[%s16 + $0x2c] sm:$0xf]
    %v212 = vld [vmem:[%s16 + $0x30] sm:$0xf]
    %v213 = vld [vmem:[%s16 + $0x34] sm:$0xf]
    %v214 = vld [vmem:[%s16 + $0x38] sm:$0xf]
    %v215 = vld [vmem:[%s16 + $0x3c] sm:$0xf]
    %v216 = vld [vmem:[%s16 + $0x40] sm:$0xf]
    %v217 = vld [vmem:[%s16 + $0x44] sm:$0xf]
    %v218 = vld [vmem:[%s16 + $0x48] sm:$0xf]
    %v219 = vld [vmem:[%s16 + $0x4c] sm:$0xf]
    %v220 = vld [vmem:[%s16 + $0x50] sm:$0xf]
    %v221 = vld [vmem:[%s16 + $0x54] sm:$0xf]
    %v222 = vld [vmem:[%s16 + $0x58] sm:$0xf]
    %v223 = vld [vmem:[%s16 + $0x5c] sm:$0xf]
    %v224 = vld [vmem:[%s16 + $0x60] sm:$0xf]
    %v225 = vld [vmem:[%s16 + $0x64] sm:$0xf]
    %v226 = vld [vmem:[%s16 + $0x68] sm:$0xf]
    %v227 = vld [vmem:[%s16 + $0x6c] sm:$0xf]
    %v228 = vld [vmem:[%s16 + $0x70] sm:$0xf]
    %v229 = vld [vmem:[%s16 + $0x74] sm:$0xf]
    %v230 = vld [vmem:[%s16 + $0x78] sm:$0xf]
    %v231 = vld [vmem:[%s16 + $0x7c] sm:$0xf]
    %v232 = vld [vmem:[%s17] sm:$0x1]
    %v233 = vld [vmem:[%s12] sm:$0x1]
    %v234 = vld [vmem:[%s13] sm:$0x1]
    %v235 = vpack.c.bf16 %v62, %v61
    %v284 = vunpack.c.l.b16 %v103
    %v285 = vunpack.c.h.b16 %v103
    %v286 = vunpack.c.l.b16 %v104
    %v287 = vunpack.c.h.b16 %v104
    %v288 = vunpack.c.l.b16 %v105
    %v289 = vunpack.c.h.b16 %v105
    %v290 = vunpack.c.l.b16 %v106
    %v291 = vunpack.c.h.b16 %v106
    %v292 = vunpack.c.l.b16 %v107
    %v293 = vunpack.c.h.b16 %v107
    %v294 = vunpack.c.l.b16 %v108
    %v295 = vunpack.c.h.b16 %v108
    %v296 = vunpack.c.l.b16 %v109
    %v297 = vunpack.c.h.b16 %v109
    %v298 = vunpack.c.l.b16 %v110
    %v299 = vunpack.c.h.b16 %v110
    %v300 = vunpack.c.l.b16 %v111
    %v301 = vunpack.c.h.b16 %v111
    %v302 = vunpack.c.l.b16 %v112
    %v303 = vunpack.c.h.b16 %v112
    %v304 = vunpack.c.l.b16 %v113
    %v305 = vunpack.c.h.b16 %v113
    %v306 = vunpack.c.l.b16 %v114
    %v307 = vunpack.c.h.b16 %v114
    %v308 = vunpack.c.l.b16 %v115
    %v309 = vunpack.c.h.b16 %v115
    %v310 = vunpack.c.l.b16 %v116
    %v311 = vunpack.c.h.b16 %v116
    %v312 = vunpack.c.l.b16 %v117
    %v313 = vunpack.c.h.b16 %v117
    %v314 = vunpack.c.l.b16 %v118
    %v315 = vunpack.c.h.b16 %v118
    %v316 = vunpack.c.l.b16 %v119
    %v317 = vunpack.c.h.b16 %v119
    %v318 = vunpack.c.l.b16 %v120
    %v319 = vunpack.c.h.b16 %v120
    %v320 = vunpack.c.l.b16 %v121
    %v321 = vunpack.c.h.b16 %v121
    %v322 = vunpack.c.l.b16 %v122
    %v323 = vunpack.c.h.b16 %v122
    %v324 = vunpack.c.l.b16 %v123
    %v325 = vunpack.c.h.b16 %v123
    %v326 = vunpack.c.l.b16 %v124
    %v327 = vunpack.c.h.b16 %v124
    %v328 = vunpack.c.l.b16 %v125
    %v329 = vunpack.c.h.b16 %v125
    %v330 = vunpack.c.l.b16 %v126
    %v331 = vunpack.c.h.b16 %v126
    %v332 = vunpack.c.l.b16 %v127
    %v333 = vunpack.c.h.b16 %v127
    %v334 = vunpack.c.l.b16 %v128
    %v335 = vunpack.c.h.b16 %v128
    %v336 = vunpack.c.l.b16 %v129
    %v337 = vunpack.c.h.b16 %v129
    %v338 = vunpack.c.l.b16 %v130
    %v339 = vunpack.c.h.b16 %v130
    %v340 = vunpack.c.l.b16 %v131
    %v341 = vunpack.c.h.b16 %v131
    %v342 = vunpack.c.l.b16 %v132
    %v343 = vunpack.c.h.b16 %v132
    %v344 = vunpack.c.l.b16 %v133
    %v345 = vunpack.c.h.b16 %v133
    %v346 = vunpack.c.l.b16 %v134
    %v347 = vunpack.c.h.b16 %v134
    %v348 = vunpack.c.l.b16 %v135
    %v349 = vunpack.c.h.b16 %v135
    %v350 = vunpack.c.l.b16 %v136
    %v351 = vunpack.c.h.b16 %v136
    %v352 = vunpack.c.l.b16 %v137
    %v353 = vunpack.c.h.b16 %v137
    %v354 = vunpack.c.l.b16 %v138
    %v355 = vunpack.c.h.b16 %v138
    %v356 = vunpack.c.l.b16 %v139
    %v357 = vunpack.c.h.b16 %v139
    %v358 = vunpack.c.l.b16 %v140
    %v359 = vunpack.c.h.b16 %v140
    %v360 = vunpack.c.l.b16 %v141
    %v361 = vunpack.c.h.b16 %v141
    %v362 = vunpack.c.l.b16 %v142
    %v363 = vunpack.c.h.b16 %v142
    %v364 = vunpack.c.l.b16 %v143
    %v365 = vunpack.c.h.b16 %v143
    %v366 = vunpack.c.l.b16 %v144
    %v367 = vunpack.c.h.b16 %v144
    %v368 = vunpack.c.l.b16 %v145
    %v369 = vunpack.c.h.b16 %v145
    %v370 = vunpack.c.l.b16 %v146
    %v371 = vunpack.c.h.b16 %v146
    %v372 = vunpack.c.l.b16 %v147
    %v373 = vunpack.c.h.b16 %v147
    %v374 = vunpack.c.l.b16 %v148
    %v375 = vunpack.c.h.b16 %v148
    %v376 = vunpack.c.l.b16 %v149
    %v377 = vunpack.c.h.b16 %v149
    %v378 = vunpack.c.l.b16 %v150
    %v379 = vunpack.c.h.b16 %v150
    %v380 = vpack.c.b16 %v290, %v284
    %v381 = vpack.c.b16 %v291, %v285
    %v382 = vpack.c.b16 %v292, %v286
    %v383 = vpack.c.b16 %v293, %v287
    %v384 = vpack.c.b16 %v294, %v288
    %v385 = vpack.c.b16 %v295, %v289
    %v386 = vpack.c.b16 %v302, %v296
    %v387 = vpack.c.b16 %v303, %v297
    %v388 = vpack.c.b16 %v304, %v298
    %v389 = vpack.c.b16 %v305, %v299
    %v390 = vpack.c.b16 %v306, %v300
    %v391 = vpack.c.b16 %v307, %v301
    %v392 = vpack.c.b16 %v314, %v308
    %v393 = vpack.c.b16 %v315, %v309
    %v394 = vpack.c.b16 %v316, %v310
    %v395 = vpack.c.b16 %v317, %v311
    %v396 = vpack.c.b16 %v318, %v312
    %v397 = vpack.c.b16 %v319, %v313
    %v398 = vpack.c.b16 %v326, %v320
    %v399 = vpack.c.b16 %v327, %v321
    %v400 = vpack.c.b16 %v328, %v322
    %v401 = vpack.c.b16 %v329, %v323
    %v402 = vpack.c.b16 %v330, %v324
    %v403 = vpack.c.b16 %v331, %v325
    %v404 = vpack.c.b16 %v338, %v332
    %v405 = vpack.c.b16 %v339, %v333
    %v406 = vpack.c.b16 %v340, %v334
    %v407 = vpack.c.b16 %v341, %v335
    %v408 = vpack.c.b16 %v342, %v336
    %v409 = vpack.c.b16 %v343, %v337
    %v410 = vpack.c.b16 %v350, %v344
    %v411 = vpack.c.b16 %v351, %v345
    %v412 = vpack.c.b16 %v352, %v346
    %v413 = vpack.c.b16 %v353, %v347
    %v414 = vpack.c.b16 %v354, %v348
    %v415 = vpack.c.b16 %v355, %v349
    %v416 = vpack.c.b16 %v362, %v356
    %v417 = vpack.c.b16 %v363, %v357
    %v418 = vpack.c.b16 %v364, %v358
    %v419 = vpack.c.b16 %v365, %v359
    %v420 = vpack.c.b16 %v366, %v360
    %v421 = vpack.c.b16 %v367, %v361
    %v422 = vpack.c.b16 %v374, %v368
    %v423 = vpack.c.b16 %v375, %v369
    %v424 = vpack.c.b16 %v376, %v370
    %v425 = vpack.c.b16 %v377, %v371
    %v426 = vpack.c.b16 %v378, %v372
    %v427 = vpack.c.b16 %v379, %v373
    %476 = vmatprep.subr.bf16.mxu0 %v381
    %477 = vmatpush1.bf16.msra.mxu0 %v380
    %478 = vmatprep.subr.bf16.mxu0 %v387
    %479 = vmatpush1.bf16.msra.mxu0 %v386
    %480 = vmatprep.subr.bf16.mxu0 %v393
    %481 = vmatpush1.bf16.msra.mxu0 %v392
    %482 = vmatprep.subr.bf16.mxu0 %v399
    %483 = vmatpush1.bf16.msra.mxu0 %v398
    %484 = vmatprep.subr.bf16.mxu0 %v405
    %485 = vmatpush1.bf16.msra.mxu0 %v404
    %486 = vmatprep.subr.bf16.mxu0 %v411
    %487 = vmatpush1.bf16.msra.mxu0 %v410
    %488 = vmatprep.subr.bf16.mxu0 %v417
    %489 = vmatpush1.bf16.msra.mxu0 %v416
    %490 = vmatprep.subr.bf16.mxu0 %v423
    %491 = vmatpush1.bf16.msra.mxu0 %v422
    %492 = vmatprep.subr.bf16.mxu0 0
    %493 = vmatpush1.bf16.msra.mxu0 0
    %494 = vmatprep.subr.bf16.mxu0 0
    %495 = vmatpush1.bf16.msra.mxu0 0
    %496 = vmatprep.subr.bf16.mxu0 0
    %497 = vmatpush1.bf16.msra.mxu0 0
    %498 = vmatprep.subr.bf16.mxu0 0
    %499 = vmatpush1.bf16.msra.mxu0 0
    %500 = vmatprep.subr.bf16.mxu0 0
    %501 = vmatpush1.bf16.msra.mxu0 0
    %502 = vmatprep.subr.bf16.mxu0 0
    %503 = vmatpush1.bf16.msra.mxu0 0
    %504 = vmatprep.subr.bf16.mxu0 0
    %505 = vmatpush1.bf16.msra.mxu0 0
    %506 = vmatprep.subr.bf16.mxu0 0
    %507 = vmatpush1.bf16.msra.mxu0 0
    %508 = vmatprep.mubr.bf16.mxu0 0
    %509 = vmatmul.mubr.bf16.gmra.mrb[0].mxu0 %v235
    %v510 = vpop.f32.mrb[0].mxu0
    %v511 = vadd.f32 0.0, %v510
    %v512 = vpop.f32.mrb[0].mxu0
    %v513 = vadd.f32 0.0, %v512
    %v514 = vpop.f32.mrb[0].mxu0
    %v515 = vadd.f32 0.0, %v514
    %v516 = vpop.f32.mrb[0].mxu0
    %v517 = vadd.f32 0.0, %v516
    %518 = vdwg.mxu0
    %519 = vmatprep.subr.bf16.mxu0 %v383
    %520 = vmatpush1.bf16.msra.mxu0 %v382
    %521 = vmatprep.subr.bf16.mxu0 %v389
    %522 = vmatpush1.bf16.msra.mxu0 %v388
    %523 = vmatprep.subr.bf16.mxu0 %v395
    %524 = vmatpush1.bf16.msra.mxu0 %v394
    %525 = vmatprep.subr.bf16.mxu0 %v401
    %526 = vmatpush1.bf16.msra.mxu0 %v400
    %527 = vmatprep.subr.bf16.mxu0 %v407
    %528 = vmatpush1.bf16.msra.mxu0 %v406
    %529 = vmatprep.subr.bf16.mxu0 %v413
    %530 = vmatpush1.bf16.msra.mxu0 %v412
    %531 = vmatprep.subr.bf16.mxu0 %v419
    %532 = vmatpush1.bf16.msra.mxu0 %v418
    %533 = vmatprep.subr.bf16.mxu0 %v425
    %534 = vmatpush1.bf16.msra.mxu0 %v424
    %535 = vmatprep.subr.bf16.mxu0 0
    %536 = vmatpush1.bf16.msra.mxu0 0
    %537 = vmatprep.subr.bf16.mxu0 0
    %538 = vmatpush1.bf16.msra.mxu0 0
    %539 = vmatprep.subr.bf16.mxu0 0
    %540 = vmatpush1.bf16.msra.mxu0 0
    %541 = vmatprep.subr.bf16.mxu0 0
    %542 = vmatpush1.bf16.msra.mxu0 0
    %543 = vmatprep.subr.bf16.mxu0 0
    %544 = vmatpush1.bf16.msra.mxu0 0
    %545 = vmatprep.subr.bf16.mxu0 0
    %546 = vmatpush1.bf16.msra.mxu0 0
    %547 = vmatprep.subr.bf16.mxu0 0
    %548 = vmatpush1.bf16.msra.mxu0 0
    %549 = vmatprep.subr.bf16.mxu0 0
    %550 = vmatpush1.bf16.msra.mxu0 0
    %551 = vmatprep.mubr.bf16.mxu0 0
    %552 = vmatmul.mubr.bf16.gmra.mrb[0].mxu0 %v235
    %v553 = vpop.f32.mrb[0].mxu0
    %v554 = vadd.f32 0.0, %v553
    %v555 = vpop.f32.mrb[0].mxu0
    %v556 = vadd.f32 0.0, %v555
    %v557 = vpop.f32.mrb[0].mxu0
    %v558 = vadd.f32 0.0, %v557
    %v559 = vpop.f32.mrb[0].mxu0
    %v560 = vadd.f32 0.0, %v559
    %561 = vdwg.mxu0
    %562 = vmatprep.subr.bf16.mxu0 %v385
    %563 = vmatpush1.bf16.msra.mxu0 %v384
    %564 = vmatprep.subr.bf16.mxu0 %v391
    %565 = vmatpush1.bf16.msra.mxu0 %v390
    %566 = vmatprep.subr.bf16.mxu0 %v397
    %567 = vmatpush1.bf16.msra.mxu0 %v396
    %568 = vmatprep.subr.bf16.mxu0 %v403
    %569 = vmatpush1.bf16.msra.mxu0 %v402
    %570 = vmatprep.subr.bf16.mxu0 %v409
    %571 = vmatpush1.bf16.msra.mxu0 %v408
    %572 = vmatprep.subr.bf16.mxu0 %v415
    %573 = vmatpush1.bf16.msra.mxu0 %v414
    %574 = vmatprep.subr.bf16.mxu0 %v421
    %575 = vmatpush1.bf16.msra.mxu0 %v420
    %576 = vmatprep.subr.bf16.mxu0 %v427
    %577 = vmatpush1.bf16.msra.mxu0 %v426
    %578 = vmatprep.subr.bf16.mxu0 0
    %579 = vmatpush1.bf16.msra.mxu0 0
    %580 = vmatprep.subr.bf16.mxu0 0
    %581 = vmatpush1.bf16.msra.mxu0 0
    %582 = vmatprep.subr.bf16.mxu0 0
    %583 = vmatpush1.bf16.msra.mxu0 0
    %584 = vmatprep.subr.bf16.mxu0 0
    %585 = vmatpush1.bf16.msra.mxu0 0
    %586 = vmatprep.subr.bf16.mxu0 0
    %587 = vmatpush1.bf16.msra.mxu0 0
    %588 = vmatprep.subr.bf16.mxu0 0
    %589 = vmatpush1.bf16.msra.mxu0 0
    %590 = vmatprep.subr.bf16.mxu0 0
    %591 = vmatpush1.bf16.msra.mxu0 0
    %592 = vmatprep.subr.bf16.mxu0 0
    %593 = vmatpush1.bf16.msra.mxu0 0
    %594 = vmatprep.mubr.bf16.mxu0 0
    %595 = vmatmul.mubr.bf16.gmra.mrb[0].mxu0 %v235
    %v596 = vpop.f32.mrb[0].mxu0
    %v597 = vadd.f32 0.0, %v596
    %v598 = vpop.f32.mrb[0].mxu0
    %v599 = vadd.f32 0.0, %v598
    %v600 = vpop.f32.mrb[0].mxu0
    %v601 = vadd.f32 0.0, %v600
    %v602 = vpop.f32.mrb[0].mxu0
    %v603 = vadd.f32 0.0, %v602
    %604 = vdwg.mxu0
    %v605 = vmul.f32 %v511, %v75
    %v606 = vmul.f32 %v513, %v76
    %v607 = vmul.f32 %v554, %v77
    %v608 = vmul.f32 %v556, %v78
    %v609 = vmul.f32 %v515, %v79
    %v610 = vmul.f32 %v517, %v80
    %v611 = vmul.f32 %v558, %v81
    %v612 = vmul.f32 %v560, %v82
    %613 = vrot.lane.b32.xlu0 %v511, 127
    %v614 = vpop.permute.xlu0 %613
    %615 = vrot.lane.b32.xlu0 %v515, 127
    %v616 = vpop.permute.xlu0 %615
    %617 = vrot.lane.b32.xlu0 %v513, 127
    %v618 = vpop.permute.xlu0 %617
    %619 = vrot.lane.b32.xlu0 %v517, 127
    %v620 = vpop.permute.xlu0 %619
    %621 = vrot.lane.b32.xlu0 %v554, 127
    %v622 = vpop.permute.xlu0 %621
    %623 = vrot.lane.b32.xlu0 %v558, 127
    %v624 = vpop.permute.xlu0 %623
    %625 = vrot.lane.b32.xlu0 %v556, 127
    %v626 = vpop.permute.xlu0 %625
    %627 = vrot.lane.b32.xlu0 %v560, 127
    %v628 = vpop.permute.xlu0 %627
    %v629 = vlaneseq
    %v630 = vand.u32 %v629, 127
    %vm631 = vcmp.lt.s32.totalorder %v630, 127
    %v632 = vsel %vm631, %v622, %v626
    %v633 = vsel %vm631, %v624, %v628
    %v634 = vsel %vm631, %v618, %v622
    %v635 = vsel %vm631, %v620, %v624
    %v636 = vsel %vm631, %v614, %v618
    %v637 = vsel %vm631, %v616, %v620
    %v638 = vsel %vm631, %v626, %v614
    %v639 = vsel %vm631, %v628, %v616
    %v640 = vmul.f32 %v636, %v83
    %v641 = vmul.f32 %v634, %v84
    %v642 = vmul.f32 %v632, %v85
    %v643 = vmul.f32 %v638, %v86
    %v644 = vmul.f32 %v637, %v87
    %v645 = vmul.f32 %v635, %v88
    %v646 = vmul.f32 %v633, %v89
    %v647 = vmul.f32 %v639, %v90
    %v648 = vadd.f32 %v605, %v640
    %v649 = vadd.f32 %v606, %v641
    %v650 = vadd.f32 %v607, %v642
    %v651 = vadd.f32 %v608, %v643
    %v652 = vadd.f32 %v609, %v644
    %v653 = vadd.f32 %v610, %v645
    %v654 = vadd.f32 %v611, %v646
    %v655 = vadd.f32 %v612, %v647
    %656 = vrot.lane.b32.xlu0 %v511, 1
    %v657 = vpop.permute.xlu0 %656
    %658 = vrot.lane.b32.xlu0 %v515, 1
    %v659 = vpop.permute.xlu0 %658
    %660 = vrot.lane.b32.xlu0 %v513, 1
    %v661 = vpop.permute.xlu0 %660
    %662 = vrot.lane.b32.xlu0 %v517, 1
    %v663 = vpop.permute.xlu0 %662
    %664 = vrot.lane.b32.xlu0 %v554, 1
    %v665 = vpop.permute.xlu0 %664
    %666 = vrot.lane.b32.xlu0 %v558, 1
    %v667 = vpop.permute.xlu0 %666
    %668 = vrot.lane.b32.xlu0 %v556, 1
    %v669 = vpop.permute.xlu0 %668
    %670 = vrot.lane.b32.xlu0 %v560, 1
    %v671 = vpop.permute.xlu0 %670
    %vm672 = vcmp.lt.s32.totalorder %v630, 1
    %v673 = vsel %vm672, %v665, %v669
    %v674 = vsel %vm672, %v667, %v671
    %v675 = vsel %vm672, %v661, %v665
    %v676 = vsel %vm672, %v663, %v667
    %v677 = vsel %vm672, %v657, %v661
    %v678 = vsel %vm672, %v659, %v663
    %v679 = vsel %vm672, %v669, %v657
    %v680 = vsel %vm672, %v671, %v659
    %v681 = vmul.f32 %v679, %v91
    %v682 = vmul.f32 %v677, %v92
    %v683 = vmul.f32 %v675, %v93
    %v684 = vmul.f32 %v673, %v94
    %v685 = vmul.f32 %v680, %v95
    %v686 = vmul.f32 %v678, %v96
    %v687 = vmul.f32 %v676, %v97
    %v688 = vmul.f32 %v674, %v98
    %v689 = vadd.f32 %v648, %v681
    %v690 = vadd.f32 %v649, %v682
    %v691 = vadd.f32 %v650, %v683
    %v692 = vadd.f32 %v651, %v684
    %v693 = vadd.f32 %v652, %v685
    %v694 = vadd.f32 %v653, %v686
    %v695 = vadd.f32 %v654, %v687
    %v696 = vadd.f32 %v655, %v688
    %v697 = vpack.c.bf16 %v690, %v689
    %v698 = vpack.c.bf16 %v694, %v693
    %v699 = vpack.c.bf16 %v692, %v691
    %v700 = vpack.c.bf16 %v696, %v695
    %v701 = vpack.c.bf16 %v599, %v597
    %v702 = vpack.c.bf16 %v603, %v601
    %703 = vmatprep.subr.bf16.mxu0 0
    %704 = vmatpush1.bf16.xpose.msra.mxu0 %v699
    %705 = vmatprep.subr.bf16.mxu0 0
    %706 = vmatpush1.bf16.xpose.msra.mxu0 %v700
    %707 = vmatprep.subr.bf16.mxu0 0
    %708 = vmatpush1.bf16.xpose.msra.mxu0 0
    %709 = vmatprep.subr.bf16.mxu0 0
    %710 = vmatpush1.bf16.xpose.msra.mxu0 0
    %711 = vmatprep.subr.bf16.mxu0 0
    %712 = vmatpush1.bf16.xpose.msra.mxu0 0
    %713 = vmatprep.subr.bf16.mxu0 0
    %714 = vmatpush1.bf16.xpose.msra.mxu0 0
    %715 = vmatprep.subr.bf16.mxu0 0
    %716 = vmatpush1.bf16.xpose.msra.mxu0 0
    %717 = vmatprep.subr.bf16.mxu0 0
    %718 = vmatpush1.bf16.xpose.msra.mxu0 0
    %719 = vmatprep.subr.bf16.mxu0 0
    %720 = vmatpush1.bf16.xpose.msra.mxu0 0
    %721 = vmatprep.subr.bf16.mxu0 0
    %722 = vmatpush1.bf16.xpose.msra.mxu0 0
    %723 = vmatprep.subr.bf16.mxu0 0
    %724 = vmatpush1.bf16.xpose.msra.mxu0 0
    %725 = vmatprep.subr.bf16.mxu0 0
    %726 = vmatpush1.bf16.xpose.msra.mxu0 0
    %727 = vmatprep.subr.bf16.mxu0 0
    %728 = vmatpush1.bf16.xpose.msra.mxu0 0
    %729 = vmatprep.subr.bf16.mxu0 0
    %730 = vmatpush1.bf16.xpose.msra.mxu0 0
    %731 = vmatprep.subr.bf16.mxu0 0
    %732 = vmatpush1.bf16.xpose.msra.mxu0 0
    %733 = vmatprep.subr.bf16.mxu0 0
    %734 = vmatpush1.bf16.xpose.msra.mxu0 0
    %735 = vmatprep.mubr.bf16.mxu0 0
    %736 = vmatmul.mubr.bf16.gmra.mrb[0].mxu0 %v697
    %v737 = vpop.f32.mrb[0].mxu0
    %v738 = vadd.f32 0.0, %v737
    %v739 = vpop.f32.mrb[0].mxu0
    %v740 = vpop.f32.mrb[0].mxu0
    %v741 = vadd.f32 0.0, %v740
    %v742 = vpop.f32.mrb[0].mxu0
    %743 = vmatprep.mubr.bf16.mxu0 0
    %744 = vmatmul.mubr.bf16.gmra.mrb[0].mxu0 %v698
    %v745 = vpop.f32.mrb[0].mxu0
    %v746 = vadd.f32 0.0, %v745
    %v747 = vpop.f32.mrb[0].mxu0
    %v748 = vpop.f32.mrb[0].mxu0
    %v749 = vadd.f32 0.0, %v748
    %v750 = vpop.f32.mrb[0].mxu0
    %751 = vdwg.mxu0
    %v752 = vmul.f32 %v738, 0.088388346
    %v753 = vmul.f32 %v741, 0.088388346
    %v754 = vmul.f32 %v746, 0.088388346
    %v755 = vmul.f32 %v749, 0.088388346
    %v756 = vsel %vm67, %v752, %v71
    %v757 = vsel %vm68, %v753, %v72
    %v758 = vsel %vm69, %v754, %v73
    %v759 = vsel %vm70, %v755, %v74
    %vm760 = vcmask 261120
    %v761 = vsel %vm760, %v756, -inf
    %762 = vmax.xlane.f32.xlu0 %v761
    %v763 = vpop.xlane.xlu0 %762
    %v764 = vsel %vm760, %v757, -inf
    %765 = vmax.xlane.f32.xlu0 %v764
    %v766 = vpop.xlane.xlu0 %765
    %v767 = vsel %vm760, %v758, -inf
    %768 = vmax.xlane.f32.xlu0 %v767
    %v769 = vpop.xlane.xlu0 %768
    %v770 = vsel %vm760, %v759, -inf
    %771 = vmax.xlane.f32.xlu0 %v770
    %v772 = vpop.xlane.xlu0 %771
    %v773 = vsub.f32 %v756, %v763
    %v774 = vsub.f32 %v757, %v766
    %v775 = vsub.f32 %v758, %v769
    %v776 = vsub.f32 %v759, %v772
    %v777 = vmul.f32 %v773, 1.442695
    %v778 = vpow.pop %v777
    %v779 = vmul.f32 %v774, 1.442695
    %v780 = vpow.pop %v779
    %v781 = vmul.f32 %v775, 1.442695
    %v782 = vpow.pop %v781
    %v783 = vmul.f32 %v776, 1.442695
    %v784 = vpow.pop %v783
    %v785 = vsel %vm760, %v778, 0.0
    %786 = vadd.xlane.f32.xlu0 %v785
    %v787 = vpop.xlane.xlu0 %786
    %v788 = vsel %vm760, %v780, 0.0
    %789 = vadd.xlane.f32.xlu0 %v788
    %v790 = vpop.xlane.xlu0 %789
    %v791 = vsel %vm760, %v782, 0.0
    %792 = vadd.xlane.f32.xlu0 %v791
    %v793 = vpop.xlane.xlu0 %792
    %v794 = vsel %vm760, %v784, 0.0
    %795 = vadd.xlane.f32.xlu0 %v794
    %v796 = vpop.xlane.xlu0 %795
    %v797 = vrcp.pop %v787
    %v798 = vrcp.pop %v790
    %v799 = vrcp.pop %v793
    %v800 = vrcp.pop %v796
    %v801 = vmul.f32 %v778, %v797
    %v802 = vmul.f32 %v780, %v798
    %v803 = vmul.f32 %v782, %v799
    %v804 = vmul.f32 %v784, %v800
    %v805 = vpack.c.bf16 %v802, %v801
    %v806 = vpack.c.bf16 %v804, %v803
    %v808 = vsel %vm760, %v805, 0
    %v811 = vsel %vm760, %v806, 0
    %813 = vmatprep.subr.bf16.mxu0 0
    %814 = vmatpush1.bf16.msra.mxu0 %v701
    %815 = vmatprep.subr.bf16.mxu0 0
    %816 = vmatpush1.bf16.msra.mxu0 %v702
    %817 = vmatprep.subr.bf16.mxu0 0
    %818 = vmatpush1.bf16.msra.mxu0 0
    %819 = vmatprep.subr.bf16.mxu0 0
    %820 = vmatpush1.bf16.msra.mxu0 0
    %821 = vmatprep.subr.bf16.mxu0 0
    %822 = vmatpush1.bf16.msra.mxu0 0
    %823 = vmatprep.subr.bf16.mxu0 0
    %824 = vmatpush1.bf16.msra.mxu0 0
    %825 = vmatprep.subr.bf16.mxu0 0
    %826 = vmatpush1.bf16.msra.mxu0 0
    %827 = vmatprep.subr.bf16.mxu0 0
    %828 = vmatpush1.bf16.msra.mxu0 0
    %829 = vmatprep.subr.bf16.mxu0 0
    %830 = vmatpush1.bf16.msra.mxu0 0
    %831 = vmatprep.subr.bf16.mxu0 0
    %832 = vmatpush1.bf16.msra.mxu0 0
    %833 = vmatprep.subr.bf16.mxu0 0
    %834 = vmatpush1.bf16.msra.mxu0 0
    %835 = vmatprep.subr.bf16.mxu0 0
    %836 = vmatpush1.bf16.msra.mxu0 0
    %837 = vmatprep.subr.bf16.mxu0 0
    %838 = vmatpush1.bf16.msra.mxu0 0
    %839 = vmatprep.subr.bf16.mxu0 0
    %840 = vmatpush1.bf16.msra.mxu0 0
    %841 = vmatprep.subr.bf16.mxu0 0
    %842 = vmatpush1.bf16.msra.mxu0 0
    %843 = vmatprep.subr.bf16.mxu0 0
    %844 = vmatpush1.bf16.msra.mxu0 0
    %845 = vmatprep.mubr.bf16.mxu0 0
    %846 = vmatmul.mubr.bf16.gmra.mrb[0].mxu0 %v808
    %v847 = vpop.f32.mrb[0].mxu0
    %v848 = vadd.f32 0.0, %v847
    %v849 = vpop.f32.mrb[0].mxu0
    %v850 = vpop.f32.mrb[0].mxu0
    %v851 = vadd.f32 0.0, %v850
    %v852 = vpop.f32.mrb[0].mxu0
    %853 = vmatprep.mubr.bf16.mxu0 0
    %854 = vmatmul.mubr.bf16.gmra.mrb[0].mxu0 %v811
    %v855 = vpop.f32.mrb[0].mxu0
    %v856 = vadd.f32 0.0, %v855
    %v857 = vpop.f32.mrb[0].mxu0
    %v858 = vpop.f32.mrb[0].mxu0
    %v859 = vadd.f32 0.0, %v858
    %v860 = vpop.f32.mrb[0].mxu0
    %861 = vdwg.mxu0
    %v862 = vpack.c.bf16 %v856, %v848
    %v863 = vpack.c.bf16 %v859, %v851
    %v896 = vunpack.c.l.b16 %v151
    %v897 = vunpack.c.l.b16 %v152
    %v898 = vunpack.c.l.b16 %v153
    %v899 = vunpack.c.l.b16 %v154
    %v900 = vunpack.c.l.b16 %v155
    %v901 = vunpack.c.l.b16 %v156
    %v902 = vunpack.c.l.b16 %v157
    %v903 = vunpack.c.l.b16 %v158
    %v904 = vunpack.c.l.b16 %v159
    %v905 = vunpack.c.l.b16 %v160
    %v906 = vunpack.c.l.b16 %v161
    %v907 = vunpack.c.l.b16 %v162
    %v908 = vunpack.c.l.b16 %v163
    %v909 = vunpack.c.l.b16 %v164
    %v910 = vunpack.c.l.b16 %v165
    %v911 = vunpack.c.l.b16 %v166
    %v912 = vunpack.c.l.b16 %v167
    %v913 = vunpack.c.l.b16 %v168
    %v914 = vunpack.c.l.b16 %v169
    %v915 = vunpack.c.l.b16 %v170
    %v916 = vunpack.c.l.b16 %v171
    %v917 = vunpack.c.l.b16 %v172
    %v918 = vunpack.c.l.b16 %v173
    %v919 = vunpack.c.l.b16 %v174
    %v920 = vunpack.c.l.b16 %v175
    %v921 = vunpack.c.l.b16 %v176
    %v922 = vunpack.c.l.b16 %v177
    %v923 = vunpack.c.l.b16 %v178
    %v924 = vunpack.c.l.b16 %v179
    %v925 = vunpack.c.l.b16 %v180
    %v926 = vunpack.c.l.b16 %v181
    %v927 = vunpack.c.l.b16 %v182
    %v928 = vpack.c.b16 %v897, %v896
    %v929 = vpack.c.b16 %v899, %v898
    %v930 = vpack.c.b16 %v901, %v900
    %v931 = vpack.c.b16 %v903, %v902
    %v932 = vpack.c.b16 %v905, %v904
    %v933 = vpack.c.b16 %v907, %v906
    %v934 = vpack.c.b16 %v909, %v908
    %v935 = vpack.c.b16 %v911, %v910
    %v936 = vpack.c.b16 %v913, %v912
    %v937 = vpack.c.b16 %v915, %v914
    %v938 = vpack.c.b16 %v917, %v916
    %v939 = vpack.c.b16 %v919, %v918
    %v940 = vpack.c.b16 %v921, %v920
    %v941 = vpack.c.b16 %v923, %v922
    %v942 = vpack.c.b16 %v925, %v924
    %v943 = vpack.c.b16 %v927, %v926
    %960 = vmatprep.subr.bf16.mxu0 0
    %961 = vmatpush1.bf16.msra.mxu0 %v928
    %962 = vmatprep.subr.bf16.mxu0 0
    %963 = vmatpush1.bf16.msra.mxu0 %v929
    %964 = vmatprep.subr.bf16.mxu0 0
    %965 = vmatpush1.bf16.msra.mxu0 %v930
    %966 = vmatprep.subr.bf16.mxu0 0
    %967 = vmatpush1.bf16.msra.mxu0 %v931
    %968 = vmatprep.subr.bf16.mxu0 0
    %969 = vmatpush1.bf16.msra.mxu0 %v932
    %970 = vmatprep.subr.bf16.mxu0 0
    %971 = vmatpush1.bf16.msra.mxu0 %v933
    %972 = vmatprep.subr.bf16.mxu0 0
    %973 = vmatpush1.bf16.msra.mxu0 %v934
    %974 = vmatprep.subr.bf16.mxu0 0
    %975 = vmatpush1.bf16.msra.mxu0 %v935
    %976 = vmatprep.subr.bf16.mxu0 0
    %977 = vmatpush1.bf16.msra.mxu0 %v936
    %978 = vmatprep.subr.bf16.mxu0 0
    %979 = vmatpush1.bf16.msra.mxu0 %v937
    %980 = vmatprep.subr.bf16.mxu0 0
    %981 = vmatpush1.bf16.msra.mxu0 %v938
    %982 = vmatprep.subr.bf16.mxu0 0
    %983 = vmatpush1.bf16.msra.mxu0 %v939
    %984 = vmatprep.subr.bf16.mxu0 0
    %985 = vmatpush1.bf16.msra.mxu0 %v940
    %986 = vmatprep.subr.bf16.mxu0 0
    %987 = vmatpush1.bf16.msra.mxu0 %v941
    %988 = vmatprep.subr.bf16.mxu0 0
    %989 = vmatpush1.bf16.msra.mxu0 %v942
    %990 = vmatprep.subr.bf16.mxu0 0
    %991 = vmatpush1.bf16.msra.mxu0 %v943
    %992 = vmatprep.mubr.bf16.mxu0 %v863
    %993 = vmatmul.mubr.bf16.gmra.mrb[0].mxu0 %v862
    %v994 = vpop.f32.mrb[0].mxu0
    %v995 = vadd.f32 %v61, %v994
    %v996 = vpop.f32.mrb[0].mxu0
    %v997 = vpop.f32.mrb[0].mxu0
    %v998 = vadd.f32 %v62, %v997
    %v999 = vpop.f32.mrb[0].mxu0
    %1000 = vdwg.mxu0
    %1001 = vadd.xlane.f32.xlu0 %v995
    %v1002 = vpop.xlane.xlu0 %1001
    %1003 = vadd.xlane.f32.xlu0 %v998
    %v1004 = vpop.xlane.xlu0 %1003
    %v1005 = vrcp.pop 128.0
    %v1006 = vmul.f32 %v1002, %v1005
    %v1007 = vmul.f32 %v1004, %v1005
    %v1008 = vsub.f32 %v995, %v1006
    %v1009 = vsub.f32 %v998, %v1007
    %v1010 = vmul.f32 %v1008, %v1008
    %v1011 = vmul.f32 %v1009, %v1009
    %1012 = vadd.xlane.f32.xlu0 %v1010
    %v1013 = vpop.xlane.xlu0 %1012
    %1014 = vadd.xlane.f32.xlu0 %v1011
    %v1015 = vpop.xlane.xlu0 %1014
    %v1016 = vmul.f32 %v1013, %v1005
    %v1017 = vmul.f32 %v1015, %v1005
    %v1018 = vadd.f32 %v1016, 1e-05
    %v1019 = vadd.f32 %v1017, 1e-05
    %v1020 = vrsqrt.pop %v1018
    %v1021 = vrsqrt.pop %v1019
    %v1022 = vmul.f32 %v1008, %v1020
    %v1023 = vmul.f32 %v1009, %v1021
    %v1025 = vlaneseq
    %v1026 = vshrl.u32 %v1025, 7
    %v1027 = vsub.s32 0, %v1026
    %v1028 = vrot.slane %v99, %v1027
    %v1030 = vmul.f32 %v1022, %v1028
    %v1031 = vmul.f32 %v1023, %v1028
    %v1033 = vlaneseq
    %v1034 = vshrl.u32 %v1033, 7
    %v1035 = vsub.s32 0, %v1034
    %v1036 = vrot.slane %v100, %v1035
    %v1038 = vadd.f32 %v1030, %v1036
    %v1039 = vadd.f32 %v1031, %v1036
    %1040 = vadd.xlane.f32.xlu0 %v1038
    %v1041 = vpop.xlane.xlu0 %1040
    %1042 = vadd.xlane.f32.xlu0 %v1039
    %v1043 = vpop.xlane.xlu0 %1042
    %v1044 = vmul.f32 %v1041, %v1005
    %v1045 = vmul.f32 %v1043, %v1005
    %v1046 = vsub.f32 %v1038, %v1044
    %v1047 = vsub.f32 %v1039, %v1045
    %v1048 = vmul.f32 %v1046, %v1046
    %v1049 = vmul.f32 %v1047, %v1047
    %1050 = vadd.xlane.f32.xlu0 %v1048
    %v1051 = vpop.xlane.xlu0 %1050
    %1052 = vadd.xlane.f32.xlu0 %v1049
    %v1053 = vpop.xlane.xlu0 %1052
    %v1054 = vmul.f32 %v1051, %v1005
    %v1055 = vmul.f32 %v1053, %v1005
    %v1056 = vadd.f32 %v1054, 1e-05
    %v1057 = vadd.f32 %v1055, 1e-05
    %v1058 = vrsqrt.pop %v1056
    %v1059 = vrsqrt.pop %v1057
    %v1060 = vmul.f32 %v1046, %v1058
    %v1061 = vmul.f32 %v1047, %v1059
    %v1063 = vlaneseq
    %v1064 = vshrl.u32 %v1063, 7
    %v1065 = vsub.s32 0, %v1064
    %v1066 = vrot.slane %v233, %v1065
    %v1068 = vmul.f32 %v1060, %v1066
    %v1069 = vmul.f32 %v1061, %v1066
    %v1071 = vlaneseq
    %v1072 = vshrl.u32 %v1071, 7
    %v1073 = vsub.s32 0, %v1072
    %v1074 = vrot.slane %v234, %v1073
    %v1076 = vadd.f32 %v1068, %v1074
    %v1077 = vadd.f32 %v1069, %v1074
    %v1078 = vpack.c.bf16 %v1077, %v1076
    %v1080 = vlaneseq
    %v1081 = vshrl.u32 %v1080, 7
    %v1082 = vsub.s32 0, %v1081
    %v1083 = vrot.slane %v199, %v1082
    %v1084 = vlaneseq
    %v1085 = vshrl.u32 %v1084, 7
    %v1086 = vsub.s32 1, %v1085
    %v1087 = vrot.slane %v199, %v1086
    %v1106 = vunpack.c.l.b16 %v183
    %v1107 = vunpack.c.h.b16 %v183
    %v1108 = vunpack.c.l.b16 %v184
    %v1109 = vunpack.c.h.b16 %v184
    %v1110 = vunpack.c.l.b16 %v185
    %v1111 = vunpack.c.h.b16 %v185
    %v1112 = vunpack.c.l.b16 %v186
    %v1113 = vunpack.c.h.b16 %v186
    %v1114 = vunpack.c.l.b16 %v187
    %v1115 = vunpack.c.h.b16 %v187
    %v1116 = vunpack.c.l.b16 %v188
    %v1117 = vunpack.c.h.b16 %v188
    %v1118 = vunpack.c.l.b16 %v189
    %v1119 = vunpack.c.h.b16 %v189
    %v1120 = vunpack.c.l.b16 %v190
    %v1121 = vunpack.c.h.b16 %v190
    %v1122 = vunpack.c.l.b16 %v191
    %v1123 = vunpack.c.h.b16 %v191
    %v1124 = vunpack.c.l.b16 %v192
    %v1125 = vunpack.c.h.b16 %v192
    %v1126 = vunpack.c.l.b16 %v193
    %v1127 = vunpack.c.h.b16 %v193
    %v1128 = vunpack.c.l.b16 %v194
    %v1129 = vunpack.c.h.b16 %v194
    %v1130 = vunpack.c.l.b16 %v195
    %v1131 = vunpack.c.h.b16 %v195
    %v1132 = vunpack.c.l.b16 %v196
    %v1133 = vunpack.c.h.b16 %v196
    %v1134 = vunpack.c.l.b16 %v197
    %v1135 = vunpack.c.h.b16 %v197
    %v1136 = vunpack.c.l.b16 %v198
    %v1137 = vunpack.c.h.b16 %v198
    %v1138 = vpack.c.b16 %v1108, %v1106
    %v1139 = vpack.c.b16 %v1109, %v1107
    %v1140 = vpack.c.b16 %v1112, %v1110
    %v1141 = vpack.c.b16 %v1113, %v1111
    %v1142 = vpack.c.b16 %v1116, %v1114
    %v1143 = vpack.c.b16 %v1117, %v1115
    %v1144 = vpack.c.b16 %v1120, %v1118
    %v1145 = vpack.c.b16 %v1121, %v1119
    %v1146 = vpack.c.b16 %v1124, %v1122
    %v1147 = vpack.c.b16 %v1125, %v1123
    %v1148 = vpack.c.b16 %v1128, %v1126
    %v1149 = vpack.c.b16 %v1129, %v1127
    %v1150 = vpack.c.b16 %v1132, %v1130
    %v1151 = vpack.c.b16 %v1133, %v1131
    %v1152 = vpack.c.b16 %v1136, %v1134
    %v1153 = vpack.c.b16 %v1137, %v1135
    %1170 = vmatprep.subr.bf16.mxu0 %v1139
    %1171 = vmatpush1.bf16.msra.mxu0 %v1138
    %1172 = vmatprep.subr.bf16.mxu0 %v1141
    %1173 = vmatpush1.bf16.msra.mxu0 %v1140
    %1174 = vmatprep.subr.bf16.mxu0 %v1143
    %1175 = vmatpush1.bf16.msra.mxu0 %v1142
    %1176 = vmatprep.subr.bf16.mxu0 %v1145
    %1177 = vmatpush1.bf16.msra.mxu0 %v1144
    %1178 = vmatprep.subr.bf16.mxu0 %v1147
    %1179 = vmatpush1.bf16.msra.mxu0 %v1146
    %1180 = vmatprep.subr.bf16.mxu0 %v1149
    %1181 = vmatpush1.bf16.msra.mxu0 %v1148
    %1182 = vmatprep.subr.bf16.mxu0 %v1151
    %1183 = vmatpush1.bf16.msra.mxu0 %v1150
    %1184 = vmatprep.subr.bf16.mxu0 %v1153
    %1185 = vmatpush1.bf16.msra.mxu0 %v1152
    %1186 = vmatprep.subr.bf16.mxu0 0
    %1187 = vmatpush1.bf16.msra.mxu0 0
    %1188 = vmatprep.subr.bf16.mxu0 0
    %1189 = vmatpush1.bf16.msra.mxu0 0
    %1190 = vmatprep.subr.bf16.mxu0 0
    %1191 = vmatpush1.bf16.msra.mxu0 0
    %1192 = vmatprep.subr.bf16.mxu0 0
    %1193 = vmatpush1.bf16.msra.mxu0 0
    %1194 = vmatprep.subr.bf16.mxu0 0
    %1195 = vmatpush1.bf16.msra.mxu0 0
    %1196 = vmatprep.subr.bf16.mxu0 0
    %1197 = vmatpush1.bf16.msra.mxu0 0
    %1198 = vmatprep.subr.bf16.mxu0 0
    %1199 = vmatpush1.bf16.msra.mxu0 0
    %1200 = vmatprep.subr.bf16.mxu0 0
    %1201 = vmatpush1.bf16.msra.mxu0 0
    %1202 = vmatprep.mubr.bf16.mxu0 0
    %1203 = vmatmul.mubr.bf16.gmra.mrb[0].mxu0 %v1078
    %v1204 = vpop.f32.mrb[0].mxu0
    %v1205 = vadd.f32 %v1083, %v1204
    %v1206 = vpop.f32.mrb[0].mxu0
    %v1207 = vadd.f32 %v1087, %v1206
    %v1208 = vpop.f32.mrb[0].mxu0
    %v1209 = vadd.f32 %v1083, %v1208
    %v1210 = vpop.f32.mrb[0].mxu0
    %v1211 = vadd.f32 %v1087, %v1210
    %1212 = vdwg.mxu0
    %v1213 = vmul.f32 %v1205, 0.5
    %v1214 = vmul.f32 %v1207, 0.5
    %v1215 = vmul.f32 %v1209, 0.5
    %v1216 = vmul.f32 %v1211, 0.5
    %v1217 = vmul.f32 %v1205, 0.70710677
    %v1218 = vmul.f32 %v1207, 0.70710677
    %v1219 = vmul.f32 %v1209, 0.70710677
    %v1220 = vmul.f32 %v1211, 0.70710677
    %v1221 = verf.f32.pop %v1217
    %v1222 = verf.f32.pop %v1218
    %v1223 = verf.f32.pop %v1219
    %v1224 = verf.f32.pop %v1220
    %v1225 = vadd.f32 %v1221, 1.0
    %v1226 = vadd.f32 %v1222, 1.0
    %v1227 = vadd.f32 %v1223, 1.0
    %v1228 = vadd.f32 %v1224, 1.0
    %v1229 = vmul.f32 %v1213, %v1225
    %v1230 = vmul.f32 %v1214, %v1226
    %v1231 = vmul.f32 %v1215, %v1227
    %v1232 = vmul.f32 %v1216, %v1228
    %v1233 = vpack.c.bf16 %v1231, %v1229
    %v1234 = vpack.c.bf16 %v1232, %v1230
    %v1236 = vlaneseq
    %v1237 = vshrl.u32 %v1236, 7
    %v1238 = vsub.s32 0, %v1237
    %v1239 = vrot.slane %v232, %v1238
    %v1273 = vunpack.c.l.b16 %v200
    %v1274 = vunpack.c.l.b16 %v201
    %v1275 = vunpack.c.l.b16 %v202
    %v1276 = vunpack.c.l.b16 %v203
    %v1277 = vunpack.c.l.b16 %v204
    %v1278 = vunpack.c.l.b16 %v205
    %v1279 = vunpack.c.l.b16 %v206
    %v1280 = vunpack.c.l.b16 %v207
    %v1281 = vunpack.c.l.b16 %v208
    %v1282 = vunpack.c.l.b16 %v209
    %v1283 = vunpack.c.l.b16 %v210
    %v1284 = vunpack.c.l.b16 %v211
    %v1285 = vunpack.c.l.b16 %v212
    %v1286 = vunpack.c.l.b16 %v213
    %v1287 = vunpack.c.l.b16 %v214
    %v1288 = vunpack.c.l.b16 %v215
    %v1289 = vunpack.c.l.b16 %v216
    %v1290 = vunpack.c.l.b16 %v217
    %v1291 = vunpack.c.l.b16 %v218
    %v1292 = vunpack.c.l.b16 %v219
    %v1293 = vunpack.c.l.b16 %v220
    %v1294 = vunpack.c.l.b16 %v221
    %v1295 = vunpack.c.l.b16 %v222
    %v1296 = vunpack.c.l.b16 %v223
    %v1297 = vunpack.c.l.b16 %v224
    %v1298 = vunpack.c.l.b16 %v225
    %v1299 = vunpack.c.l.b16 %v226
    %v1300 = vunpack.c.l.b16 %v227
    %v1301 = vunpack.c.l.b16 %v228
    %v1302 = vunpack.c.l.b16 %v229
    %v1303 = vunpack.c.l.b16 %v230
    %v1304 = vunpack.c.l.b16 %v231
    %v1305 = vpack.c.b16 %v1274, %v1273
    %v1306 = vpack.c.b16 %v1276, %v1275
    %v1307 = vpack.c.b16 %v1278, %v1277
    %v1308 = vpack.c.b16 %v1280, %v1279
    %v1309 = vpack.c.b16 %v1282, %v1281
    %v1310 = vpack.c.b16 %v1284, %v1283
    %v1311 = vpack.c.b16 %v1286, %v1285
    %v1312 = vpack.c.b16 %v1288, %v1287
    %v1313 = vpack.c.b16 %v1290, %v1289
    %v1314 = vpack.c.b16 %v1292, %v1291
    %v1315 = vpack.c.b16 %v1294, %v1293
    %v1316 = vpack.c.b16 %v1296, %v1295
    %v1317 = vpack.c.b16 %v1298, %v1297
    %v1318 = vpack.c.b16 %v1300, %v1299
    %v1319 = vpack.c.b16 %v1302, %v1301
    %v1320 = vpack.c.b16 %v1304, %v1303
    %1337 = vmatprep.subr.bf16.mxu0 0
    %1338 = vmatpush1.bf16.msra.mxu0 %v1305
    %1339 = vmatprep.subr.bf16.mxu0 0
    %1340 = vmatpush1.bf16.msra.mxu0 %v1306
    %1341 = vmatprep.subr.bf16.mxu0 0
    %1342 = vmatpush1.bf16.msra.mxu0 %v1307
    %1343 = vmatprep.subr.bf16.mxu0 0
    %1344 = vmatpush1.bf16.msra.mxu0 %v1308
    %1345 = vmatprep.subr.bf16.mxu0 0
    %1346 = vmatpush1.bf16.msra.mxu0 %v1309
    %1347 = vmatprep.subr.bf16.mxu0 0
    %1348 = vmatpush1.bf16.msra.mxu0 %v1310
    %1349 = vmatprep.subr.bf16.mxu0 0
    %1350 = vmatpush1.bf16.msra.mxu0 %v1311
    %1351 = vmatprep.subr.bf16.mxu0 0
    %1352 = vmatpush1.bf16.msra.mxu0 %v1312
    %1353 = vmatprep.subr.bf16.mxu0 0
    %1354 = vmatpush1.bf16.msra.mxu0 %v1313
    %1355 = vmatprep.subr.bf16.mxu0 0
    %1356 = vmatpush1.bf16.msra.mxu0 %v1314
    %1357 = vmatprep.subr.bf16.mxu0 0
    %1358 = vmatpush1.bf16.msra.mxu0 %v1315
    %1359 = vmatprep.subr.bf16.mxu0 0
    %1360 = vmatpush1.bf16.msra.mxu0 %v1316
    %1361 = vmatprep.subr.bf16.mxu0 0
    %1362 = vmatpush1.bf16.msra.mxu0 %v1317
    %1363 = vmatprep.subr.bf16.mxu0 0
    %1364 = vmatpush1.bf16.msra.mxu0 %v1318
    %1365 = vmatprep.subr.bf16.mxu0 0
    %1366 = vmatpush1.bf16.msra.mxu0 %v1319
    %1367 = vmatprep.subr.bf16.mxu0 0
    %1368 = vmatpush1.bf16.msra.mxu0 %v1320
    %1369 = vmatprep.mubr.bf16.mxu0 %v1234
    %1370 = vmatmul.mubr.bf16.gmra.mrb[0].mxu0 %v1233
    %v1371 = vpop.f32.mrb[0].mxu0
    %v1372 = vadd.f32 %v1239, %v1371
    %v1373 = vpop.f32.mrb[0].mxu0
    %v1374 = vpop.f32.mrb[0].mxu0
    %v1375 = vadd.f32 %v1239, %v1374
    %v1376 = vpop.f32.mrb[0].mxu0
    %1377 = vdwg.mxu0
    %v1378 = vadd.f32 %v1372, %v1038
    %v1379 = vadd.f32 %v1375, %v1039
    %1380 = vadd.xlane.f32.xlu0 %v1378
    %v1381 = vpop.xlane.xlu0 %1380
    %1382 = vadd.xlane.f32.xlu0 %v1379
    %v1383 = vpop.xlane.xlu0 %1382
    %v1384 = vmul.f32 %v1381, %v1005
    %v1385 = vmul.f32 %v1383, %v1005
    %v1386 = vsub.f32 %v1378, %v1384
    %v1387 = vsub.f32 %v1379, %v1385
    %v1388 = vmul.f32 %v1386, %v1386
    %v1389 = vmul.f32 %v1387, %v1387
    %1390 = vadd.xlane.f32.xlu0 %v1388
    %v1391 = vpop.xlane.xlu0 %1390
    %1392 = vadd.xlane.f32.xlu0 %v1389
    %v1393 = vpop.xlane.xlu0 %1392
    %v1394 = vmul.f32 %v1391, %v1005
    %v1395 = vmul.f32 %v1393, %v1005
    %v1396 = vadd.f32 %v1394, 1e-05
    %v1397 = vadd.f32 %v1395, 1e-05
    %v1398 = vrsqrt.pop %v1396
    %v1399 = vrsqrt.pop %v1397
    %v1400 = vmul.f32 %v1386, %v1398
    %v1401 = vmul.f32 %v1387, %v1399
    %v1403 = vlaneseq
    %v1404 = vshrl.u32 %v1403, 7
    %v1405 = vsub.s32 0, %v1404
    %v1406 = vrot.slane %v101, %v1405
    %v1408 = vmul.f32 %v1400, %v1406
    %v1409 = vmul.f32 %v1401, %v1406
    %v1411 = vlaneseq
    %v1412 = vshrl.u32 %v1411, 7
    %v1413 = vsub.s32 0, %v1412
    %v1414 = vrot.slane %v102, %v1413
    %v1416 = vadd.f32 %v1408, %v1414
    %v1417 = vadd.f32 %v1409, %v1414
    %s1418 = scalar_lea.vmem %s10, 384
    %v1419 = vld [vmem:[%s1418] sm:$0xff]
    %v1420 = vld [vmem:[%s1418 + $0x8] sm:$0xff]
    %v1421 = vld [vmem:[%s1418 + $0x10] sm:$0xff]
    %v1422 = vld [vmem:[%s1418 + $0x18] sm:$0xff]
    %v1423 = vld [vmem:[%s1418 + $0x20] sm:$0xff]
    %v1424 = vld [vmem:[%s1418 + $0x28] sm:$0xff]
    %v1425 = vld [vmem:[%s1418 + $0x30] sm:$0xff]
    %v1426 = vld [vmem:[%s1418 + $0x38] sm:$0xff]
    %v1427 = vld [vmem:[%s1418 + $0x40] sm:$0xff]
    %v1428 = vld [vmem:[%s1418 + $0x48] sm:$0xff]
    %v1429 = vld [vmem:[%s1418 + $0x50] sm:$0xff]
    %v1430 = vld [vmem:[%s1418 + $0x58] sm:$0xff]
    %v1431 = vld [vmem:[%s1418 + $0x60] sm:$0xff]
    %v1432 = vld [vmem:[%s1418 + $0x68] sm:$0xff]
    %v1433 = vld [vmem:[%s1418 + $0x70] sm:$0xff]
    %v1434 = vld [vmem:[%s1418 + $0x78] sm:$0xff]
    %v1435 = vld [vmem:[%s1418 + $0x80] sm:$0xff]
    %v1436 = vld [vmem:[%s1418 + $0x88] sm:$0xff]
    %v1437 = vld [vmem:[%s1418 + $0x90] sm:$0xff]
    %v1438 = vld [vmem:[%s1418 + $0x98] sm:$0xff]
    %v1439 = vld [vmem:[%s1418 + $0xa0] sm:$0xff]
    %v1440 = vld [vmem:[%s1418 + $0xa8] sm:$0xff]
    %v1441 = vld [vmem:[%s1418 + $0xb0] sm:$0xff]
    %v1442 = vld [vmem:[%s1418 + $0xb8] sm:$0xff]
    %v1443 = vld [vmem:[%s1418 + $0xc0] sm:$0xff]
    %v1444 = vld [vmem:[%s1418 + $0xc8] sm:$0xff]
    %v1445 = vld [vmem:[%s1418 + $0xd0] sm:$0xff]
    %v1446 = vld [vmem:[%s1418 + $0xd8] sm:$0xff]
    %v1447 = vld [vmem:[%s1418 + $0xe0] sm:$0xff]
    %v1448 = vld [vmem:[%s1418 + $0xe8] sm:$0xff]
    %v1449 = vld [vmem:[%s1418 + $0xf0] sm:$0xff]
    %v1450 = vld [vmem:[%s1418 + $0xf8] sm:$0xff]
    %v1451 = vld [vmem:[%s1418 + $0x100] sm:$0xff]
    %v1452 = vld [vmem:[%s1418 + $0x108] sm:$0xff]
    %v1453 = vld [vmem:[%s1418 + $0x110] sm:$0xff]
    %v1454 = vld [vmem:[%s1418 + $0x118] sm:$0xff]
    %v1455 = vld [vmem:[%s1418 + $0x120] sm:$0xff]
    %v1456 = vld [vmem:[%s1418 + $0x128] sm:$0xff]
    %v1457 = vld [vmem:[%s1418 + $0x130] sm:$0xff]
    %v1458 = vld [vmem:[%s1418 + $0x138] sm:$0xff]
    %v1459 = vld [vmem:[%s1418 + $0x140] sm:$0xff]
    %v1460 = vld [vmem:[%s1418 + $0x148] sm:$0xff]
    %v1461 = vld [vmem:[%s1418 + $0x150] sm:$0xff]
    %v1462 = vld [vmem:[%s1418 + $0x158] sm:$0xff]
    %v1463 = vld [vmem:[%s1418 + $0x160] sm:$0xff]
    %v1464 = vld [vmem:[%s1418 + $0x168] sm:$0xff]
    %v1465 = vld [vmem:[%s1418 + $0x170] sm:$0xff]
    %v1466 = vld [vmem:[%s1418 + $0x178] sm:$0xff]
    %s1467 = scalar_lea.vmem %s11, 128
    %v1468 = vld [vmem:[%s1467] sm:$0xf]
    %v1469 = vld [vmem:[%s1467 + $0x4] sm:$0xf]
    %v1470 = vld [vmem:[%s1467 + $0x8] sm:$0xf]
    %v1471 = vld [vmem:[%s1467 + $0xc] sm:$0xf]
    %v1472 = vld [vmem:[%s1467 + $0x10] sm:$0xf]
    %v1473 = vld [vmem:[%s1467 + $0x14] sm:$0xf]
    %v1474 = vld [vmem:[%s1467 + $0x18] sm:$0xf]
    %v1475 = vld [vmem:[%s1467 + $0x1c] sm:$0xf]
    %v1476 = vld [vmem:[%s1467 + $0x20] sm:$0xf]
    %v1477 = vld [vmem:[%s1467 + $0x24] sm:$0xf]
    %v1478 = vld [vmem:[%s1467 + $0x28] sm:$0xf]
    %v1479 = vld [vmem:[%s1467 + $0x2c] sm:$0xf]
    %v1480 = vld [vmem:[%s1467 + $0x30] sm:$0xf]
    %v1481 = vld [vmem:[%s1467 + $0x34] sm:$0xf]
    %v1482 = vld [vmem:[%s1467 + $0x38] sm:$0xf]
    %v1483 = vld [vmem:[%s1467 + $0x3c] sm:$0xf]
    %v1484 = vld [vmem:[%s1467 + $0x40] sm:$0xf]
    %v1485 = vld [vmem:[%s1467 + $0x44] sm:$0xf]
    %v1486 = vld [vmem:[%s1467 + $0x48] sm:$0xf]
    %v1487 = vld [vmem:[%s1467 + $0x4c] sm:$0xf]
    %v1488 = vld [vmem:[%s1467 + $0x50] sm:$0xf]
    %v1489 = vld [vmem:[%s1467 + $0x54] sm:$0xf]
    %v1490 = vld [vmem:[%s1467 + $0x58] sm:$0xf]
    %v1491 = vld [vmem:[%s1467 + $0x5c] sm:$0xf]
    %v1492 = vld [vmem:[%s1467 + $0x60] sm:$0xf]
    %v1493 = vld [vmem:[%s1467 + $0x64] sm:$0xf]
    %v1494 = vld [vmem:[%s1467 + $0x68] sm:$0xf]
    %v1495 = vld [vmem:[%s1467 + $0x6c] sm:$0xf]
    %v1496 = vld [vmem:[%s1467 + $0x70] sm:$0xf]
    %v1497 = vld [vmem:[%s1467 + $0x74] sm:$0xf]
    %v1498 = vld [vmem:[%s1467 + $0x78] sm:$0xf]
    %v1499 = vld [vmem:[%s1467 + $0x7c] sm:$0xf]
    %s1500 = scalar_lea.vmem %s14, 128
    %v1501 = vld [vmem:[%s1500] sm:$0xff]
    %v1502 = vld [vmem:[%s1500 + $0x8] sm:$0xff]
    %v1503 = vld [vmem:[%s1500 + $0x10] sm:$0xff]
    %v1504 = vld [vmem:[%s1500 + $0x18] sm:$0xff]
    %v1505 = vld [vmem:[%s1500 + $0x20] sm:$0xff]
    %v1506 = vld [vmem:[%s1500 + $0x28] sm:$0xff]
    %v1507 = vld [vmem:[%s1500 + $0x30] sm:$0xff]
    %v1508 = vld [vmem:[%s1500 + $0x38] sm:$0xff]
    %v1509 = vld [vmem:[%s1500 + $0x40] sm:$0xff]
    %v1510 = vld [vmem:[%s1500 + $0x48] sm:$0xff]
    %v1511 = vld [vmem:[%s1500 + $0x50] sm:$0xff]
    %v1512 = vld [vmem:[%s1500 + $0x58] sm:$0xff]
    %v1513 = vld [vmem:[%s1500 + $0x60] sm:$0xff]
    %v1514 = vld [vmem:[%s1500 + $0x68] sm:$0xff]
    %v1515 = vld [vmem:[%s1500 + $0x70] sm:$0xff]
    %v1516 = vld [vmem:[%s1500 + $0x78] sm:$0xff]
    %s1517 = scalar_lea.vmem %s15, 2
    %v1518 = vld [vmem:[%s1517] sm:$0x3]
    %s1519 = scalar_lea.vmem %s16, 128
    %v1520 = vld [vmem:[%s1519] sm:$0xf]
    %v1521 = vld [vmem:[%s1519 + $0x4] sm:$0xf]
    %v1522 = vld [vmem:[%s1519 + $0x8] sm:$0xf]
    %v1523 = vld [vmem:[%s1519 + $0xc] sm:$0xf]
    %v1524 = vld [vmem:[%s1519 + $0x10] sm:$0xf]
    %v1525 = vld [vmem:[%s1519 + $0x14] sm:$0xf]
    %v1526 = vld [vmem:[%s1519 + $0x18] sm:$0xf]
    %v1527 = vld [vmem:[%s1519 + $0x1c] sm:$0xf]
    %v1528 = vld [vmem:[%s1519 + $0x20] sm:$0xf]
    %v1529 = vld [vmem:[%s1519 + $0x24] sm:$0xf]
    %v1530 = vld [vmem:[%s1519 + $0x28] sm:$0xf]
    %v1531 = vld [vmem:[%s1519 + $0x2c] sm:$0xf]
    %v1532 = vld [vmem:[%s1519 + $0x30] sm:$0xf]
    %v1533 = vld [vmem:[%s1519 + $0x34] sm:$0xf]
    %v1534 = vld [vmem:[%s1519 + $0x38] sm:$0xf]
    %v1535 = vld [vmem:[%s1519 + $0x3c] sm:$0xf]
    %v1536 = vld [vmem:[%s1519 + $0x40] sm:$0xf]
    %v1537 = vld [vmem:[%s1519 + $0x44] sm:$0xf]
    %v1538 = vld [vmem:[%s1519 + $0x48] sm:$0xf]
    %v1539 = vld [vmem:[%s1519 + $0x4c] sm:$0xf]
    %v1540 = vld [vmem:[%s1519 + $0x50] sm:$0xf]
    %v1541 = vld [vmem:[%s1519 + $0x54] sm:$0xf]
    %v1542 = vld [vmem:[%s1519 + $0x58] sm:$0xf]
    %v1543 = vld [vmem:[%s1519 + $0x5c] sm:$0xf]
    %v1544 = vld [vmem:[%s1519 + $0x60] sm:$0xf]
    %v1545 = vld [vmem:[%s1519 + $0x64] sm:$0xf]
    %v1546 = vld [vmem:[%s1519 + $0x68] sm:$0xf]
    %v1547 = vld [vmem:[%s1519 + $0x6c] sm:$0xf]
    %v1548 = vld [vmem:[%s1519 + $0x70] sm:$0xf]
    %v1549 = vld [vmem:[%s1519 + $0x74] sm:$0xf]
    %v1550 = vld [vmem:[%s1519 + $0x78] sm:$0xf]
    %v1551 = vld [vmem:[%s1519 + $0x7c] sm:$0xf]
    %s1552 = scalar_lea.vmem %s17, 1
    %v1553 = vld [vmem:[%s1552] sm:$0x1]
    %s1554 = scalar_lea.vmem %s12, 1
    %v1555 = vld [vmem:[%s1554] sm:$0x1]
    %s1556 = scalar_lea.vmem %s13, 1
    %v1557 = vld [vmem:[%s1556] sm:$0x1]
    %v1558 = vpack.c.bf16 %v1417, %v1416
    %v1607 = vunpack.c.l.b16 %v1419
    %v1608 = vunpack.c.h.b16 %v1419
    %v1609 = vunpack.c.l.b16 %v1420
    %v1610 = vunpack.c.h.b16 %v1420
    %v1611 = vunpack.c.l.b16 %v1421
    %v1612 = vunpack.c.h.b16 %v1421
    %v1613 = vunpack.c.l.b16 %v1422
    %v1614 = vunpack.c.h.b16 %v1422
    %v1615 = vunpack.c.l.b16 %v1423
    %v1616 = vunpack.c.h.b16 %v1423
    %v1617 = vunpack.c.l.b16 %v1424
    %v1618 = vunpack.c.h.b16 %v1424
    %v1619 = vunpack.c.l.b16 %v1425
    %v1620 = vunpack.c.h.b16 %v1425
    %v1621 = vunpack.c.l.b16 %v1426
    %v1622 = vunpack.c.h.b16 %v1426
    %v1623 = vunpack.c.l.b16 %v1427
    %v1624 = vunpack.c.h.b16 %v1427
    %v1625 = vunpack.c.l.b16 %v1428
    %v1626 = vunpack.c.h.b16 %v1428
    %v1627 = vunpack.c.l.b16 %v1429
    %v1628 = vunpack.c.h.b16 %v1429
    %v1629 = vunpack.c.l.b16 %v1430
    %v1630 = vunpack.c.h.b16 %v1430
    %v1631 = vunpack.c.l.b16 %v1431
    %v1632 = vunpack.c.h.b16 %v1431
    %v1633 = vunpack.c.l.b16 %v1432
    %v1634 = vunpack.c.h.b16 %v1432
    %v1635 = vunpack.c.l.b16 %v1433
    %v1636 = vunpack.c.h.b16 %v1433
    %v1637 = vunpack.c.l.b16 %v1434
    %v1638 = vunpack.c.h.b16 %v1434
    %v1639 = vunpack.c.l.b16 %v1435
    %v1640 = vunpack.c.h.b16 %v1435
    %v1641 = vunpack.c.l.b16 %v1436
    %v1642 = vunpack.c.h.b16 %v1436
    %v1643 = vunpack.c.l.b16 %v1437
    %v1644 = vunpack.c.h.b16 %v1437
    %v1645 = vunpack.c.l.b16 %v1438
    %v1646 = vunpack.c.h.b16 %v1438
    %v1647 = vunpack.c.l.b16 %v1439
    %v1648 = vunpack.c.h.b16 %v1439
    %v1649 = vunpack.c.l.b16 %v1440
    %v1650 = vunpack.c.h.b16 %v1440
    %v1651 = vunpack.c.l.b16 %v1441
    %v1652 = vunpack.c.h.b16 %v1441
    %v1653 = vunpack.c.l.b16 %v1442
    %v1654 = vunpack.c.h.b16 %v1442
    %v1655 = vunpack.c.l.b16 %v1443
    %v1656 = vunpack.c.h.b16 %v1443
    %v1657 = vunpack.c.l.b16 %v1444
    %v1658 = vunpack.c.h.b16 %v1444
    %v1659 = vunpack.c.l.b16 %v1445
    %v1660 = vunpack.c.h.b16 %v1445
    %v1661 = vunpack.c.l.b16 %v1446
    %v1662 = vunpack.c.h.b16 %v1446
    %v1663 = vunpack.c.l.b16 %v1447
    %v1664 = vunpack.c.h.b16 %v1447
    %v1665 = vunpack.c.l.b16 %v1448
    %v1666 = vunpack.c.h.b16 %v1448
    %v1667 = vunpack.c.l.b16 %v1449
    %v1668 = vunpack.c.h.b16 %v1449
    %v1669 = vunpack.c.l.b16 %v1450
    %v1670 = vunpack.c.h.b16 %v1450
    %v1671 = vunpack.c.l.b16 %v1451
    %v1672 = vunpack.c.h.b16 %v1451
    %v1673 = vunpack.c.l.b16 %v1452
    %v1674 = vunpack.c.h.b16 %v1452
    %v1675 = vunpack.c.l.b16 %v1453
    %v1676 = vunpack.c.h.b16 %v1453
    %v1677 = vunpack.c.l.b16 %v1454
    %v1678 = vunpack.c.h.b16 %v1454
    %v1679 = vunpack.c.l.b16 %v1455
    %v1680 = vunpack.c.h.b16 %v1455
    %v1681 = vunpack.c.l.b16 %v1456
    %v1682 = vunpack.c.h.b16 %v1456
    %v1683 = vunpack.c.l.b16 %v1457
    %v1684 = vunpack.c.h.b16 %v1457
    %v1685 = vunpack.c.l.b16 %v1458
    %v1686 = vunpack.c.h.b16 %v1458
    %v1687 = vunpack.c.l.b16 %v1459
    %v1688 = vunpack.c.h.b16 %v1459
    %v1689 = vunpack.c.l.b16 %v1460
    %v1690 = vunpack.c.h.b16 %v1460
    %v1691 = vunpack.c.l.b16 %v1461
    %v1692 = vunpack.c.h.b16 %v1461
    %v1693 = vunpack.c.l.b16 %v1462
    %v1694 = vunpack.c.h.b16 %v1462
    %v1695 = vunpack.c.l.b16 %v1463
    %v1696 = vunpack.c.h.b16 %v1463
    %v1697 = vunpack.c.l.b16 %v1464
    %v1698 = vunpack.c.h.b16 %v1464
    %v1699 = vunpack.c.l.b16 %v1465
    %v1700 = vunpack.c.h.b16 %v1465
    %v1701 = vunpack.c.l.b16 %v1466
    %v1702 = vunpack.c.h.b16 %v1466
    %v1703 = vpack.c.b16 %v1613, %v1607
    %v1704 = vpack.c.b16 %v1614, %v1608
    %v1705 = vpack.c.b16 %v1615, %v1609
    %v1706 = vpack.c.b16 %v1616, %v1610
    %v1707 = vpack.c.b16 %v1617, %v1611
    %v1708 = vpack.c.b16 %v1618, %v1612
    %v1709 = vpack.c.b16 %v1625, %v1619
    %v1710 = vpack.c.b16 %v1626, %v1620
    %v1711 = vpack.c.b16 %v1627, %v1621
    %v1712 = vpack.c.b16 %v1628, %v1622
    %v1713 = vpack.c.b16 %v1629, %v1623
    %v1714 = vpack.c.b16 %v1630, %v1624
    %v1715 = vpack.c.b16 %v1637, %v1631
    %v1716 = vpack.c.b16 %v1638, %v1632
    %v1717 = vpack.c.b16 %v1639, %v1633
    %v1718 = vpack.c.b16 %v1640, %v1634
    %v1719 = vpack.c.b16 %v1641, %v1635
    %v1720 = vpack.c.b16 %v1642, %v1636
    %v1721 = vpack.c.b16 %v1649, %v1643
    %v1722 = vpack.c.b16 %v1650, %v1644
    %v1723 = vpack.c.b16 %v1651, %v1645
    %v1724 = vpack.c.b16 %v1652, %v1646
    %v1725 = vpack.c.b16 %v1653, %v1647
    %v1726 = vpack.c.b16 %v1654, %v1648
    %v1727 = vpack.c.b16 %v1661, %v1655
    %v1728 = vpack.c.b16 %v1662, %v1656
    %v1729 = vpack.c.b16 %v1663, %v1657
    %v1730 = vpack.c.b16 %v1664, %v1658
    %v1731 = vpack.c.b16 %v1665, %v1659
    %v1732 = vpack.c.b16 %v1666, %v1660
    %v1733 = vpack.c.b16 %v1673, %v1667
    %v1734 = vpack.c.b16 %v1674, %v1668
    %v1735 = vpack.c.b16 %v1675, %v1669
    %v1736 = vpack.c.b16 %v1676, %v1670
    %v1737 = vpack.c.b16 %v1677, %v1671
    %v1738 = vpack.c.b16 %v1678, %v1672
    %v1739 = vpack.c.b16 %v1685, %v1679
    %v1740 = vpack.c.b16 %v1686, %v1680
    %v1741 = vpack.c.b16 %v1687, %v1681
    %v1742 = vpack.c.b16 %v1688, %v1682
    %v1743 = vpack.c.b16 %v1689, %v1683
    %v1744 = vpack.c.b16 %v1690, %v1684
    %v1745 = vpack.c.b16 %v1697, %v1691
    %v1746 = vpack.c.b16 %v1698, %v1692
    %v1747 = vpack.c.b16 %v1699, %v1693
    %v1748 = vpack.c.b16 %v1700, %v1694
    %v1749 = vpack.c.b16 %v1701, %v1695
    %v1750 = vpack.c.b16 %v1702, %v1696
    %1799 = vmatprep.subr.bf16.mxu0 %v1704
    %1800 = vmatpush1.bf16.msra.mxu0 %v1703
    %1801 = vmatprep.subr.bf16.mxu0 %v1710
    %1802 = vmatpush1.bf16.msra.mxu0 %v1709
    %1803 = vmatprep.subr.bf16.mxu0 %v1716
    %1804 = vmatpush1.bf16.msra.mxu0 %v1715
    %1805 = vmatprep.subr.bf16.mxu0 %v1722
    %1806 = vmatpush1.bf16.msra.mxu0 %v1721
    %1807 = vmatprep.subr.bf16.mxu0 %v1728
    %1808 = vmatpush1.bf16.msra.mxu0 %v1727
    %1809 = vmatprep.subr.bf16.mxu0 %v1734
    %1810 = vmatpush1.bf16.msra.mxu0 %v1733
    %1811 = vmatprep.subr.bf16.mxu0 %v1740
    %1812 = vmatpush1.bf16.msra.mxu0 %v1739
    %1813 = vmatprep.subr.bf16.mxu0 %v1746
    %1814 = vmatpush1.bf16.msra.mxu0 %v1745
    %1815 = vmatprep.subr.bf16.mxu0 0
    %1816 = vmatpush1.bf16.msra.mxu0 0
    %1817 = vmatprep.subr.bf16.mxu0 0
    %1818 = vmatpush1.bf16.msra.mxu0 0
    %1819 = vmatprep.subr.bf16.mxu0 0
    %1820 = vmatpush1.bf16.msra.mxu0 0
    %1821 = vmatprep.subr.bf16.mxu0 0
    %1822 = vmatpush1.bf16.msra.mxu0 0
    %1823 = vmatprep.subr.bf16.mxu0 0
    %1824 = vmatpush1.bf16.msra.mxu0 0
    %1825 = vmatprep.subr.bf16.mxu0 0
    %1826 = vmatpush1.bf16.msra.mxu0 0
    %1827 = vmatprep.subr.bf16.mxu0 0
    %1828 = vmatpush1.bf16.msra.mxu0 0
    %1829 = vmatprep.subr.bf16.mxu0 0
    %1830 = vmatpush1.bf16.msra.mxu0 0
    %1831 = vmatprep.mubr.bf16.mxu0 0
    %1832 = vmatmul.mubr.bf16.gmra.mrb[0].mxu0 %v1558
    %v1833 = vpop.f32.mrb[0].mxu0
    %v1834 = vadd.f32 0.0, %v1833
    %v1835 = vpop.f32.mrb[0].mxu0
    %v1836 = vadd.f32 0.0, %v1835
    %v1837 = vpop.f32.mrb[0].mxu0
    %v1838 = vadd.f32 0.0, %v1837
    %v1839 = vpop.f32.mrb[0].mxu0
    %v1840 = vadd.f32 0.0, %v1839
    %1841 = vdwg.mxu0
    %1842 = vmatprep.subr.bf16.mxu0 %v1706
    %1843 = vmatpush1.bf16.msra.mxu0 %v1705
    %1844 = vmatprep.subr.bf16.mxu0 %v1712
    %1845 = vmatpush1.bf16.msra.mxu0 %v1711
    %1846 = vmatprep.subr.bf16.mxu0 %v1718
    %1847 = vmatpush1.bf16.msra.mxu0 %v1717
    %1848 = vmatprep.subr.bf16.mxu0 %v1724
    %1849 = vmatpush1.bf16.msra.mxu0 %v1723
    %1850 = vmatprep.subr.bf16.mxu0 %v1730
    %1851 = vmatpush1.bf16.msra.mxu0 %v1729
    %1852 = vmatprep.subr.bf16.mxu0 %v1736
    %1853 = vmatpush1.bf16.msra.mxu0 %v1735
    %1854 = vmatprep.subr.bf16.mxu0 %v1742
    %1855 = vmatpush1.bf16.msra.mxu0 %v1741
    %1856 = vmatprep.subr.bf16.mxu0 %v1748
    %1857 = vmatpush1.bf16.msra.mxu0 %v1747
    %1858 = vmatprep.subr.bf16.mxu0 0
    %1859 = vmatpush1.bf16.msra.mxu0 0
    %1860 = vmatprep.subr.bf16.mxu0 0
    %1861 = vmatpush1.bf16.msra.mxu0 0
    %1862 = vmatprep.subr.bf16.mxu0 0
    %1863 = vmatpush1.bf16.msra.mxu0 0
    %1864 = vmatprep.subr.bf16.mxu0 0
    %1865 = vmatpush1.bf16.msra.mxu0 0
    %1866 = vmatprep.subr.bf16.mxu0 0
    %1867 = vmatpush1.bf16.msra.mxu0 0
    %1868 = vmatprep.subr.bf16.mxu0 0
    %1869 = vmatpush1.bf16.msra.mxu0 0
    %1870 = vmatprep.subr.bf16.mxu0 0
    %1871 = vmatpush1.bf16.msra.mxu0 0
    %1872 = vmatprep.subr.bf16.mxu0 0
    %1873 = vmatpush1.bf16.msra.mxu0 0
    %1874 = vmatprep.mubr.bf16.mxu0 0
    %1875 = vmatmul.mubr.bf16.gmra.mrb[0].mxu0 %v1558
    %v1876 = vpop.f32.mrb[0].mxu0
    %v1877 = vadd.f32 0.0, %v1876
    %v1878 = vpop.f32.mrb[0].mxu0
    %v1879 = vadd.f32 0.0, %v1878
    %v1880 = vpop.f32.mrb[0].mxu0
    %v1881 = vadd.f32 0.0, %v1880
    %v1882 = vpop.f32.mrb[0].mxu0
    %v1883 = vadd.f32 0.0, %v1882
    %1884 = vdwg.mxu0
    %1885 = vmatprep.subr.bf16.mxu0 %v1708
    %1886 = vmatpush1.bf16.msra.mxu0 %v1707
    %1887 = vmatprep.subr.bf16.mxu0 %v1714
    %1888 = vmatpush1.bf16.msra.mxu0 %v1713
    %1889 = vmatprep.subr.bf16.mxu0 %v1720
    %1890 = vmatpush1.bf16.msra.mxu0 %v1719
    %1891 = vmatprep.subr.bf16.mxu0 %v1726
    %1892 = vmatpush1.bf16.msra.mxu0 %v1725
    %1893 = vmatprep.subr.bf16.mxu0 %v1732
    %1894 = vmatpush1.bf16.msra.mxu0 %v1731
    %1895 = vmatprep.subr.bf16.mxu0 %v1738
    %1896 = vmatpush1.bf16.msra.mxu0 %v1737
    %1897 = vmatprep.subr.bf16.mxu0 %v1744
    %1898 = vmatpush1.bf16.msra.mxu0 %v1743
    %1899 = vmatprep.subr.bf16.mxu0 %v1750
    %1900 = vmatpush1.bf16.msra.mxu0 %v1749
    %1901 = vmatprep.subr.bf16.mxu0 0
    %1902 = vmatpush1.bf16.msra.mxu0 0
    %1903 = vmatprep.subr.bf16.mxu0 0
    %1904 = vmatpush1.bf16.msra.mxu0 0
    %1905 = vmatprep.subr.bf16.mxu0 0
    %1906 = vmatpush1.bf16.msra.mxu0 0
    %1907 = vmatprep.subr.bf16.mxu0 0
    %1908 = vmatpush1.bf16.msra.mxu0 0
    %1909 = vmatprep.subr.bf16.mxu0 0
    %1910 = vmatpush1.bf16.msra.mxu0 0
    %1911 = vmatprep.subr.bf16.mxu0 0
    %1912 = vmatpush1.bf16.msra.mxu0 0
    %1913 = vmatprep.subr.bf16.mxu0 0
    %1914 = vmatpush1.bf16.msra.mxu0 0
    %1915 = vmatprep.subr.bf16.mxu0 0
    %1916 = vmatpush1.bf16.msra.mxu0 0
    %1917 = vmatprep.mubr.bf16.mxu0 0
    %1918 = vmatmul.mubr.bf16.gmra.mrb[0].mxu0 %v1558
    %v1919 = vpop.f32.mrb[0].mxu0
    %v1920 = vadd.f32 0.0, %v1919
    %v1921 = vpop.f32.mrb[0].mxu0
    %v1922 = vadd.f32 0.0, %v1921
    %v1923 = vpop.f32.mrb[0].mxu0
    %v1924 = vadd.f32 0.0, %v1923
    %v1925 = vpop.f32.mrb[0].mxu0
    %v1926 = vadd.f32 0.0, %v1925
    %1927 = vdwg.mxu0
    %v1928 = vmul.f32 %v1834, %v75
    %v1929 = vmul.f32 %v1836, %v76
    %v1930 = vmul.f32 %v1877, %v77
    %v1931 = vmul.f32 %v1879, %v78
    %v1932 = vmul.f32 %v1838, %v79
    %v1933 = vmul.f32 %v1840, %v80
    %v1934 = vmul.f32 %v1881, %v81
    %v1935 = vmul.f32 %v1883, %v82
    %1936 = vrot.lane.b32.xlu0 %v1834, 127
    %v1937 = vpop.permute.xlu0 %1936
    %1938 = vrot.lane.b32.xlu0 %v1838, 127
    %v1939 = vpop.permute.xlu0 %1938
    %1940 = vrot.lane.b32.xlu0 %v1836, 127
    %v1941 = vpop.permute.xlu0 %1940
    %1942 = vrot.lane.b32.xlu0 %v1840, 127
    %v1943 = vpop.permute.xlu0 %1942
    %1944 = vrot.lane.b32.xlu0 %v1877, 127
    %v1945 = vpop.permute.xlu0 %1944
    %1946 = vrot.lane.b32.xlu0 %v1881, 127
    %v1947 = vpop.permute.xlu0 %1946
    %1948 = vrot.lane.b32.xlu0 %v1879, 127
    %v1949 = vpop.permute.xlu0 %1948
    %1950 = vrot.lane.b32.xlu0 %v1883, 127
    %v1951 = vpop.permute.xlu0 %1950
    %v1952 = vsel %vm631, %v1945, %v1949
    %v1953 = vsel %vm631, %v1947, %v1951
    %v1954 = vsel %vm631, %v1941, %v1945
    %v1955 = vsel %vm631, %v1943, %v1947
    %v1956 = vsel %vm631, %v1937, %v1941
    %v1957 = vsel %vm631, %v1939, %v1943
    %v1958 = vsel %vm631, %v1949, %v1937
    %v1959 = vsel %vm631, %v1951, %v1939
    %v1960 = vmul.f32 %v1956, %v83
    %v1961 = vmul.f32 %v1954, %v84
    %v1962 = vmul.f32 %v1952, %v85
    %v1963 = vmul.f32 %v1958, %v86
    %v1964 = vmul.f32 %v1957, %v87
    %v1965 = vmul.f32 %v1955, %v88
    %v1966 = vmul.f32 %v1953, %v89
    %v1967 = vmul.f32 %v1959, %v90
    %v1968 = vadd.f32 %v1928, %v1960
    %v1969 = vadd.f32 %v1929, %v1961
    %v1970 = vadd.f32 %v1930, %v1962
    %v1971 = vadd.f32 %v1931, %v1963
    %v1972 = vadd.f32 %v1932, %v1964
    %v1973 = vadd.f32 %v1933, %v1965
    %v1974 = vadd.f32 %v1934, %v1966
    %v1975 = vadd.f32 %v1935, %v1967
    %1976 = vrot.lane.b32.xlu0 %v1834, 1
    %v1977 = vpop.permute.xlu0 %1976
    %1978 = vrot.lane.b32.xlu0 %v1838, 1
    %v1979 = vpop.permute.xlu0 %1978
    %1980 = vrot.lane.b32.xlu0 %v1836, 1
    %v1981 = vpop.permute.xlu0 %1980
    %1982 = vrot.lane.b32.xlu0 %v1840, 1
    %v1983 = vpop.permute.xlu0 %1982
    %1984 = vrot.lane.b32.xlu0 %v1877, 1
    %v1985 = vpop.permute.xlu0 %1984
    %1986 = vrot.lane.b32.xlu0 %v1881, 1
    %v1987 = vpop.permute.xlu0 %1986
    %1988 = vrot.lane.b32.xlu0 %v1879, 1
    %v1989 = vpop.permute.xlu0 %1988
    %1990 = vrot.lane.b32.xlu0 %v1883, 1
    %v1991 = vpop.permute.xlu0 %1990
    %v1992 = vsel %vm672, %v1985, %v1989
    %v1993 = vsel %vm672, %v1987, %v1991
    %v1994 = vsel %vm672, %v1981, %v1985
    %v1995 = vsel %vm672, %v1983, %v1987
    %v1996 = vsel %vm672, %v1977, %v1981
    %v1997 = vsel %vm672, %v1979, %v1983
    %v1998 = vsel %vm672, %v1989, %v1977
    %v1999 = vsel %vm672, %v1991, %v1979
    %v2000 = vmul.f32 %v1998, %v91
    %v2001 = vmul.f32 %v1996, %v92
    %v2002 = vmul.f32 %v1994, %v93
    %v2003 = vmul.f32 %v1992, %v94
    %v2004 = vmul.f32 %v1999, %v95
    %v2005 = vmul.f32 %v1997, %v96
    %v2006 = vmul.f32 %v1995, %v97
    %v2007 = vmul.f32 %v1993, %v98
    %v2008 = vadd.f32 %v1968, %v2000
    %v2009 = vadd.f32 %v1969, %v2001
    %v2010 = vadd.f32 %v1970, %v2002
    %v2011 = vadd.f32 %v1971, %v2003
    %v2012 = vadd.f32 %v1972, %v2004
    %v2013 = vadd.f32 %v1973, %v2005
    %v2014 = vadd.f32 %v1974, %v2006
    %v2015 = vadd.f32 %v1975, %v2007
    %v2016 = vpack.c.bf16 %v2009, %v2008
    %v2017 = vpack.c.bf16 %v2013, %v2012
    %v2018 = vpack.c.bf16 %v2011, %v2010
    %v2019 = vpack.c.bf16 %v2015, %v2014
    %v2020 = vpack.c.bf16 %v1922, %v1920
    %v2021 = vpack.c.bf16 %v1926, %v1924
    %2022 = vmatprep.subr.bf16.mxu0 0
    %2023 = vmatpush1.bf16.xpose.msra.mxu0 %v2018
    %2024 = vmatprep.subr.bf16.mxu0 0
    %2025 = vmatpush1.bf16.xpose.msra.mxu0 %v2019
    %2026 = vmatprep.subr.bf16.mxu0 0
    %2027 = vmatpush1.bf16.xpose.msra.mxu0 0
    %2028 = vmatprep.subr.bf16.mxu0 0
    %2029 = vmatpush1.bf16.xpose.msra.mxu0 0
    %2030 = vmatprep.subr.bf16.mxu0 0
    %2031 = vmatpush1.bf16.xpose.msra.mxu0 0
    %2032 = vmatprep.subr.bf16.mxu0 0
    %2033 = vmatpush1.bf16.xpose.msra.mxu0 0
    %2034 = vmatprep.subr.bf16.mxu0 0
    %2035 = vmatpush1.bf16.xpose.msra.mxu0 0
    %2036 = vmatprep.subr.bf16.mxu0 0
    %2037 = vmatpush1.bf16.xpose.msra.mxu0 0
    %2038 = vmatprep.subr.bf16.mxu0 0
    %2039 = vmatpush1.bf16.xpose.msra.mxu0 0
    %2040 = vmatprep.subr.bf16.mxu0 0
    %2041 = vmatpush1.bf16.xpose.msra.mxu0 0
    %2042 = vmatprep.subr.bf16.mxu0 0
    %2043 = vmatpush1.bf16.xpose.msra.mxu0 0
    %2044 = vmatprep.subr.bf16.mxu0 0
    %2045 = vmatpush1.bf16.xpose.msra.mxu0 0
    %2046 = vmatprep.subr.bf16.mxu0 0
    %2047 = vmatpush1.bf16.xpose.msra.mxu0 0
    %2048 = vmatprep.subr.bf16.mxu0 0
    %2049 = vmatpush1.bf16.xpose.msra.mxu0 0
    %2050 = vmatprep.subr.bf16.mxu0 0
    %2051 = vmatpush1.bf16.xpose.msra.mxu0 0
    %2052 = vmatprep.subr.bf16.mxu0 0
    %2053 = vmatpush1.bf16.xpose.msra.mxu0 0
    %2054 = vmatprep.mubr.bf16.mxu0 0
    %2055 = vmatmul.mubr.bf16.gmra.mrb[0].mxu0 %v2016
    %v2056 = vpop.f32.mrb[0].mxu0
    %v2057 = vadd.f32 0.0, %v2056
    %v2058 = vpop.f32.mrb[0].mxu0
    %v2059 = vpop.f32.mrb[0].mxu0
    %v2060 = vadd.f32 0.0, %v2059
    %v2061 = vpop.f32.mrb[0].mxu0
    %2062 = vmatprep.mubr.bf16.mxu0 0
    %2063 = vmatmul.mubr.bf16.gmra.mrb[0].mxu0 %v2017
    %v2064 = vpop.f32.mrb[0].mxu0
    %v2065 = vadd.f32 0.0, %v2064
    %v2066 = vpop.f32.mrb[0].mxu0
    %v2067 = vpop.f32.mrb[0].mxu0
    %v2068 = vadd.f32 0.0, %v2067
    %v2069 = vpop.f32.mrb[0].mxu0
    %2070 = vdwg.mxu0
    %v2071 = vmul.f32 %v2057, 0.088388346
    %v2072 = vmul.f32 %v2060, 0.088388346
    %v2073 = vmul.f32 %v2065, 0.088388346
    %v2074 = vmul.f32 %v2068, 0.088388346
    %v2075 = vsel %vm67, %v2071, %v71
    %v2076 = vsel %vm68, %v2072, %v72
    %v2077 = vsel %vm69, %v2073, %v73
    %v2078 = vsel %vm70, %v2074, %v74
    %v2079 = vsel %vm760, %v2075, -inf
    %2080 = vmax.xlane.f32.xlu0 %v2079
    %v2081 = vpop.xlane.xlu0 %2080
    %v2082 = vsel %vm760, %v2076, -inf
    %2083 = vmax.xlane.f32.xlu0 %v2082
    %v2084 = vpop.xlane.xlu0 %2083
    %v2085 = vsel %vm760, %v2077, -inf
    %2086 = vmax.xlane.f32.xlu0 %v2085
    %v2087 = vpop.xlane.xlu0 %2086
    %v2088 = vsel %vm760, %v2078, -inf
    %2089 = vmax.xlane.f32.xlu0 %v2088
    %v2090 = vpop.xlane.xlu0 %2089
    %v2091 = vsub.f32 %v2075, %v2081
    %v2092 = vsub.f32 %v2076, %v2084
    %v2093 = vsub.f32 %v2077, %v2087
    %v2094 = vsub.f32 %v2078, %v2090
    %v2095 = vmul.f32 %v2091, 1.442695
    %v2096 = vpow.pop %v2095
    %v2097 = vmul.f32 %v2092, 1.442695
    %v2098 = vpow.pop %v2097
    %v2099 = vmul.f32 %v2093, 1.442695
    %v2100 = vpow.pop %v2099
    %v2101 = vmul.f32 %v2094, 1.442695
    %v2102 = vpow.pop %v2101
    %v2103 = vsel %vm760, %v2096, 0.0
    %2104 = vadd.xlane.f32.xlu0 %v2103
    %v2105 = vpop.xlane.xlu0 %2104
    %v2106 = vsel %vm760, %v2098, 0.0
    %2107 = vadd.xlane.f32.xlu0 %v2106
    %v2108 = vpop.xlane.xlu0 %2107
    %v2109 = vsel %vm760, %v2100, 0.0
    %2110 = vadd.xlane.f32.xlu0 %v2109
    %v2111 = vpop.xlane.xlu0 %2110
    %v2112 = vsel %vm760, %v2102, 0.0
    %2113 = vadd.xlane.f32.xlu0 %v2112
    %v2114 = vpop.xlane.xlu0 %2113
    %v2115 = vrcp.pop %v2105
    %v2116 = vrcp.pop %v2108
    %v2117 = vrcp.pop %v2111
    %v2118 = vrcp.pop %v2114
    %v2119 = vmul.f32 %v2096, %v2115
    %v2120 = vmul.f32 %v2098, %v2116
    %v2121 = vmul.f32 %v2100, %v2117
    %v2122 = vmul.f32 %v2102, %v2118
    %v2123 = vpack.c.bf16 %v2120, %v2119
    %v2124 = vpack.c.bf16 %v2122, %v2121
    %v2126 = vsel %vm760, %v2123, 0
    %v2129 = vsel %vm760, %v2124, 0
    %2131 = vmatprep.subr.bf16.mxu0 0
    %2132 = vmatpush1.bf16.msra.mxu0 %v2020
    %2133 = vmatprep.subr.bf16.mxu0 0
    %2134 = vmatpush1.bf16.msra.mxu0 %v2021
    %2135 = vmatprep.subr.bf16.mxu0 0
    %2136 = vmatpush1.bf16.msra.mxu0 0
    %2137 = vmatprep.subr.bf16.mxu0 0
    %2138 = vmatpush1.bf16.msra.mxu0 0
    %2139 = vmatprep.subr.bf16.mxu0 0
    %2140 = vmatpush1.bf16.msra.mxu0 0
    %2141 = vmatprep.subr.bf16.mxu0 0
    %2142 = vmatpush1.bf16.msra.mxu0 0
    %2143 = vmatprep.subr.bf16.mxu0 0
    %2144 = vmatpush1.bf16.msra.mxu0 0
    %2145 = vmatprep.subr.bf16.mxu0 0
    %2146 = vmatpush1.bf16.msra.mxu0 0
    %2147 = vmatprep.subr.bf16.mxu0 0
    %2148 = vmatpush1.bf16.msra.mxu0 0
    %2149 = vmatprep.subr.bf16.mxu0 0
    %2150 = vmatpush1.bf16.msra.mxu0 0
    %2151 = vmatprep.subr.bf16.mxu0 0
    %2152 = vmatpush1.bf16.msra.mxu0 0
    %2153 = vmatprep.subr.bf16.mxu0 0
    %2154 = vmatpush1.bf16.msra.mxu0 0
    %2155 = vmatprep.subr.bf16.mxu0 0
    %2156 = vmatpush1.bf16.msra.mxu0 0
    %2157 = vmatprep.subr.bf16.mxu0 0
    %2158 = vmatpush1.bf16.msra.mxu0 0
    %2159 = vmatprep.subr.bf16.mxu0 0
    %2160 = vmatpush1.bf16.msra.mxu0 0
    %2161 = vmatprep.subr.bf16.mxu0 0
    %2162 = vmatpush1.bf16.msra.mxu0 0
    %2163 = vmatprep.mubr.bf16.mxu0 0
    %2164 = vmatmul.mubr.bf16.gmra.mrb[0].mxu0 %v2126
    %v2165 = vpop.f32.mrb[0].mxu0
    %v2166 = vadd.f32 0.0, %v2165
    %v2167 = vpop.f32.mrb[0].mxu0
    %v2168 = vpop.f32.mrb[0].mxu0
    %v2169 = vadd.f32 0.0, %v2168
    %v2170 = vpop.f32.mrb[0].mxu0
    %2171 = vmatprep.mubr.bf16.mxu0 0
    %2172 = vmatmul.mubr.bf16.gmra.mrb[0].mxu0 %v2129
    %v2173 = vpop.f32.mrb[0].mxu0
    %v2174 = vadd.f32 0.0, %v2173
    %v2175 = vpop.f32.mrb[0].mxu0
    %v2176 = vpop.f32.mrb[0].mxu0
    %v2177 = vadd.f32 0.0, %v2176
    %v2178 = vpop.f32.mrb[0].mxu0
    %2179 = vdwg.mxu0
    %v2180 = vpack.c.bf16 %v2174, %v2166
    %v2181 = vpack.c.bf16 %v2177, %v2169
    %v2214 = vunpack.c.l.b16 %v1468
    %v2215 = vunpack.c.l.b16 %v1469
    %v2216 = vunpack.c.l.b16 %v1470
    %v2217 = vunpack.c.l.b16 %v1471
    %v2218 = vunpack.c.l.b16 %v1472
    %v2219 = vunpack.c.l.b16 %v1473
    %v2220 = vunpack.c.l.b16 %v1474
    %v2221 = vunpack.c.l.b16 %v1475
    %v2222 = vunpack.c.l.b16 %v1476
    %v2223 = vunpack.c.l.b16 %v1477
    %v2224 = vunpack.c.l.b16 %v1478
    %v2225 = vunpack.c.l.b16 %v1479
    %v2226 = vunpack.c.l.b16 %v1480
    %v2227 = vunpack.c.l.b16 %v1481
    %v2228 = vunpack.c.l.b16 %v1482
    %v2229 = vunpack.c.l.b16 %v1483
    %v2230 = vunpack.c.l.b16 %v1484
    %v2231 = vunpack.c.l.b16 %v1485
    %v2232 = vunpack.c.l.b16 %v1486
    %v2233 = vunpack.c.l.b16 %v1487
    %v2234 = vunpack.c.l.b16 %v1488
    %v2235 = vunpack.c.l.b16 %v1489
    %v2236 = vunpack.c.l.b16 %v1490
    %v2237 = vunpack.c.l.b16 %v1491
    %v2238 = vunpack.c.l.b16 %v1492
    %v2239 = vunpack.c.l.b16 %v1493
    %v2240 = vunpack.c.l.b16 %v1494
    %v2241 = vunpack.c.l.b16 %v1495
    %v2242 = vunpack.c.l.b16 %v1496
    %v2243 = vunpack.c.l.b16 %v1497
    %v2244 = vunpack.c.l.b16 %v1498
    %v2245 = vunpack.c.l.b16 %v1499
    %v2246 = vpack.c.b16 %v2215, %v2214
    %v2247 = vpack.c.b16 %v2217, %v2216
    %v2248 = vpack.c.b16 %v2219, %v2218
    %v2249 = vpack.c.b16 %v2221, %v2220
    %v2250 = vpack.c.b16 %v2223, %v2222
    %v2251 = vpack.c.b16 %v2225, %v2224
    %v2252 = vpack.c.b16 %v2227, %v2226
    %v2253 = vpack.c.b16 %v2229, %v2228
    %v2254 = vpack.c.b16 %v2231, %v2230
    %v2255 = vpack.c.b16 %v2233, %v2232
    %v2256 = vpack.c.b16 %v2235, %v2234
    %v2257 = vpack.c.b16 %v2237, %v2236
    %v2258 = vpack.c.b16 %v2239, %v2238
    %v2259 = vpack.c.b16 %v2241, %v2240
    %v2260 = vpack.c.b16 %v2243, %v2242
    %v2261 = vpack.c.b16 %v2245, %v2244
    %2278 = vmatprep.subr.bf16.mxu0 0
    %2279 = vmatpush1.bf16.msra.mxu0 %v2246
    %2280 = vmatprep.subr.bf16.mxu0 0
    %2281 = vmatpush1.bf16.msra.mxu0 %v2247
    %2282 = vmatprep.subr.bf16.mxu0 0
    %2283 = vmatpush1.bf16.msra.mxu0 %v2248
    %2284 = vmatprep.subr.bf16.mxu0 0
    %2285 = vmatpush1.bf16.msra.mxu0 %v2249
    %2286 = vmatprep.subr.bf16.mxu0 0
    %2287 = vmatpush1.bf16.msra.mxu0 %v2250
    %2288 = vmatprep.subr.bf16.mxu0 0
    %2289 = vmatpush1.bf16.msra.mxu0 %v2251
    %2290 = vmatprep.subr.bf16.mxu0 0
    %2291 = vmatpush1.bf16.msra.mxu0 %v2252
    %2292 = vmatprep.subr.bf16.mxu0 0
    %2293 = vmatpush1.bf16.msra.mxu0 %v2253
    %2294 = vmatprep.subr.bf16.mxu0 0
    %2295 = vmatpush1.bf16.msra.mxu0 %v2254
    %2296 = vmatprep.subr.bf16.mxu0 0
    %2297 = vmatpush1.bf16.msra.mxu0 %v2255
    %2298 = vmatprep.subr.bf16.mxu0 0
    %2299 = vmatpush1.bf16.msra.mxu0 %v2256
    %2300 = vmatprep.subr.bf16.mxu0 0
    %2301 = vmatpush1.bf16.msra.mxu0 %v2257
    %2302 = vmatprep.subr.bf16.mxu0 0
    %2303 = vmatpush1.bf16.msra.mxu0 %v2258
    %2304 = vmatprep.subr.bf16.mxu0 0
    %2305 = vmatpush1.bf16.msra.mxu0 %v2259
    %2306 = vmatprep.subr.bf16.mxu0 0
    %2307 = vmatpush1.bf16.msra.mxu0 %v2260
    %2308 = vmatprep.subr.bf16.mxu0 0
    %2309 = vmatpush1.bf16.msra.mxu0 %v2261
    %2310 = vmatprep.mubr.bf16.mxu0 %v2181
    %2311 = vmatmul.mubr.bf16.gmra.mrb[0].mxu0 %v2180
    %v2312 = vpop.f32.mrb[0].mxu0
    %v2313 = vadd.f32 %v1416, %v2312
    %v2314 = vpop.f32.mrb[0].mxu0
    %v2315 = vpop.f32.mrb[0].mxu0
    %v2316 = vadd.f32 %v1417, %v2315
    %v2317 = vpop.f32.mrb[0].mxu0
    %2318 = vdwg.mxu0
    %2319 = vadd.xlane.f32.xlu0 %v2313
    %v2320 = vpop.xlane.xlu0 %2319
    %2321 = vadd.xlane.f32.xlu0 %v2316
    %v2322 = vpop.xlane.xlu0 %2321
    %v2323 = vmul.f32 %v2320, %v1005
    %v2324 = vmul.f32 %v2322, %v1005
    %v2325 = vsub.f32 %v2313, %v2323
    %v2326 = vsub.f32 %v2316, %v2324
    %v2327 = vmul.f32 %v2325, %v2325
    %v2328 = vmul.f32 %v2326, %v2326
    %2329 = vadd.xlane.f32.xlu0 %v2327
    %v2330 = vpop.xlane.xlu0 %2329
    %2331 = vadd.xlane.f32.xlu0 %v2328
    %v2332 = vpop.xlane.xlu0 %2331
    %v2333 = vmul.f32 %v2330, %v1005
    %v2334 = vmul.f32 %v2332, %v1005
    %v2335 = vadd.f32 %v2333, 1e-05
    %v2336 = vadd.f32 %v2334, 1e-05
    %v2337 = vrsqrt.pop %v2335
    %v2338 = vrsqrt.pop %v2336
    %v2339 = vmul.f32 %v2325, %v2337
    %v2340 = vmul.f32 %v2326, %v2338
    %v2341 = vmul.f32 %v2339, %v1028
    %v2342 = vmul.f32 %v2340, %v1028
    %v2343 = vadd.f32 %v2341, %v1036
    %v2344 = vadd.f32 %v2342, %v1036
    %2345 = vadd.xlane.f32.xlu0 %v2343
    %v2346 = vpop.xlane.xlu0 %2345
    %2347 = vadd.xlane.f32.xlu0 %v2344
    %v2348 = vpop.xlane.xlu0 %2347
    %v2349 = vmul.f32 %v2346, %v1005
    %v2350 = vmul.f32 %v2348, %v1005
    %v2351 = vsub.f32 %v2343, %v2349
    %v2352 = vsub.f32 %v2344, %v2350
    %v2353 = vmul.f32 %v2351, %v2351
    %v2354 = vmul.f32 %v2352, %v2352
    %2355 = vadd.xlane.f32.xlu0 %v2353
    %v2356 = vpop.xlane.xlu0 %2355
    %2357 = vadd.xlane.f32.xlu0 %v2354
    %v2358 = vpop.xlane.xlu0 %2357
    %v2359 = vmul.f32 %v2356, %v1005
    %v2360 = vmul.f32 %v2358, %v1005
    %v2361 = vadd.f32 %v2359, 1e-05
    %v2362 = vadd.f32 %v2360, 1e-05
    %v2363 = vrsqrt.pop %v2361
    %v2364 = vrsqrt.pop %v2362
    %v2365 = vmul.f32 %v2351, %v2363
    %v2366 = vmul.f32 %v2352, %v2364
    %v2368 = vlaneseq
    %v2369 = vshrl.u32 %v2368, 7
    %v2370 = vsub.s32 0, %v2369
    %v2371 = vrot.slane %v1555, %v2370
    %v2373 = vmul.f32 %v2365, %v2371
    %v2374 = vmul.f32 %v2366, %v2371
    %v2376 = vlaneseq
    %v2377 = vshrl.u32 %v2376, 7
    %v2378 = vsub.s32 0, %v2377
    %v2379 = vrot.slane %v1557, %v2378
    %v2381 = vadd.f32 %v2373, %v2379
    %v2382 = vadd.f32 %v2374, %v2379
    %v2383 = vpack.c.bf16 %v2382, %v2381
    %v2385 = vlaneseq
    %v2386 = vshrl.u32 %v2385, 7
    %v2387 = vsub.s32 0, %v2386
    %v2388 = vrot.slane %v1518, %v2387
    %v2389 = vlaneseq
    %v2390 = vshrl.u32 %v2389, 7
    %v2391 = vsub.s32 1, %v2390
    %v2392 = vrot.slane %v1518, %v2391
    %v2411 = vunpack.c.l.b16 %v1501
    %v2412 = vunpack.c.h.b16 %v1501
    %v2413 = vunpack.c.l.b16 %v1502
    %v2414 = vunpack.c.h.b16 %v1502
    %v2415 = vunpack.c.l.b16 %v1503
    %v2416 = vunpack.c.h.b16 %v1503
    %v2417 = vunpack.c.l.b16 %v1504
    %v2418 = vunpack.c.h.b16 %v1504
    %v2419 = vunpack.c.l.b16 %v1505
    %v2420 = vunpack.c.h.b16 %v1505
    %v2421 = vunpack.c.l.b16 %v1506
    %v2422 = vunpack.c.h.b16 %v1506
    %v2423 = vunpack.c.l.b16 %v1507
    %v2424 = vunpack.c.h.b16 %v1507
    %v2425 = vunpack.c.l.b16 %v1508
    %v2426 = vunpack.c.h.b16 %v1508
    %v2427 = vunpack.c.l.b16 %v1509
    %v2428 = vunpack.c.h.b16 %v1509
    %v2429 = vunpack.c.l.b16 %v1510
    %v2430 = vunpack.c.h.b16 %v1510
    %v2431 = vunpack.c.l.b16 %v1511
    %v2432 = vunpack.c.h.b16 %v1511
    %v2433 = vunpack.c.l.b16 %v1512
    %v2434 = vunpack.c.h.b16 %v1512
    %v2435 = vunpack.c.l.b16 %v1513
    %v2436 = vunpack.c.h.b16 %v1513
    %v2437 = vunpack.c.l.b16 %v1514
    %v2438 = vunpack.c.h.b16 %v1514
    %v2439 = vunpack.c.l.b16 %v1515
    %v2440 = vunpack.c.h.b16 %v1515
    %v2441 = vunpack.c.l.b16 %v1516
    %v2442 = vunpack.c.h.b16 %v1516
    %v2443 = vpack.c.b16 %v2413, %v2411
    %v2444 = vpack.c.b16 %v2414, %v2412
    %v2445 = vpack.c.b16 %v2417, %v2415
    %v2446 = vpack.c.b16 %v2418, %v2416
    %v2447 = vpack.c.b16 %v2421, %v2419
    %v2448 = vpack.c.b16 %v2422, %v2420
    %v2449 = vpack.c.b16 %v2425, %v2423
    %v2450 = vpack.c.b16 %v2426, %v2424
    %v2451 = vpack.c.b16 %v2429, %v2427
    %v2452 = vpack.c.b16 %v2430, %v2428
    %v2453 = vpack.c.b16 %v2433, %v2431
    %v2454 = vpack.c.b16 %v2434, %v2432
    %v2455 = vpack.c.b16 %v2437, %v2435
    %v2456 = vpack.c.b16 %v2438, %v2436
    %v2457 = vpack.c.b16 %v2441, %v2439
    %v2458 = vpack.c.b16 %v2442, %v2440
    %2475 = vmatprep.subr.bf16.mxu0 %v2444
    %2476 = vmatpush1.bf16.msra.mxu0 %v2443
    %2477 = vmatprep.subr.bf16.mxu0 %v2446
    %2478 = vmatpush1.bf16.msra.mxu0 %v2445
    %2479 = vmatprep.subr.bf16.mxu0 %v2448
    %2480 = vmatpush1.bf16.msra.mxu0 %v2447
    %2481 = vmatprep.subr.bf16.mxu0 %v2450
    %2482 = vmatpush1.bf16.msra.mxu0 %v2449
    %2483 = vmatprep.subr.bf16.mxu0 %v2452
    %2484 = vmatpush1.bf16.msra.mxu0 %v2451
    %2485 = vmatprep.subr.bf16.mxu0 %v2454
    %2486 = vmatpush1.bf16.msra.mxu0 %v2453
    %2487 = vmatprep.subr.bf16.mxu0 %v2456
    %2488 = vmatpush1.bf16.msra.mxu0 %v2455
    %2489 = vmatprep.subr.bf16.mxu0 %v2458
    %2490 = vmatpush1.bf16.msra.mxu0 %v2457
    %2491 = vmatprep.subr.bf16.mxu0 0
    %2492 = vmatpush1.bf16.msra.mxu0 0
    %2493 = vmatprep.subr.bf16.mxu0 0
    %2494 = vmatpush1.bf16.msra.mxu0 0
    %2495 = vmatprep.subr.bf16.mxu0 0
    %2496 = vmatpush1.bf16.msra.mxu0 0
    %2497 = vmatprep.subr.bf16.mxu0 0
    %2498 = vmatpush1.bf16.msra.mxu0 0
    %2499 = vmatprep.subr.bf16.mxu0 0
    %2500 = vmatpush1.bf16.msra.mxu0 0
    %2501 = vmatprep.subr.bf16.mxu0 0
    %2502 = vmatpush1.bf16.msra.mxu0 0
    %2503 = vmatprep.subr.bf16.mxu0 0
    %2504 = vmatpush1.bf16.msra.mxu0 0
    %2505 = vmatprep.subr.bf16.mxu0 0
    %2506 = vmatpush1.bf16.msra.mxu0 0
    %2507 = vmatprep.mubr.bf16.mxu0 0
    %2508 = vmatmul.mubr.bf16.gmra.mrb[0].mxu0 %v2383
    %v2509 = vpop.f32.mrb[0].mxu0
    %v2510 = vadd.f32 %v2388, %v2509
    %v2511 = vpop.f32.mrb[0].mxu0
    %v2512 = vadd.f32 %v2392, %v2511
    %v2513 = vpop.f32.mrb[0].mxu0
    %v2514 = vadd.f32 %v2388, %v2513
    %v2515 = vpop.f32.mrb[0].mxu0
    %v2516 = vadd.f32 %v2392, %v2515
    %2517 = vdwg.mxu0
    %v2518 = vmul.f32 %v2510, 0.5
    %v2519 = vmul.f32 %v2512, 0.5
    %v2520 = vmul.f32 %v2514, 0.5
    %v2521 = vmul.f32 %v2516, 0.5
    %v2522 = vmul.f32 %v2510, 0.70710677
    %v2523 = vmul.f32 %v2512, 0.70710677
    %v2524 = vmul.f32 %v2514, 0.70710677
    %v2525 = vmul.f32 %v2516, 0.70710677
    %v2526 = verf.f32.pop %v2522
    %v2527 = verf.f32.pop %v2523
    %v2528 = verf.f32.pop %v2524
    %v2529 = verf.f32.pop %v2525
    %v2530 = vadd.f32 %v2526, 1.0
    %v2531 = vadd.f32 %v2527, 1.0
    %v2532 = vadd.f32 %v2528, 1.0
    %v2533 = vadd.f32 %v2529, 1.0
    %v2534 = vmul.f32 %v2518, %v2530
    %v2535 = vmul.f32 %v2519, %v2531
    %v2536 = vmul.f32 %v2520, %v2532
    %v2537 = vmul.f32 %v2521, %v2533
    %v2538 = vpack.c.bf16 %v2536, %v2534
    %v2539 = vpack.c.bf16 %v2537, %v2535
    %v2541 = vlaneseq
    %v2542 = vshrl.u32 %v2541, 7
    %v2543 = vsub.s32 0, %v2542
    %v2544 = vrot.slane %v1553, %v2543
    %v2578 = vunpack.c.l.b16 %v1520
    %v2579 = vunpack.c.l.b16 %v1521
    %v2580 = vunpack.c.l.b16 %v1522
    %v2581 = vunpack.c.l.b16 %v1523
    %v2582 = vunpack.c.l.b16 %v1524
    %v2583 = vunpack.c.l.b16 %v1525
    %v2584 = vunpack.c.l.b16 %v1526
    %v2585 = vunpack.c.l.b16 %v1527
    %v2586 = vunpack.c.l.b16 %v1528
    %v2587 = vunpack.c.l.b16 %v1529
    %v2588 = vunpack.c.l.b16 %v1530
    %v2589 = vunpack.c.l.b16 %v1531
    %v2590 = vunpack.c.l.b16 %v1532
    %v2591 = vunpack.c.l.b16 %v1533
    %v2592 = vunpack.c.l.b16 %v1534
    %v2593 = vunpack.c.l.b16 %v1535
    %v2594 = vunpack.c.l.b16 %v1536
    %v2595 = vunpack.c.l.b16 %v1537
    %v2596 = vunpack.c.l.b16 %v1538
    %v2597 = vunpack.c.l.b16 %v1539
    %v2598 = vunpack.c.l.b16 %v1540
    %v2599 = vunpack.c.l.b16 %v1541
    %v2600 = vunpack.c.l.b16 %v1542
    %v2601 = vunpack.c.l.b16 %v1543
    %v2602 = vunpack.c.l.b16 %v1544
    %v2603 = vunpack.c.l.b16 %v1545
    %v2604 = vunpack.c.l.b16 %v1546
    %v2605 = vunpack.c.l.b16 %v1547
    %v2606 = vunpack.c.l.b16 %v1548
    %v2607 = vunpack.c.l.b16 %v1549
    %v2608 = vunpack.c.l.b16 %v1550
    %v2609 = vunpack.c.l.b16 %v1551
    %v2610 = vpack.c.b16 %v2579, %v2578
    %v2611 = vpack.c.b16 %v2581, %v2580
    %v2612 = vpack.c.b16 %v2583, %v2582
    %v2613 = vpack.c.b16 %v2585, %v2584
    %v2614 = vpack.c.b16 %v2587, %v2586
    %v2615 = vpack.c.b16 %v2589, %v2588
    %v2616 = vpack.c.b16 %v2591, %v2590
    %v2617 = vpack.c.b16 %v2593, %v2592
    %v2618 = vpack.c.b16 %v2595, %v2594
    %v2619 = vpack.c.b16 %v2597, %v2596
    %v2620 = vpack.c.b16 %v2599, %v2598
    %v2621 = vpack.c.b16 %v2601, %v2600
    %v2622 = vpack.c.b16 %v2603, %v2602
    %v2623 = vpack.c.b16 %v2605, %v2604
    %v2624 = vpack.c.b16 %v2607, %v2606
    %v2625 = vpack.c.b16 %v2609, %v2608
    %2642 = vmatprep.subr.bf16.mxu0 0
    %2643 = vmatpush1.bf16.msra.mxu0 %v2610
    %2644 = vmatprep.subr.bf16.mxu0 0
    %2645 = vmatpush1.bf16.msra.mxu0 %v2611
    %2646 = vmatprep.subr.bf16.mxu0 0
    %2647 = vmatpush1.bf16.msra.mxu0 %v2612
    %2648 = vmatprep.subr.bf16.mxu0 0
    %2649 = vmatpush1.bf16.msra.mxu0 %v2613
    %2650 = vmatprep.subr.bf16.mxu0 0
    %2651 = vmatpush1.bf16.msra.mxu0 %v2614
    %2652 = vmatprep.subr.bf16.mxu0 0
    %2653 = vmatpush1.bf16.msra.mxu0 %v2615
    %2654 = vmatprep.subr.bf16.mxu0 0
    %2655 = vmatpush1.bf16.msra.mxu0 %v2616
    %2656 = vmatprep.subr.bf16.mxu0 0
    %2657 = vmatpush1.bf16.msra.mxu0 %v2617
    %2658 = vmatprep.subr.bf16.mxu0 0
    %2659 = vmatpush1.bf16.msra.mxu0 %v2618
    %2660 = vmatprep.subr.bf16.mxu0 0
    %2661 = vmatpush1.bf16.msra.mxu0 %v2619
    %2662 = vmatprep.subr.bf16.mxu0 0
    %2663 = vmatpush1.bf16.msra.mxu0 %v2620
    %2664 = vmatprep.subr.bf16.mxu0 0
    %2665 = vmatpush1.bf16.msra.mxu0 %v2621
    %2666 = vmatprep.subr.bf16.mxu0 0
    %2667 = vmatpush1.bf16.msra.mxu0 %v2622
    %2668 = vmatprep.subr.bf16.mxu0 0
    %2669 = vmatpush1.bf16.msra.mxu0 %v2623
    %2670 = vmatprep.subr.bf16.mxu0 0
    %2671 = vmatpush1.bf16.msra.mxu0 %v2624
    %2672 = vmatprep.subr.bf16.mxu0 0
    %2673 = vmatpush1.bf16.msra.mxu0 %v2625
    %2674 = vmatprep.mubr.bf16.mxu0 %v2539
    %2675 = vmatmul.mubr.bf16.gmra.mrb[0].mxu0 %v2538
    %v2676 = vpop.f32.mrb[0].mxu0
    %v2677 = vadd.f32 %v2544, %v2676
    %v2678 = vpop.f32.mrb[0].mxu0
    %v2679 = vpop.f32.mrb[0].mxu0
    %v2680 = vadd.f32 %v2544, %v2679
    %v2681 = vpop.f32.mrb[0].mxu0
    %2682 = vdwg.mxu0
    %v2683 = vadd.f32 %v2677, %v2343
    %v2684 = vadd.f32 %v2680, %v2344
    %2685 = vadd.xlane.f32.xlu0 %v2683
    %v2686 = vpop.xlane.xlu0 %2685
    %2687 = vadd.xlane.f32.xlu0 %v2684
    %v2688 = vpop.xlane.xlu0 %2687
    %v2689 = vmul.f32 %v2686, %v1005
    %v2690 = vmul.f32 %v2688, %v1005
    %v2691 = vsub.f32 %v2683, %v2689
    %v2692 = vsub.f32 %v2684, %v2690
    %v2693 = vmul.f32 %v2691, %v2691
    %v2694 = vmul.f32 %v2692, %v2692
    %2695 = vadd.xlane.f32.xlu0 %v2693
    %v2696 = vpop.xlane.xlu0 %2695
    %2697 = vadd.xlane.f32.xlu0 %v2694
    %v2698 = vpop.xlane.xlu0 %2697
    %v2699 = vmul.f32 %v2696, %v1005
    %v2700 = vmul.f32 %v2698, %v1005
    %v2701 = vadd.f32 %v2699, 1e-05
    %v2702 = vadd.f32 %v2700, 1e-05
    %v2703 = vrsqrt.pop %v2701
    %v2704 = vrsqrt.pop %v2702
    %v2705 = vmul.f32 %v2691, %v2703
    %v2706 = vmul.f32 %v2692, %v2704
    %v2707 = vmul.f32 %v2705, %v1406
    %v2708 = vmul.f32 %v2706, %v1406
    %v2709 = vadd.f32 %v2707, %v1414
    %v2710 = vadd.f32 %v2708, %v1414
    %2711 = vst [vmem:[#allocation2] sm:$0xff] %v2709
    %2712 = vst [vmem:[#allocation2 + $0x8] sm:$0xff] %v2710
    // Predicated region
    $region74: #{transformer_forward.1} parent=1 // pred_check
      _
    $region75: #{transformer_forward.1} parent=1 // pred_check_branch
      %2714 = sbr.rel (0) target = $region77
    $region76: #{transformer_forward.1} parent=1 // pred_region
      %s2716 = ssub.s32 256, 256
      %2717 = vsyncadd [#allocation3], %s2716
      %s2718 = sshll.u32 [#allocation2], 4
      %s2719 = int_to_ptr.vmem [resolvable:$true] %s2718
      %2724 = dma.vmem_to_hbm [thread:$0]  %s2719, 256, %s18, [#allocation3], 128, 128, 8
    $region77: #{transformer_forward.1} parent=1 // pred_fallthru
      _
    // Predicated region
    $region78: #{transformer_forward.1} parent=1 // pred_check
      _
    $region79: #{transformer_forward.1} parent=1 // pred_check_branch
      %2726 = sbr.rel (0) target = $region81
    $region80: #{transformer_forward.1} parent=1 // pred_region
      %2727 = dma.done [#allocation3], 256
    $region81: #{transformer_forward.1} parent=1 // pred_fallthru
      _
    %2728 = vsyncpa [#allocation3], 1

</llo_original>
